<compile_context>
chip_gen: v5e
topology: v5e:2x2
jax: 0.10.0
libtpu: 0.0.40
codegen_flags: <defaults>
</compile_context>

<pallas_src>
import math

import jax
import jax.numpy as jnp
from jax import lax
from jax.experimental import pallas as pl
from jax.experimental.pallas import tpu as pltpu


CRITIC_HIDDEN = 512

# Operand dtype fed to the MXU for the dominant (rows, 512) @ (512, 512)
# critic matmul (f32 accumulation).  Set to jnp.float32 for bit-faithful f32.
CRITIC_MXU_DTYPE = jnp.bfloat16


def _backend_config():
    """Generation-gated tiling / pair dtype / VMEM limit (perf only)."""
    kind = ""
    try:
        kind = jax.devices()[0].device_kind.lower()
    except Exception:
        pass
    if "v5 lite" in kind or "v5e" in kind or "v5litepod" in kind:
        # 16 MiB default scoped VMEM, no bf16 VPU: smaller tile, f32 pair path.
        return dict(pair_rows=1024, pair_dtype=jnp.float32, vmem_limit=64 << 20)
    if "v6" in kind:
        # 128 MiB VMEM, bf16 VPU: bigger tile, bf16 pair path.
        return dict(pair_rows=4096, pair_dtype=jnp.bfloat16, vmem_limit=96 << 20)
    # v7x (64 MiB VMEM / TC, 2 TCs) or unknown: conservative defaults.
    return dict(pair_rows=2048, pair_dtype=jnp.bfloat16, vmem_limit=48 << 20)


_CFG = _backend_config()


def _round_up(x, m):
    return (x + m - 1) // m * m


def _choose_row_tile(n_pad, target_pair_rows):
    """Largest multiple of 8 that divides n_pad while keeping
    row_tile * n_pad near the per-generation pair-row budget (>= 8 so the
    row tile stays sublane-aligned)."""
    # TODO(synk): for very large n the (n_pad, 512) column side stays fully
    # resident per grid step; an online-logsumexp column tiling would be
    # needed to respect the VMEM budget there.
    target = max(8, target_pair_rows // max(n_pad, 1))
    target = max(8, min((target // 8) * 8, n_pad))
    best = 8
    t = 8
    while t <= target:
        if n_pad % t == 0:
            best = t
        t += 8
    return best


# ---------------------------------------------------------------------------
# Kernel 1: fused L2-normalize + K folded heads (Linear-ReLU-Linear_folded)
# ---------------------------------------------------------------------------

def apply_fused_heads(fold_stack, x_padded):
    """normalize(x) once, then K unrolled (Linear-ReLU-folded-Linear) heads.

    fold_stack = (W1 (K,d,d), b1 (K,1,d), Wf (K,d,H), bf (K,1,H)) with all
    weights stored (in, out).  Returns (K, n_pad, H) f32 critic-layer-1
    activations (lane-dense 512-wide outputs).
    """
    w1, b1, wf, bf = fold_stack
    k_heads, d, _ = w1.shape
    hidden = wf.shape[-1]
    n_pad = x_padded.shape[0]

    def kernel(x_ref, w1_ref, b1_ref, wf_ref, bf_ref, o_ref):
        x = x_ref[...]
        # F.normalize(x, dim=-1): x / max(||x||_2, 1e-12) -- computed once.
        nrm = jnp.sqrt(jnp.sum(x * x, axis=-1, keepdims=True))
        xn = x / jnp.maximum(nrm, 1e-12)
        for k in range(k_heads):            # K <= 5, static: unrolled
            h = jnp.dot(xn, w1_ref[k], preferred_element_type=jnp.float32)
            h = jnp.maximum(h + b1_ref[k], 0.0)
            o_ref[k] = (jnp.dot(h, wf_ref[k],
                                preferred_element_type=jnp.float32)
                        + bf_ref[k])

    return pl.pallas_call(
        kernel,
        out_shape=jax.ShapeDtypeStruct((k_heads, n_pad, hidden), jnp.float32),
    )(x_padded, w1, b1, wf, bf)


# ---------------------------------------------------------------------------
# Kernel 2: ONE fused pairwise-critic kernel for all 6 critics
# ---------------------------------------------------------------------------

def _make_critic_kernel(*, n, n_pad, row_tile, hidden):
    """scores[i, j] = f_c(cat(a[j], b[i])) for critic c = program_id(0) and a
    row tile of i, reduced in-place to (diag_sum, sum of row logsumexp,
    total_sum) with masking of the padded rows/columns."""

    def kernel(a_ref, b_ref, w2_ref, b2_ref, w3_ref, out_ref):
        a = a_ref[...]                                       # (n_pad, H)
        b = b_ref[...]                                       # (row_tile, H)
        # pair[t, j, :] = b_act[i0 + t] + a_act[j]   (b1 already folded in b)
        pair = (jnp.broadcast_to(a[None, :, :], (row_tile, n_pad, hidden))
                + jnp.broadcast_to(b[:, None, :], (row_tile, n_pad, hidden))
                ).reshape(row_tile * n_pad, hidden)
        h1 = jnp.maximum(pair, 0).astype(w2_ref.dtype)
        # Dominant matmul: bf16 operands, f32 accumulation.
        h2 = jnp.dot(h1, w2_ref[...],
                     preferred_element_type=jnp.float32) + b2_ref[...]
        h2 = jnp.maximum(h2, 0.0)
        # Final 512 -> 1 layer as VPU multiply + lane reduce (the MXU stays
        # busy with the 512x512 layer).  b3 is folded in the JAX epilogue.
        s = jnp.sum((h2 * w3_ref[...]).reshape(row_tile, n_pad, hidden),
                    axis=-1)                                 # (row_tile, n_pad)

        i0 = pl.program_id(1) * row_tile
        rows = lax.broadcasted_iota(jnp.int32, (row_tile, n_pad), 0) + i0
        cols = lax.broadcasted_iota(jnp.int32, (row_tile, n_pad), 1)
        col_ok = cols < n
        valid = (rows < n) & col_ok

        diag_sum = jnp.sum(jnp.where(valid & (rows == cols), s, 0.0))
        s_m = jnp.where(col_ok, s, -1e30)                    # mask padded cols
        row_max = jnp.max(s_m, axis=1, keepdims=True)
        lse = row_max + jnp.log(jnp.sum(jnp.exp(s_m - row_max), axis=1,
                                        keepdims=True))
        lse_sum = jnp.sum(jnp.where(rows[:, :1] < n, lse, 0.0))
        total_sum = jnp.sum(jnp.where(valid, s, 0.0))

        # Sublane-aligned, lane-dense (8, 128) partial:
        #   [0,0]=diag_sum, [0,1]=lse_sum, [0,2]=total_sum, rest zero.
        sub = lax.broadcasted_iota(jnp.int32, (8, 128), 0)
        lane = lax.broadcasted_iota(jnp.int32, (8, 128), 1)
        out_ref[...] = (jnp.where((sub == 0) & (lane == 0), diag_sum, 0.0)
                        + jnp.where((sub == 0) & (lane == 1), lse_sum, 0.0)
                        + jnp.where((sub == 0) & (lane == 2), total_sum, 0.0))

    return kernel


def fused_critic_sums(a_act, b_act, w2, b2, w3, *, n):
    """All six critics in one pallas_call.

    a_act / b_act: (6, n_pad, 512) pre-folded first-layer activations (b1
    already folded into b_act).  Returns per-critic (diag_sum, lse_row_sum,
    total_sum) over the real (n, n) score matrices; the score matrices never
    touch HBM.
    """
    num_critics, n_pad, hidden = a_act.shape
    row_tile = _choose_row_tile(n_pad, _CFG["pair_rows"])
    num_tiles = n_pad // row_tile

    kernel = _make_critic_kernel(n=n, n_pad=n_pad, row_tile=row_tile,
                                 hidden=hidden)

    flops = 2 * num_critics * n_pad * n_pad * hidden * (hidden + 2)
    bytes_accessed = int(
        a_act.size * a_act.dtype.itemsize + b_act.size * b_act.dtype.itemsize
        + w2.size * w2.dtype.itemsize + (b2.size + w3.size) * 4
        + num_critics * num_tiles * 8 * 128 * 4)
    cost = pl.CostEstimate(flops=int(flops),
                           transcendentals=int(num_critics * n_pad * n_pad),
                           bytes_accessed=bytes_accessed)

    partials = pl.pallas_call(
        kernel,
        out_shape=jax.ShapeDtypeStruct((num_critics, num_tiles, 8, 128),
                                       jnp.float32),
        grid=(num_critics, num_tiles),
        in_specs=[
            pl.BlockSpec((None, n_pad, hidden), lambda c, i: (c, 0, 0)),     # A
            pl.BlockSpec((None, row_tile, hidden), lambda c, i: (c, i, 0)),  # B
            pl.BlockSpec((None, hidden, hidden), lambda c, i: (c, 0, 0)),    # W2
            pl.BlockSpec((None, 1, hidden), lambda c, i: (c, 0, 0)),         # b2
            pl.BlockSpec((None, 1, hidden), lambda c, i: (c, 0, 0)),         # w3
        ],
        out_specs=pl.BlockSpec((None, None, 8, 128), lambda c, i: (c, i, 0, 0)),
        compiler_params=pltpu.CompilerParams(
            dimension_semantics=("parallel", "parallel"),
            vmem_limit_bytes=_CFG["vmem_limit"]),
        cost_estimate=cost,
    )(a_act, b_act, w2, b2, w3)

    sums = jnp.sum(partials, axis=(1, 2))          # (6, 128)
    return sums[:, 0], sums[:, 1], sums[:, 2]


# ---------------------------------------------------------------------------
# Parameter init (PyTorch-Linear-style uniform; weights stored (in, out))
# ---------------------------------------------------------------------------

def _init_linear(key, in_dim, out_dim):
    k_w, k_b = jax.random.split(key)
    bound = 1.0 / math.sqrt(in_dim)
    w = jax.random.uniform(k_w, (in_dim, out_dim), jnp.float32, -bound, bound)
    b = jax.random.uniform(k_b, (1, out_dim), jnp.float32, -bound, bound)
    return w, b


def init_mlp_head(key, dim):
    k1, k2 = jax.random.split(key)
    w1, b1 = _init_linear(k1, dim, dim)
    w2, b2 = _init_linear(k2, dim, dim)
    return (w1, b1, w2, b2)


def init_critic(key, in_dim, hidden=CRITIC_HIDDEN):
    # FactorCL mlp(in_dim, hidden, 1, layers=1, 'relu'):
    #   Linear(in, H) - ReLU - Linear(H, H) - ReLU - Linear(H, 1)
    k1, k2, k3, k4 = jax.random.split(key, 4)
    w1, b1 = _init_linear(k1, in_dim, hidden)
    w2, b2 = _init_linear(k2, hidden, hidden)
    bound = 1.0 / math.sqrt(hidden)
    w3 = jax.random.uniform(k3, (1, hidden), jnp.float32, -bound, bound)
    b3 = jax.random.uniform(k4, (1, 1), jnp.float32, -bound, bound)
    return (w1, b1, w2, b2, w3, b3)


def init_factorcl_params(key, feat_dims, hidden=CRITIC_HIDDEN):
    d1, d2 = feat_dims
    ks = jax.random.split(key, 16)
    return {
        "lin_infonce_x1x2": [init_mlp_head(ks[0], d1), init_mlp_head(ks[1], d2)],
        "lin_club_x1x2": [init_mlp_head(ks[2], d1), init_mlp_head(ks[3], d2)],
        "lin_infonce_x1y": init_mlp_head(ks[4], d1),
        "lin_infonce_x2y": init_mlp_head(ks[5], d2),
        "lin_infonce_x1x2_cond": [init_mlp_head(ks[6], d1), init_mlp_head(ks[7], d2)],
        "lin_club_x1x2_cond": [init_mlp_head(ks[8], d1), init_mlp_head(ks[9], d2)],
        "critic_infonce_x1x2": init_critic(ks[10], d1 + d2, hidden),
        "critic_club_x1x2": init_critic(ks[11], d1 + d2, hidden),
        "critic_infonce_x1y": init_critic(ks[12], d1 + d1, hidden),
        "critic_infonce_x2y": init_critic(ks[13], d2 + d2, hidden),
        "critic_infonce_x1x2_cond": init_critic(ks[14], 2 * d1 + 2 * d2, hidden),
        "critic_club_x1x2_cond": init_critic(ks[15], 2 * d1 + 2 * d2, hidden),
    }


# Fixed critic order used everywhere below (indices 0..5).
_CRITIC_KEYS = ("critic_infonce_x1x2", "critic_club_x1x2",
                "critic_infonce_x1y", "critic_infonce_x2y",
                "critic_infonce_x1x2_cond", "critic_club_x1x2_cond")


def prepare_fused_params(params, feat_dims):
    """Fold each critic's (linear) first layer into the matching mlp_head's
    second linear (exact: no nonlinearity between them) and stack the six
    critics' remaining weights for the fused critic kernel."""
    d1, d2 = feat_dims

    def fold(head, critic, row0, rows):
        hw1, hb1, hw2, hb2 = head
        w1_slice = critic[0][row0:row0 + rows, :]        # (rows, H), (in, out)
        return (hw1, hb1, hw2 @ w1_slice, hb2 @ w1_slice)

    c12i = params["critic_infonce_x1x2"]
    c12c = params["critic_club_x1x2"]
    c1y = params["critic_infonce_x1y"]
    c2y = params["critic_infonce_x2y"]
    cci = params["critic_infonce_x1x2_cond"]
    ccc = params["critic_club_x1x2_cond"]

    x1_folds = [
        fold(params["lin_infonce_x1x2"][0], c12i, 0, d1),
        fold(params["lin_club_x1x2"][0], c12c, 0, d1),
        fold(params["lin_infonce_x1y"], c1y, 0, d1),
        fold(params["lin_infonce_x1x2_cond"][0], cci, 0, d1),
        fold(params["lin_club_x1x2_cond"][0], ccc, 0, d1),
    ]
    x2_folds = [
        fold(params["lin_infonce_x1x2"][1], c12i, d1, d2),
        fold(params["lin_club_x1x2"][1], c12c, d1, d2),
        fold(params["lin_infonce_x2y"], c2y, 0, d2),
        fold(params["lin_infonce_x1x2_cond"][1], cci, 2 * d1, d2),
        fold(params["lin_club_x1x2_cond"][1], ccc, 2 * d1, d2),
    ]
    x1a_folds = [
        fold(params["lin_infonce_x1y"], c1y, d1, d1),
        fold(params["lin_infonce_x1x2_cond"][0], cci, d1, d1),
        fold(params["lin_club_x1x2_cond"][0], ccc, d1, d1),
    ]
    x2a_folds = [
        fold(params["lin_infonce_x2y"], c2y, d2, d2),
        fold(params["lin_infonce_x1x2_cond"][1], cci, 2 * d1 + d2, d2),
        fold(params["lin_club_x1x2_cond"][1], ccc, 2 * d1 + d2, d2),
    ]

    def stack(folds):
        return tuple(jnp.stack([f[i] for f in folds]) for i in range(4))

    critics = [params[k] for k in _CRITIC_KEYS]
    return {
        "x1": stack(x1_folds), "x2": stack(x2_folds),
        "x1_aug": stack(x1a_folds), "x2_aug": stack(x2a_folds),
        "b1": jnp.stack([ci[1] for ci in critics]),                      # (6,1,H)
        "w2": jnp.stack([ci[2] for ci in critics]).astype(CRITIC_MXU_DTYPE),
        "b2": jnp.stack([ci[3] for ci in critics]),                      # (6,1,H)
        "w3": jnp.stack([ci[4] for ci in critics]),                      # (6,1,H)
        "b3": jnp.stack([ci[5][0, 0] for ci in critics]),                # (6,)
    }


# ---------------------------------------------------------------------------
# FactorCLSSL.forward
# ---------------------------------------------------------------------------

def factorcl_forward(fused, x1, x2, x1_aug, x2_aug):
    n = x1.shape[0]
    n_pad = _round_up(max(n, 8), 8)

    def pad(x):
        return x if x.shape[0] == n_pad else jnp.pad(x, ((0, n_pad - n), (0, 0)))

    # One fused normalize + folded-head kernel per raw input (4 calls total).
    f1 = apply_fused_heads(fused["x1"], pad(x1))            # (5, n_pad, 512)
    f2 = apply_fused_heads(fused["x2"], pad(x2))            # (5, n_pad, 512)
    f1a = apply_fused_heads(fused["x1_aug"], pad(x1_aug))   # (3, n_pad, 512)
    f2a = apply_fused_heads(fused["x2_aug"], pad(x2_aug))   # (3, n_pad, 512)

    # Per-critic first-layer activations, scores[c, i, j] = f_c(cat(a_j, b_i))
    # with a = x1-side (columns) and b = x2-side (rows).  The conditional
    # critics' concatenated halves become sums of the pre-split folds; the
    # critic's b1 is folded into the b side here (tiny glue adds).
    a_act = jnp.stack([f1[0], f1[1], f1[2], f2[2],
                       f1[3] + f1a[1], f1[4] + f1a[2]])
    b_act = jnp.stack([f2[0], f2[1], f1a[0], f2a[0],
                       f2[3] + f2a[1], f2[4] + f2a[2]]) + fused["b1"]

    pair_dtype = _CFG["pair_dtype"]
    diag, lse, total = fused_critic_sums(
        a_act.astype(pair_dtype), b_act.astype(pair_dtype),
        fused["w2"], fused["b2"], fused["w3"], n=n)

    # Fold the critics' last bias back in (constant shift of every score; it
    # cancels in both losses, kept for exactness / clarity).
    b3 = fused["b3"]
    diag = diag + n * b3
    lse = lse + n * b3
    total = total + (n * n) * b3

    infonce = -(diag / n - (lse / n - math.log(n)))          # (6,)
    club = diag / n - total / (n * n)                        # (6,)
    # uncond: infonce_x1x2, club_x1x2, infonce_x1y, infonce_x2y
    # cond:   infonce_x1x2_cond, club_x1x2_cond
    return (infonce[0] + club[1] + infonce[2] + infonce[3]
            + infonce[4] + club[5])


# ---------------------------------------------------------------------------

if __name__ == "__main__":
    key = jax.random.PRNGKey(0)
    feat_dims = (32, 16)   # feat_dims[0] = dim of x1/x1_aug, [1] = x2/x2_aug
    batch = 8

    k_params, k1, k2, k3, k4 = jax.random.split(key, 5)
    params = init_factorcl_params(k_params, feat_dims)
    fused = prepare_fused_params(params, feat_dims)

    x1 = jax.random.normal(k1, (batch, feat_dims[0]), jnp.float32)
    x2 = jax.random.normal(k2, (batch, feat_dims[1]), jnp.float32)
    x1_aug = jax.random.normal(k3, (batch, feat_dims[0]), jnp.float32)
    x2_aug = jax.random.normal(k4, (batch, feat_dims[1]), jnp.float32)

    loss = jax.jit(factorcl_forward)(fused, x1, x2, x1_aug, x2_aug)
    jax.block_until_ready(loss)
    print("KERNEL_OK")
</pallas_src>

<mosaic_0001>
module attributes {stable_mosaic.version = 11 : i64} {
  func.func @kernel(%arg0: memref<8x32xf32, #tpu.memory_space<vmem>>, %arg1: memref<3x32x32xf32, #tpu.memory_space<vmem>>, %arg2: memref<3x1x32xf32, #tpu.memory_space<vmem>>, %arg3: memref<3x32x512xf32, #tpu.memory_space<vmem>>, %arg4: memref<3x1x512xf32, #tpu.memory_space<vmem>>, %arg5: memref<3x8x512xf32, #tpu.memory_space<vmem>>) attributes {dimension_semantics = [], scalar_prefetch = 0 : i64, scratch_operands = 0 : i64, tpu.core_type = #tpu.core_type<tc>} {
    %c0 = arith.constant 0 : index
    %c0_0 = arith.constant 0 : index
    %0 = vector.load %arg0[%c0, %c0_0] : memref<8x32xf32, #tpu.memory_space<vmem>>, vector<8x32xf32>
    %1 = arith.mulf %0, %0 : vector<8x32xf32>
    %cst = arith.constant dense<0.000000e+00> : vector<8xf32>
    %2 = vector.multi_reduction <add>, %1, %cst [1] : vector<8x32xf32> to vector<8xf32>
    %3 = vector.shape_cast %2 : vector<8xf32> to vector<8x1xf32>
    %4 = math.sqrt %3 : vector<8x1xf32>
    %cst_1 = arith.constant 9.99999996E-13 : f32
    %5 = vector.broadcast %cst_1 : f32 to vector<8x1xf32>
    %6 = arith.maximumf %4, %5 : vector<8x1xf32>
    %7 = vector.broadcast %6 : vector<8x1xf32> to vector<8x32xf32>
    %8 = arith.divf %0, %7 : vector<8x32xf32>
    %c0_2 = arith.constant 0 : index
    %c0_3 = arith.constant 0 : index
    %c0_4 = arith.constant 0 : index
    %9 = vector.load %arg1[%c0_2, %c0_3, %c0_4] : memref<3x32x32xf32, #tpu.memory_space<vmem>>, vector<1x32x32xf32>
    %10 = vector.shape_cast %9 : vector<1x32x32xf32> to vector<32x32xf32>
    %cst_5 = arith.constant dense<0.000000e+00> : vector<8x32xf32>
    %11 = tpu.matmul %8, %10, %cst_5 {dimension_numbers = #tpu.dot_dimension_numbers<[1], [0], [0], [1], [0, 0, 1, 1], [], []>} : vector<8x32xf32>, vector<32x32xf32>, vector<8x32xf32> -> vector<8x32xf32>
    %c0_6 = arith.constant 0 : index
    %c0_7 = arith.constant 0 : index
    %c0_8 = arith.constant 0 : index
    %12 = vector.load %arg2[%c0_6, %c0_7, %c0_8] : memref<3x1x32xf32, #tpu.memory_space<vmem>>, vector<1x1x32xf32>
    %13 = vector.shape_cast %12 : vector<1x1x32xf32> to vector<1x32xf32>
    %14 = vector.broadcast %13 : vector<1x32xf32> to vector<8x32xf32>
    %15 = arith.addf %11, %14 : vector<8x32xf32>
    %cst_9 = arith.constant 0.000000e+00 : f32
    %16 = vector.broadcast %cst_9 : f32 to vector<8x32xf32>
    %17 = arith.maximumf %15, %16 : vector<8x32xf32>
    %c0_10 = arith.constant 0 : index
    %c0_11 = arith.constant 0 : index
    %c0_12 = arith.constant 0 : index
    %18 = vector.load %arg3[%c0_10, %c0_11, %c0_12] : memref<3x32x512xf32, #tpu.memory_space<vmem>>, vector<1x32x512xf32>
    %19 = vector.shape_cast %18 : vector<1x32x512xf32> to vector<32x512xf32>
    %cst_13 = arith.constant dense<0.000000e+00> : vector<8x512xf32>
    %20 = tpu.matmul %17, %19, %cst_13 {dimension_numbers = #tpu.dot_dimension_numbers<[1], [0], [0], [1], [0, 0, 1, 1], [], []>} : vector<8x32xf32>, vector<32x512xf32>, vector<8x512xf32> -> vector<8x512xf32>
    %c0_14 = arith.constant 0 : index
    %c0_15 = arith.constant 0 : index
    %c0_16 = arith.constant 0 : index
    %21 = vector.load %arg4[%c0_14, %c0_15, %c0_16] : memref<3x1x512xf32, #tpu.memory_space<vmem>>, vector<1x1x512xf32>
    %22 = vector.shape_cast %21 : vector<1x1x512xf32> to vector<1x512xf32>
    %23 = vector.broadcast %22 : vector<1x512xf32> to vector<8x512xf32>
    %24 = arith.addf %20, %23 : vector<8x512xf32>
    %c0_17 = arith.constant 0 : index
    %c0_18 = arith.constant 0 : index
    %c0_19 = arith.constant 0 : index
    %25 = vector.load %arg5[%c0_17, %c0_18, %c0_19] : memref<3x8x512xf32, #tpu.memory_space<vmem>>, vector<1x8x512xf32>
    %26 = vector.shape_cast %25 : vector<1x8x512xf32> to vector<8x512xf32>
    %27 = vector.shape_cast %24 : vector<8x512xf32> to vector<1x8x512xf32>
    tpu.vector_store %arg5[%c0_17, %c0_18, %c0_19], %27 {strides = array<i32>} : memref<3x8x512xf32, #tpu.memory_space<vmem>>, vector<1x8x512xf32>,
    %c1 = arith.constant 1 : index
    %c0_20 = arith.constant 0 : index
    %c0_21 = arith.constant 0 : index
    %28 = vector.load %arg1[%c1, %c0_20, %c0_21] : memref<3x32x32xf32, #tpu.memory_space<vmem>>, vector<1x32x32xf32>
    %29 = vector.shape_cast %28 : vector<1x32x32xf32> to vector<32x32xf32>
    %cst_22 = arith.constant dense<0.000000e+00> : vector<8x32xf32>
    %30 = tpu.matmul %8, %29, %cst_22 {dimension_numbers = #tpu.dot_dimension_numbers<[1], [0], [0], [1], [0, 0, 1, 1], [], []>} : vector<8x32xf32>, vector<32x32xf32>, vector<8x32xf32> -> vector<8x32xf32>
    %c1_23 = arith.constant 1 : index
    %c0_24 = arith.constant 0 : index
    %c0_25 = arith.constant 0 : index
    %31 = vector.load %arg2[%c1_23, %c0_24, %c0_25] : memref<3x1x32xf32, #tpu.memory_space<vmem>>, vector<1x1x32xf32>
    %32 = vector.shape_cast %31 : vector<1x1x32xf32> to vector<1x32xf32>
    %33 = vector.broadcast %32 : vector<1x32xf32> to vector<8x32xf32>
    %34 = arith.addf %30, %33 : vector<8x32xf32>
    %cst_26 = arith.constant 0.000000e+00 : f32
    %35 = vector.broadcast %cst_26 : f32 to vector<8x32xf32>
    %36 = arith.maximumf %34, %35 : vector<8x32xf32>
    %c1_27 = arith.constant 1 : index
    %c0_28 = arith.constant 0 : index
    %c0_29 = arith.constant 0 : index
    %37 = vector.load %arg3[%c1_27, %c0_28, %c0_29] : memref<3x32x512xf32, #tpu.memory_space<vmem>>, vector<1x32x512xf32>
    %38 = vector.shape_cast %37 : vector<1x32x512xf32> to vector<32x512xf32>
    %cst_30 = arith.constant dense<0.000000e+00> : vector<8x512xf32>
    %39 = tpu.matmul %36, %38, %cst_30 {dimension_numbers = #tpu.dot_dimension_numbers<[1], [0], [0], [1], [0, 0, 1, 1], [], []>} : vector<8x32xf32>, vector<32x512xf32>, vector<8x512xf32> -> vector<8x512xf32>
    %c1_31 = arith.constant 1 : index
    %c0_32 = arith.constant 0 : index
    %c0_33 = arith.constant 0 : index
    %40 = vector.load %arg4[%c1_31, %c0_32, %c0_33] : memref<3x1x512xf32, #tpu.memory_space<vmem>>, vector<1x1x512xf32>
    %41 = vector.shape_cast %40 : vector<1x1x512xf32> to vector<1x512xf32>
    %42 = vector.broadcast %41 : vector<1x512xf32> to vector<8x512xf32>
    %43 = arith.addf %39, %42 : vector<8x512xf32>
    %c1_34 = arith.constant 1 : index
    %c0_35 = arith.constant 0 : index
    %c0_36 = arith.constant 0 : index
    %44 = vector.load %arg5[%c1_34, %c0_35, %c0_36] : memref<3x8x512xf32, #tpu.memory_space<vmem>>, vector<1x8x512xf32>
    %45 = vector.shape_cast %44 : vector<1x8x512xf32> to vector<8x512xf32>
    %46 = vector.shape_cast %43 : vector<8x512xf32> to vector<1x8x512xf32>
    tpu.vector_store %arg5[%c1_34, %c0_35, %c0_36], %46 {strides = array<i32>} : memref<3x8x512xf32, #tpu.memory_space<vmem>>, vector<1x8x512xf32>,
    %c2 = arith.constant 2 : index
    %c0_37 = arith.constant 0 : index
    %c0_38 = arith.constant 0 : index
    %47 = vector.load %arg1[%c2, %c0_37, %c0_38] : memref<3x32x32xf32, #tpu.memory_space<vmem>>, vector<1x32x32xf32>
    %48 = vector.shape_cast %47 : vector<1x32x32xf32> to vector<32x32xf32>
    %cst_39 = arith.constant dense<0.000000e+00> : vector<8x32xf32>
    %49 = tpu.matmul %8, %48, %cst_39 {dimension_numbers = #tpu.dot_dimension_numbers<[1], [0], [0], [1], [0, 0, 1, 1], [], []>} : vector<8x32xf32>, vector<32x32xf32>, vector<8x32xf32> -> vector<8x32xf32>
    %c2_40 = arith.constant 2 : index
    %c0_41 = arith.constant 0 : index
    %c0_42 = arith.constant 0 : index
    %50 = vector.load %arg2[%c2_40, %c0_41, %c0_42] : memref<3x1x32xf32, #tpu.memory_space<vmem>>, vector<1x1x32xf32>
    %51 = vector.shape_cast %50 : vector<1x1x32xf32> to vector<1x32xf32>
    %52 = vector.broadcast %51 : vector<1x32xf32> to vector<8x32xf32>
    %53 = arith.addf %49, %52 : vector<8x32xf32>
    %cst_43 = arith.constant 0.000000e+00 : f32
    %54 = vector.broadcast %cst_43 : f32 to vector<8x32xf32>
    %55 = arith.maximumf %53, %54 : vector<8x32xf32>
    %c2_44 = arith.constant 2 : index
    %c0_45 = arith.constant 0 : index
    %c0_46 = arith.constant 0 : index
    %56 = vector.load %arg3[%c2_44, %c0_45, %c0_46] : memref<3x32x512xf32, #tpu.memory_space<vmem>>, vector<1x32x512xf32>
    %57 = vector.shape_cast %56 : vector<1x32x512xf32> to vector<32x512xf32>
    %cst_47 = arith.constant dense<0.000000e+00> : vector<8x512xf32>
    %58 = tpu.matmul %55, %57, %cst_47 {dimension_numbers = #tpu.dot_dimension_numbers<[1], [0], [0], [1], [0, 0, 1, 1], [], []>} : vector<8x32xf32>, vector<32x512xf32>, vector<8x512xf32> -> vector<8x512xf32>
    %c2_48 = arith.constant 2 : index
    %c0_49 = arith.constant 0 : index
    %c0_50 = arith.constant 0 : index
    %59 = vector.load %arg4[%c2_48, %c0_49, %c0_50] : memref<3x1x512xf32, #tpu.memory_space<vmem>>, vector<1x1x512xf32>
    %60 = vector.shape_cast %59 : vector<1x1x512xf32> to vector<1x512xf32>
    %61 = vector.broadcast %60 : vector<1x512xf32> to vector<8x512xf32>
    %62 = arith.addf %58, %61 : vector<8x512xf32>
    %c2_51 = arith.constant 2 : index
    %c0_52 = arith.constant 0 : index
    %c0_53 = arith.constant 0 : index
    %63 = vector.load %arg5[%c2_51, %c0_52, %c0_53] : memref<3x8x512xf32, #tpu.memory_space<vmem>>, vector<1x8x512xf32>
    %64 = vector.shape_cast %63 : vector<1x8x512xf32> to vector<8x512xf32>
    %65 = vector.shape_cast %62 : vector<8x512xf32> to vector<1x8x512xf32>
    tpu.vector_store %arg5[%c2_51, %c0_52, %c0_53], %65 {strides = array<i32>} : memref<3x8x512xf32, #tpu.memory_space<vmem>>, vector<1x8x512xf32>,
    return
  }
}

module attributes {stable_mosaic.version = 11 : i64} {
  func.func @kernel(%arg0: memref<8x32xf32, #tpu.memory_space<vmem>>, %arg1: memref<5x32x32xf32, #tpu.memory_space<vmem>>, %arg2: memref<5x1x32xf32, #tpu.memory_space<vmem>>, %arg3: memref<5x32x512xf32, #tpu.memory_space<vmem>>, %arg4: memref<5x1x512xf32, #tpu.memory_space<vmem>>, %arg5: memref<5x8x512xf32, #tpu.memory_space<vmem>>) attributes {dimension_semantics = [], scalar_prefetch = 0 : i64, scratch_operands = 0 : i64, tpu.core_type = #tpu.core_type<tc>} {
    %c0 = arith.constant 0 : index
    %c0_0 = arith.constant 0 : index
    %0 = vector.load %arg0[%c0, %c0_0] : memref<8x32xf32, #tpu.memory_space<vmem>>, vector<8x32xf32>
    %1 = arith.mulf %0, %0 : vector<8x32xf32>
    %cst = arith.constant dense<0.000000e+00> : vector<8xf32>
    %2 = vector.multi_reduction <add>, %1, %cst [1] : vector<8x32xf32> to vector<8xf32>
    %3 = vector.shape_cast %2 : vector<8xf32> to vector<8x1xf32>
    %4 = math.sqrt %3 : vector<8x1xf32>
    %cst_1 = arith.constant 9.99999996E-13 : f32
    %5 = vector.broadcast %cst_1 : f32 to vector<8x1xf32>
    %6 = arith.maximumf %4, %5 : vector<8x1xf32>
    %7 = vector.broadcast %6 : vector<8x1xf32> to vector<8x32xf32>
    %8 = arith.divf %0, %7 : vector<8x32xf32>
    %c0_2 = arith.constant 0 : index
    %c0_3 = arith.constant 0 : index
    %c0_4 = arith.constant 0 : index
    %9 = vector.load %arg1[%c0_2, %c0_3, %c0_4] : memref<5x32x32xf32, #tpu.memory_space<vmem>>, vector<1x32x32xf32>
    %10 = vector.shape_cast %9 : vector<1x32x32xf32> to vector<32x32xf32>
    %cst_5 = arith.constant dense<0.000000e+00> : vector<8x32xf32>
    %11 = tpu.matmul %8, %10, %cst_5 {dimension_numbers = #tpu.dot_dimension_numbers<[1], [0], [0], [1], [0, 0, 1, 1], [], []>} : vector<8x32xf32>, vector<32x32xf32>, vector<8x32xf32> -> vector<8x32xf32>
    %c0_6 = arith.constant 0 : index
    %c0_7 = arith.constant 0 : index
    %c0_8 = arith.constant 0 : index
    %12 = vector.load %arg2[%c0_6, %c0_7, %c0_8] : memref<5x1x32xf32, #tpu.memory_space<vmem>>, vector<1x1x32xf32>
    %13 = vector.shape_cast %12 : vector<1x1x32xf32> to vector<1x32xf32>
    %14 = vector.broadcast %13 : vector<1x32xf32> to vector<8x32xf32>
    %15 = arith.addf %11, %14 : vector<8x32xf32>
    %cst_9 = arith.constant 0.000000e+00 : f32
    %16 = vector.broadcast %cst_9 : f32 to vector<8x32xf32>
    %17 = arith.maximumf %15, %16 : vector<8x32xf32>
    %c0_10 = arith.constant 0 : index
    %c0_11 = arith.constant 0 : index
    %c0_12 = arith.constant 0 : index
    %18 = vector.load %arg3[%c0_10, %c0_11, %c0_12] : memref<5x32x512xf32, #tpu.memory_space<vmem>>, vector<1x32x512xf32>
    %19 = vector.shape_cast %18 : vector<1x32x512xf32> to vector<32x512xf32>
    %cst_13 = arith.constant dense<0.000000e+00> : vector<8x512xf32>
    %20 = tpu.matmul %17, %19, %cst_13 {dimension_numbers = #tpu.dot_dimension_numbers<[1], [0], [0], [1], [0, 0, 1, 1], [], []>} : vector<8x32xf32>, vector<32x512xf32>, vector<8x512xf32> -> vector<8x512xf32>
    %c0_14 = arith.constant 0 : index
    %c0_15 = arith.constant 0 : index
    %c0_16 = arith.constant 0 : index
    %21 = vector.load %arg4[%c0_14, %c0_15, %c0_16] : memref<5x1x512xf32, #tpu.memory_space<vmem>>, vector<1x1x512xf32>
    %22 = vector.shape_cast %21 : vector<1x1x512xf32> to vector<1x512xf32>
    %23 = vector.broadcast %22 : vector<1x512xf32> to vector<8x512xf32>
    %24 = arith.addf %20, %23 : vector<8x512xf32>
    %c0_17 = arith.constant 0 : index
    %c0_18 = arith.constant 0 : index
    %c0_19 = arith.constant 0 : index
    %25 = vector.load %arg5[%c0_17, %c0_18, %c0_19] : memref<5x8x512xf32, #tpu.memory_space<vmem>>, vector<1x8x512xf32>
    %26 = vector.shape_cast %25 : vector<1x8x512xf32> to vector<8x512xf32>
    %27 = vector.shape_cast %24 : vector<8x512xf32> to vector<1x8x512xf32>
    tpu.vector_store %arg5[%c0_17, %c0_18, %c0_19], %27 {strides = array<i32>} : memref<5x8x512xf32, #tpu.memory_space<vmem>>, vector<1x8x512xf32>,
    %c1 = arith.constant 1 : index
    %c0_20 = arith.constant 0 : index
    %c0_21 = arith.constant 0 : index
    %28 = vector.load %arg1[%c1, %c0_20, %c0_21] : memref<5x32x32xf32, #tpu.memory_space<vmem>>, vector<1x32x32xf32>
    %29 = vector.shape_cast %28 : vector<1x32x32xf32> to vector<32x32xf32>
    %cst_22 = arith.constant dense<0.000000e+00> : vector<8x32xf32>
    %30 = tpu.matmul %8, %29, %cst_22 {dimension_numbers = #tpu.dot_dimension_numbers<[1], [0], [0], [1], [0, 0, 1, 1], [], []>} : vector<8x32xf32>, vector<32x32xf32>, vector<8x32xf32> -> vector<8x32xf32>
    %c1_23 = arith.constant 1 : index
    %c0_24 = arith.constant 0 : index
    %c0_25 = arith.constant 0 : index
    %31 = vector.load %arg2[%c1_23, %c0_24, %c0_25] : memref<5x1x32xf32, #tpu.memory_space<vmem>>, vector<1x1x32xf32>
    %32 = vector.shape_cast %31 : vector<1x1x32xf32> to vector<1x32xf32>
    %33 = vector.broadcast %32 : vector<1x32xf32> to vector<8x32xf32>
    %34 = arith.addf %30, %33 : vector<8x32xf32>
    %cst_26 = arith.constant 0.000000e+00 : f32
    %35 = vector.broadcast %cst_26 : f32 to vector<8x32xf32>
    %36 = arith.maximumf %34, %35 : vector<8x32xf32>
    %c1_27 = arith.constant 1 : index
    %c0_28 = arith.constant 0 : index
    %c0_29 = arith.constant 0 : index
    %37 = vector.load %arg3[%c1_27, %c0_28, %c0_29] : memref<5x32x512xf32, #tpu.memory_space<vmem>>, vector<1x32x512xf32>
    %38 = vector.shape_cast %37 : vector<1x32x512xf32> to vector<32x512xf32>
    %cst_30 = arith.constant dense<0.000000e+00> : vector<8x512xf32>
    %39 = tpu.matmul %36, %38, %cst_30 {dimension_numbers = #tpu.dot_dimension_numbers<[1], [0], [0], [1], [0, 0, 1, 1], [], []>} : vector<8x32xf32>, vector<32x512xf32>, vector<8x512xf32> -> vector<8x512xf32>
    %c1_31 = arith.constant 1 : index
    %c0_32 = arith.constant 0 : index
    %c0_33 = arith.constant 0 : index
    %40 = vector.load %arg4[%c1_31, %c0_32, %c0_33] : memref<5x1x512xf32, #tpu.memory_space<vmem>>, vector<1x1x512xf32>
    %41 = vector.shape_cast %40 : vector<1x1x512xf32> to vector<1x512xf32>
    %42 = vector.broadcast %41 : vector<1x512xf32> to vector<8x512xf32>
    %43 = arith.addf %39, %42 : vector<8x512xf32>
    %c1_34 = arith.constant 1 : index
    %c0_35 = arith.constant 0 : index
    %c0_36 = arith.constant 0 : index
    %44 = vector.load %arg5[%c1_34, %c0_35, %c0_36] : memref<5x8x512xf32, #tpu.memory_space<vmem>>, vector<1x8x512xf32>
    %45 = vector.shape_cast %44 : vector<1x8x512xf32> to vector<8x512xf32>
    %46 = vector.shape_cast %43 : vector<8x512xf32> to vector<1x8x512xf32>
    tpu.vector_store %arg5[%c1_34, %c0_35, %c0_36], %46 {strides = array<i32>} : memref<5x8x512xf32, #tpu.memory_space<vmem>>, vector<1x8x512xf32>,
    %c2 = arith.constant 2 : index
    %c0_37 = arith.constant 0 : index
    %c0_38 = arith.constant 0 : index
    %47 = vector.load %arg1[%c2, %c0_37, %c0_38] : memref<5x32x32xf32, #tpu.memory_space<vmem>>, vector<1x32x32xf32>
    %48 = vector.shape_cast %47 : vector<1x32x32xf32> to vector<32x32xf32>
    %cst_39 = arith.constant dense<0.000000e+00> : vector<8x32xf32>
    %49 = tpu.matmul %8, %48, %cst_39 {dimension_numbers = #tpu.dot_dimension_numbers<[1], [0], [0], [1], [0, 0, 1, 1], [], []>} : vector<8x32xf32>, vector<32x32xf32>, vector<8x32xf32> -> vector<8x32xf32>
    %c2_40 = arith.constant 2 : index
    %c0_41 = arith.constant 0 : index
    %c0_42 = arith.constant 0 : index
    %50 = vector.load %arg2[%c2_40, %c0_41, %c0_42] : memref<5x1x32xf32, #tpu.memory_space<vmem>>, vector<1x1x32xf32>
    %51 = vector.shape_cast %50 : vector<1x1x32xf32> to vector<1x32xf32>
    %52 = vector.broadcast %51 : vector<1x32xf32> to vector<8x32xf32>
    %53 = arith.addf %49, %52 : vector<8x32xf32>
    %cst_43 = arith.constant 0.000000e+00 : f32
    %54 = vector.broadcast %cst_43 : f32 to vector<8x32xf32>
    %55 = arith.maximumf %53, %54 : vector<8x32xf32>
    %c2_44 = arith.constant 2 : index
    %c0_45 = arith.constant 0 : index
    %c0_46 = arith.constant 0 : index
    %56 = vector.load %arg3[%c2_44, %c0_45, %c0_46] : memref<5x32x512xf32, #tpu.memory_space<vmem>>, vector<1x32x512xf32>
    %57 = vector.shape_cast %56 : vector<1x32x512xf32> to vector<32x512xf32>
    %cst_47 = arith.constant dense<0.000000e+00> : vector<8x512xf32>
    %58 = tpu.matmul %55, %57, %cst_47 {dimension_numbers = #tpu.dot_dimension_numbers<[1], [0], [0], [1], [0, 0, 1, 1], [], []>} : vector<8x32xf32>, vector<32x512xf32>, vector<8x512xf32> -> vector<8x512xf32>
    %c2_48 = arith.constant 2 : index
    %c0_49 = arith.constant 0 : index
    %c0_50 = arith.constant 0 : index
    %59 = vector.load %arg4[%c2_48, %c0_49, %c0_50] : memref<5x1x512xf32, #tpu.memory_space<vmem>>, vector<1x1x512xf32>
    %60 = vector.shape_cast %59 : vector<1x1x512xf32> to vector<1x512xf32>
    %61 = vector.broadcast %60 : vector<1x512xf32> to vector<8x512xf32>
    %62 = arith.addf %58, %61 : vector<8x512xf32>
    %c2_51 = arith.constant 2 : index
    %c0_52 = arith.constant 0 : index
    %c0_53 = arith.constant 0 : index
    %63 = vector.load %arg5[%c2_51, %c0_52, %c0_53] : memref<5x8x512xf32, #tpu.memory_space<vmem>>, vector<1x8x512xf32>
    %64 = vector.shape_cast %63 : vector<1x8x512xf32> to vector<8x512xf32>
    %65 = vector.shape_cast %62 : vector<8x512xf32> to vector<1x8x512xf32>
    tpu.vector_store %arg5[%c2_51, %c0_52, %c0_53], %65 {strides = array<i32>} : memref<5x8x512xf32, #tpu.memory_space<vmem>>, vector<1x8x512xf32>,
    %c3 = arith.constant 3 : index
    %c0_54 = arith.constant 0 : index
    %c0_55 = arith.constant 0 : index
    %66 = vector.load %arg1[%c3, %c0_54, %c0_55] : memref<5x32x32xf32, #tpu.memory_space<vmem>>, vector<1x32x32xf32>
    %67 = vector.shape_cast %66 : vector<1x32x32xf32> to vector<32x32xf32>
    %cst_56 = arith.constant dense<0.000000e+00> : vector<8x32xf32>
    %68 = tpu.matmul %8, %67, %cst_56 {dimension_numbers = #tpu.dot_dimension_numbers<[1], [0], [0], [1], [0, 0, 1, 1], [], []>} : vector<8x32xf32>, vector<32x32xf32>, vector<8x32xf32> -> vector<8x32xf32>
    %c3_57 = arith.constant 3 : index
    %c0_58 = arith.constant 0 : index
    %c0_59 = arith.constant 0 : index
    %69 = vector.load %arg2[%c3_57, %c0_58, %c0_59] : memref<5x1x32xf32, #tpu.memory_space<vmem>>, vector<1x1x32xf32>
    %70 = vector.shape_cast %69 : vector<1x1x32xf32> to vector<1x32xf32>
    %71 = vector.broadcast %70 : vector<1x32xf32> to vector<8x32xf32>
    %72 = arith.addf %68, %71 : vector<8x32xf32>
    %cst_60 = arith.constant 0.000000e+00 : f32
    %73 = vector.broadcast %cst_60 : f32 to vector<8x32xf32>
    %74 = arith.maximumf %72, %73 : vector<8x32xf32>
    %c3_61 = arith.constant 3 : index
    %c0_62 = arith.constant 0 : index
    %c0_63 = arith.constant 0 : index
    %75 = vector.load %arg3[%c3_61, %c0_62, %c0_63] : memref<5x32x512xf32, #tpu.memory_space<vmem>>, vector<1x32x512xf32>
    %76 = vector.shape_cast %75 : vector<1x32x512xf32> to vector<32x512xf32>
    %cst_64 = arith.constant dense<0.000000e+00> : vector<8x512xf32>
    %77 = tpu.matmul %74, %76, %cst_64 {dimension_numbers = #tpu.dot_dimension_numbers<[1], [0], [0], [1], [0, 0, 1, 1], [], []>} : vector<8x32xf32>, vector<32x512xf32>, vector<8x512xf32> -> vector<8x512xf32>
    %c3_65 = arith.constant 3 : index
    %c0_66 = arith.constant 0 : index
    %c0_67 = arith.constant 0 : index
    %78 = vector.load %arg4[%c3_65, %c0_66, %c0_67] : memref<5x1x512xf32, #tpu.memory_space<vmem>>, vector<1x1x512xf32>
    %79 = vector.shape_cast %78 : vector<1x1x512xf32> to vector<1x512xf32>
    %80 = vector.broadcast %79 : vector<1x512xf32> to vector<8x512xf32>
    %81 = arith.addf %77, %80 : vector<8x512xf32>
    %c3_68 = arith.constant 3 : index
    %c0_69 = arith.constant 0 : index
    %c0_70 = arith.constant 0 : index
    %82 = vector.load %arg5[%c3_68, %c0_69, %c0_70] : memref<5x8x512xf32, #tpu.memory_space<vmem>>, vector<1x8x512xf32>
    %83 = vector.shape_cast %82 : vector<1x8x512xf32> to vector<8x512xf32>
    %84 = vector.shape_cast %81 : vector<8x512xf32> to vector<1x8x512xf32>
    tpu.vector_store %arg5[%c3_68, %c0_69, %c0_70], %84 {strides = array<i32>} : memref<5x8x512xf32, #tpu.memory_space<vmem>>, vector<1x8x512xf32>,
    %c4 = arith.constant 4 : index
    %c0_71 = arith.constant 0 : index
    %c0_72 = arith.constant 0 : index
    %85 = vector.load %arg1[%c4, %c0_71, %c0_72] : memref<5x32x32xf32, #tpu.memory_space<vmem>>, vector<1x32x32xf32>
    %86 = vector.shape_cast %85 : vector<1x32x32xf32> to vector<32x32xf32>
    %cst_73 = arith.constant dense<0.000000e+00> : vector<8x32xf32>
    %87 = tpu.matmul %8, %86, %cst_73 {dimension_numbers = #tpu.dot_dimension_numbers<[1], [0], [0], [1], [0, 0, 1, 1], [], []>} : vector<8x32xf32>, vector<32x32xf32>, vector<8x32xf32> -> vector<8x32xf32>
    %c4_74 = arith.constant 4 : index
    %c0_75 = arith.constant 0 : index
    %c0_76 = arith.constant 0 : index
    %88 = vector.load %arg2[%c4_74, %c0_75, %c0_76] : memref<5x1x32xf32, #tpu.memory_space<vmem>>, vector<1x1x32xf32>
    %89 = vector.shape_cast %88 : vector<1x1x32xf32> to vector<1x32xf32>
    %90 = vector.broadcast %89 : vector<1x32xf32> to vector<8x32xf32>
    %91 = arith.addf %87, %90 : vector<8x32xf32>
    %cst_77 = arith.constant 0.000000e+00 : f32
    %92 = vector.broadcast %cst_77 : f32 to vector<8x32xf32>
    %93 = arith.maximumf %91, %92 : vector<8x32xf32>
    %c4_78 = arith.constant 4 : index
    %c0_79 = arith.constant 0 : index
    %c0_80 = arith.constant 0 : index
    %94 = vector.load %arg3[%c4_78, %c0_79, %c0_80] : memref<5x32x512xf32, #tpu.memory_space<vmem>>, vector<1x32x512xf32>
    %95 = vector.shape_cast %94 : vector<1x32x512xf32> to vector<32x512xf32>
    %cst_81 = arith.constant dense<0.000000e+00> : vector<8x512xf32>
    %96 = tpu.matmul %93, %95, %cst_81 {dimension_numbers = #tpu.dot_dimension_numbers<[1], [0], [0], [1], [0, 0, 1, 1], [], []>} : vector<8x32xf32>, vector<32x512xf32>, vector<8x512xf32> -> vector<8x512xf32>
    %c4_82 = arith.constant 4 : index
    %c0_83 = arith.constant 0 : index
    %c0_84 = arith.constant 0 : index
    %97 = vector.load %arg4[%c4_82, %c0_83, %c0_84] : memref<5x1x512xf32, #tpu.memory_space<vmem>>, vector<1x1x512xf32>
    %98 = vector.shape_cast %97 : vector<1x1x512xf32> to vector<1x512xf32>
    %99 = vector.broadcast %98 : vector<1x512xf32> to vector<8x512xf32>
    %100 = arith.addf %96, %99 : vector<8x512xf32>
    %c4_85 = arith.constant 4 : index
    %c0_86 = arith.constant 0 : index
    %c0_87 = arith.constant 0 : index
    %101 = vector.load %arg5[%c4_85, %c0_86, %c0_87] : memref<5x8x512xf32, #tpu.memory_space<vmem>>, vector<1x8x512xf32>
    %102 = vector.shape_cast %101 : vector<1x8x512xf32> to vector<8x512xf32>
    %103 = vector.shape_cast %100 : vector<8x512xf32> to vector<1x8x512xf32>
    tpu.vector_store %arg5[%c4_85, %c0_86, %c0_87], %103 {strides = array<i32>} : memref<5x8x512xf32, #tpu.memory_space<vmem>>, vector<1x8x512xf32>,
    return
  }
}

module attributes {stable_mosaic.version = 11 : i64} {
  func.func @kernel(%arg0: memref<8x16xf32, #tpu.memory_space<vmem>>, %arg1: memref<5x16x16xf32, #tpu.memory_space<vmem>>, %arg2: memref<5x1x16xf32, #tpu.memory_space<vmem>>, %arg3: memref<5x16x512xf32, #tpu.memory_space<vmem>>, %arg4: memref<5x1x512xf32, #tpu.memory_space<vmem>>, %arg5: memref<5x8x512xf32, #tpu.memory_space<vmem>>) attributes {dimension_semantics = [], scalar_prefetch = 0 : i64, scratch_operands = 0 : i64, tpu.core_type = #tpu.core_type<tc>} {
    %c0 = arith.constant 0 : index
    %c0_0 = arith.constant 0 : index
    %0 = vector.load %arg0[%c0, %c0_0] : memref<8x16xf32, #tpu.memory_space<vmem>>, vector<8x16xf32>
    %1 = arith.mulf %0, %0 : vector<8x16xf32>
    %cst = arith.constant dense<0.000000e+00> : vector<8xf32>
    %2 = vector.multi_reduction <add>, %1, %cst [1] : vector<8x16xf32> to vector<8xf32>
    %3 = vector.shape_cast %2 : vector<8xf32> to vector<8x1xf32>
    %4 = math.sqrt %3 : vector<8x1xf32>
    %cst_1 = arith.constant 9.99999996E-13 : f32
    %5 = vector.broadcast %cst_1 : f32 to vector<8x1xf32>
    %6 = arith.maximumf %4, %5 : vector<8x1xf32>
    %7 = vector.broadcast %6 : vector<8x1xf32> to vector<8x16xf32>
    %8 = arith.divf %0, %7 : vector<8x16xf32>
    %c0_2 = arith.constant 0 : index
    %c0_3 = arith.constant 0 : index
    %c0_4 = arith.constant 0 : index
    %9 = vector.load %arg1[%c0_2, %c0_3, %c0_4] : memref<5x16x16xf32, #tpu.memory_space<vmem>>, vector<1x16x16xf32>
    %10 = vector.shape_cast %9 : vector<1x16x16xf32> to vector<16x16xf32>
    %cst_5 = arith.constant dense<0.000000e+00> : vector<8x16xf32>
    %11 = tpu.matmul %8, %10, %cst_5 {dimension_numbers = #tpu.dot_dimension_numbers<[1], [0], [0], [1], [0, 0, 1, 1], [], []>} : vector<8x16xf32>, vector<16x16xf32>, vector<8x16xf32> -> vector<8x16xf32>
    %c0_6 = arith.constant 0 : index
    %c0_7 = arith.constant 0 : index
    %c0_8 = arith.constant 0 : index
    %12 = vector.load %arg2[%c0_6, %c0_7, %c0_8] : memref<5x1x16xf32, #tpu.memory_space<vmem>>, vector<1x1x16xf32>
    %13 = vector.shape_cast %12 : vector<1x1x16xf32> to vector<1x16xf32>
    %14 = vector.broadcast %13 : vector<1x16xf32> to vector<8x16xf32>
    %15 = arith.addf %11, %14 : vector<8x16xf32>
    %cst_9 = arith.constant 0.000000e+00 : f32
    %16 = vector.broadcast %cst_9 : f32 to vector<8x16xf32>
    %17 = arith.maximumf %15, %16 : vector<8x16xf32>
    %c0_10 = arith.constant 0 : index
    %c0_11 = arith.constant 0 : index
    %c0_12 = arith.constant 0 : index
    %18 = vector.load %arg3[%c0_10, %c0_11, %c0_12] : memref<5x16x512xf32, #tpu.memory_space<vmem>>, vector<1x16x512xf32>
    %19 = vector.shape_cast %18 : vector<1x16x512xf32> to vector<16x512xf32>
    %cst_13 = arith.constant dense<0.000000e+00> : vector<8x512xf32>
    %20 = tpu.matmul %17, %19, %cst_13 {dimension_numbers = #tpu.dot_dimension_numbers<[1], [0], [0], [1], [0, 0, 1, 1], [], []>} : vector<8x16xf32>, vector<16x512xf32>, vector<8x512xf32> -> vector<8x512xf32>
    %c0_14 = arith.constant 0 : index
    %c0_15 = arith.constant 0 : index
    %c0_16 = arith.constant 0 : index
    %21 = vector.load %arg4[%c0_14, %c0_15, %c0_16] : memref<5x1x512xf32, #tpu.memory_space<vmem>>, vector<1x1x512xf32>
    %22 = vector.shape_cast %21 : vector<1x1x512xf32> to vector<1x512xf32>
    %23 = vector.broadcast %22 : vector<1x512xf32> to vector<8x512xf32>
    %24 = arith.addf %20, %23 : vector<8x512xf32>
    %c0_17 = arith.constant 0 : index
    %c0_18 = arith.constant 0 : index
    %c0_19 = arith.constant 0 : index
    %25 = vector.load %arg5[%c0_17, %c0_18, %c0_19] : memref<5x8x512xf32, #tpu.memory_space<vmem>>, vector<1x8x512xf32>
    %26 = vector.shape_cast %25 : vector<1x8x512xf32> to vector<8x512xf32>
    %27 = vector.shape_cast %24 : vector<8x512xf32> to vector<1x8x512xf32>
    tpu.vector_store %arg5[%c0_17, %c0_18, %c0_19], %27 {strides = array<i32>} : memref<5x8x512xf32, #tpu.memory_space<vmem>>, vector<1x8x512xf32>,
    %c1 = arith.constant 1 : index
    %c0_20 = arith.constant 0 : index
    %c0_21 = arith.constant 0 : index
    %28 = vector.load %arg1[%c1, %c0_20, %c0_21] : memref<5x16x16xf32, #tpu.memory_space<vmem>>, vector<1x16x16xf32>
    %29 = vector.shape_cast %28 : vector<1x16x16xf32> to vector<16x16xf32>
    %cst_22 = arith.constant dense<0.000000e+00> : vector<8x16xf32>
    %30 = tpu.matmul %8, %29, %cst_22 {dimension_numbers = #tpu.dot_dimension_numbers<[1], [0], [0], [1], [0, 0, 1, 1], [], []>} : vector<8x16xf32>, vector<16x16xf32>, vector<8x16xf32> -> vector<8x16xf32>
    %c1_23 = arith.constant 1 : index
    %c0_24 = arith.constant 0 : index
    %c0_25 = arith.constant 0 : index
    %31 = vector.load %arg2[%c1_23, %c0_24, %c0_25] : memref<5x1x16xf32, #tpu.memory_space<vmem>>, vector<1x1x16xf32>
    %32 = vector.shape_cast %31 : vector<1x1x16xf32> to vector<1x16xf32>
    %33 = vector.broadcast %32 : vector<1x16xf32> to vector<8x16xf32>
    %34 = arith.addf %30, %33 : vector<8x16xf32>
    %cst_26 = arith.constant 0.000000e+00 : f32
    %35 = vector.broadcast %cst_26 : f32 to vector<8x16xf32>
    %36 = arith.maximumf %34, %35 : vector<8x16xf32>
    %c1_27 = arith.constant 1 : index
    %c0_28 = arith.constant 0 : index
    %c0_29 = arith.constant 0 : index
    %37 = vector.load %arg3[%c1_27, %c0_28, %c0_29] : memref<5x16x512xf32, #tpu.memory_space<vmem>>, vector<1x16x512xf32>
    %38 = vector.shape_cast %37 : vector<1x16x512xf32> to vector<16x512xf32>
    %cst_30 = arith.constant dense<0.000000e+00> : vector<8x512xf32>
    %39 = tpu.matmul %36, %38, %cst_30 {dimension_numbers = #tpu.dot_dimension_numbers<[1], [0], [0], [1], [0, 0, 1, 1], [], []>} : vector<8x16xf32>, vector<16x512xf32>, vector<8x512xf32> -> vector<8x512xf32>
    %c1_31 = arith.constant 1 : index
    %c0_32 = arith.constant 0 : index
    %c0_33 = arith.constant 0 : index
    %40 = vector.load %arg4[%c1_31, %c0_32, %c0_33] : memref<5x1x512xf32, #tpu.memory_space<vmem>>, vector<1x1x512xf32>
    %41 = vector.shape_cast %40 : vector<1x1x512xf32> to vector<1x512xf32>
    %42 = vector.broadcast %41 : vector<1x512xf32> to vector<8x512xf32>
    %43 = arith.addf %39, %42 : vector<8x512xf32>
    %c1_34 = arith.constant 1 : index
    %c0_35 = arith.constant 0 : index
    %c0_36 = arith.constant 0 : index
    %44 = vector.load %arg5[%c1_34, %c0_35, %c0_36] : memref<5x8x512xf32, #tpu.memory_space<vmem>>, vector<1x8x512xf32>
    %45 = vector.shape_cast %44 : vector<1x8x512xf32> to vector<8x512xf32>
    %46 = vector.shape_cast %43 : vector<8x512xf32> to vector<1x8x512xf32>
    tpu.vector_store %arg5[%c1_34, %c0_35, %c0_36], %46 {strides = array<i32>} : memref<5x8x512xf32, #tpu.memory_space<vmem>>, vector<1x8x512xf32>,
    %c2 = arith.constant 2 : index
    %c0_37 = arith.constant 0 : index
    %c0_38 = arith.constant 0 : index
    %47 = vector.load %arg1[%c2, %c0_37, %c0_38] : memref<5x16x16xf32, #tpu.memory_space<vmem>>, vector<1x16x16xf32>
    %48 = vector.shape_cast %47 : vector<1x16x16xf32> to vector<16x16xf32>
    %cst_39 = arith.constant dense<0.000000e+00> : vector<8x16xf32>
    %49 = tpu.matmul %8, %48, %cst_39 {dimension_numbers = #tpu.dot_dimension_numbers<[1], [0], [0], [1], [0, 0, 1, 1], [], []>} : vector<8x16xf32>, vector<16x16xf32>, vector<8x16xf32> -> vector<8x16xf32>
    %c2_40 = arith.constant 2 : index
    %c0_41 = arith.constant 0 : index
    %c0_42 = arith.constant 0 : index
    %50 = vector.load %arg2[%c2_40, %c0_41, %c0_42] : memref<5x1x16xf32, #tpu.memory_space<vmem>>, vector<1x1x16xf32>
    %51 = vector.shape_cast %50 : vector<1x1x16xf32> to vector<1x16xf32>
    %52 = vector.broadcast %51 : vector<1x16xf32> to vector<8x16xf32>
    %53 = arith.addf %49, %52 : vector<8x16xf32>
    %cst_43 = arith.constant 0.000000e+00 : f32
    %54 = vector.broadcast %cst_43 : f32 to vector<8x16xf32>
    %55 = arith.maximumf %53, %54 : vector<8x16xf32>
    %c2_44 = arith.constant 2 : index
    %c0_45 = arith.constant 0 : index
    %c0_46 = arith.constant 0 : index
    %56 = vector.load %arg3[%c2_44, %c0_45, %c0_46] : memref<5x16x512xf32, #tpu.memory_space<vmem>>, vector<1x16x512xf32>
    %57 = vector.shape_cast %56 : vector<1x16x512xf32> to vector<16x512xf32>
    %cst_47 = arith.constant dense<0.000000e+00> : vector<8x512xf32>
    %58 = tpu.matmul %55, %57, %cst_47 {dimension_numbers = #tpu.dot_dimension_numbers<[1], [0], [0], [1], [0, 0, 1, 1], [], []>} : vector<8x16xf32>, vector<16x512xf32>, vector<8x512xf32> -> vector<8x512xf32>
    %c2_48 = arith.constant 2 : index
    %c0_49 = arith.constant 0 : index
    %c0_50 = arith.constant 0 : index
    %59 = vector.load %arg4[%c2_48, %c0_49, %c0_50] : memref<5x1x512xf32, #tpu.memory_space<vmem>>, vector<1x1x512xf32>
    %60 = vector.shape_cast %59 : vector<1x1x512xf32> to vector<1x512xf32>
    %61 = vector.broadcast %60 : vector<1x512xf32> to vector<8x512xf32>
    %62 = arith.addf %58, %61 : vector<8x512xf32>
    %c2_51 = arith.constant 2 : index
    %c0_52 = arith.constant 0 : index
    %c0_53 = arith.constant 0 : index
    %63 = vector.load %arg5[%c2_51, %c0_52, %c0_53] : memref<5x8x512xf32, #tpu.memory_space<vmem>>, vector<1x8x512xf32>
    %64 = vector.shape_cast %63 : vector<1x8x512xf32> to vector<8x512xf32>
    %65 = vector.shape_cast %62 : vector<8x512xf32> to vector<1x8x512xf32>
    tpu.vector_store %arg5[%c2_51, %c0_52, %c0_53], %65 {strides = array<i32>} : memref<5x8x512xf32, #tpu.memory_space<vmem>>, vector<1x8x512xf32>,
    %c3 = arith.constant 3 : index
    %c0_54 = arith.constant 0 : index
    %c0_55 = arith.constant 0 : index
    %66 = vector.load %arg1[%c3, %c0_54, %c0_55] : memref<5x16x16xf32, #tpu.memory_space<vmem>>, vector<1x16x16xf32>
    %67 = vector.shape_cast %66 : vector<1x16x16xf32> to vector<16x16xf32>
    %cst_56 = arith.constant dense<0.000000e+00> : vector<8x16xf32>
    %68 = tpu.matmul %8, %67, %cst_56 {dimension_numbers = #tpu.dot_dimension_numbers<[1], [0], [0], [1], [0, 0, 1, 1], [], []>} : vector<8x16xf32>, vector<16x16xf32>, vector<8x16xf32> -> vector<8x16xf32>
    %c3_57 = arith.constant 3 : index
    %c0_58 = arith.constant 0 : index
    %c0_59 = arith.constant 0 : index
    %69 = vector.load %arg2[%c3_57, %c0_58, %c0_59] : memref<5x1x16xf32, #tpu.memory_space<vmem>>, vector<1x1x16xf32>
    %70 = vector.shape_cast %69 : vector<1x1x16xf32> to vector<1x16xf32>
    %71 = vector.broadcast %70 : vector<1x16xf32> to vector<8x16xf32>
    %72 = arith.addf %68, %71 : vector<8x16xf32>
    %cst_60 = arith.constant 0.000000e+00 : f32
    %73 = vector.broadcast %cst_60 : f32 to vector<8x16xf32>
    %74 = arith.maximumf %72, %73 : vector<8x16xf32>
    %c3_61 = arith.constant 3 : index
    %c0_62 = arith.constant 0 : index
    %c0_63 = arith.constant 0 : index
    %75 = vector.load %arg3[%c3_61, %c0_62, %c0_63] : memref<5x16x512xf32, #tpu.memory_space<vmem>>, vector<1x16x512xf32>
    %76 = vector.shape_cast %75 : vector<1x16x512xf32> to vector<16x512xf32>
    %cst_64 = arith.constant dense<0.000000e+00> : vector<8x512xf32>
    %77 = tpu.matmul %74, %76, %cst_64 {dimension_numbers = #tpu.dot_dimension_numbers<[1], [0], [0], [1], [0, 0, 1, 1], [], []>} : vector<8x16xf32>, vector<16x512xf32>, vector<8x512xf32> -> vector<8x512xf32>
    %c3_65 = arith.constant 3 : index
    %c0_66 = arith.constant 0 : index
    %c0_67 = arith.constant 0 : index
    %78 = vector.load %arg4[%c3_65, %c0_66, %c0_67] : memref<5x1x512xf32, #tpu.memory_space<vmem>>, vector<1x1x512xf32>
    %79 = vector.shape_cast %78 : vector<1x1x512xf32> to vector<1x512xf32>
    %80 = vector.broadcast %79 : vector<1x512xf32> to vector<8x512xf32>
    %81 = arith.addf %77, %80 : vector<8x512xf32>
    %c3_68 = arith.constant 3 : index
    %c0_69 = arith.constant 0 : index
    %c0_70 = arith.constant 0 : index
    %82 = vector.load %arg5[%c3_68, %c0_69, %c0_70] : memref<5x8x512xf32, #tpu.memory_space<vmem>>, vector<1x8x512xf32>
    %83 = vector.shape_cast %82 : vector<1x8x512xf32> to vector<8x512xf32>
    %84 = vector.shape_cast %81 : vector<8x512xf32> to vector<1x8x512xf32>
    tpu.vector_store %arg5[%c3_68, %c0_69, %c0_70], %84 {strides = array<i32>} : memref<5x8x512xf32, #tpu.memory_space<vmem>>, vector<1x8x512xf32>,
    %c4 = arith.constant 4 : index
    %c0_71 = arith.constant 0 : index
    %c0_72 = arith.constant 0 : index
    %85 = vector.load %arg1[%c4, %c0_71, %c0_72] : memref<5x16x16xf32, #tpu.memory_space<vmem>>, vector<1x16x16xf32>
    %86 = vector.shape_cast %85 : vector<1x16x16xf32> to vector<16x16xf32>
    %cst_73 = arith.constant dense<0.000000e+00> : vector<8x16xf32>
    %87 = tpu.matmul %8, %86, %cst_73 {dimension_numbers = #tpu.dot_dimension_numbers<[1], [0], [0], [1], [0, 0, 1, 1], [], []>} : vector<8x16xf32>, vector<16x16xf32>, vector<8x16xf32> -> vector<8x16xf32>
    %c4_74 = arith.constant 4 : index
    %c0_75 = arith.constant 0 : index
    %c0_76 = arith.constant 0 : index
    %88 = vector.load %arg2[%c4_74, %c0_75, %c0_76] : memref<5x1x16xf32, #tpu.memory_space<vmem>>, vector<1x1x16xf32>
    %89 = vector.shape_cast %88 : vector<1x1x16xf32> to vector<1x16xf32>
    %90 = vector.broadcast %89 : vector<1x16xf32> to vector<8x16xf32>
    %91 = arith.addf %87, %90 : vector<8x16xf32>
    %cst_77 = arith.constant 0.000000e+00 : f32
    %92 = vector.broadcast %cst_77 : f32 to vector<8x16xf32>
    %93 = arith.maximumf %91, %92 : vector<8x16xf32>
    %c4_78 = arith.constant 4 : index
    %c0_79 = arith.constant 0 : index
    %c0_80 = arith.constant 0 : index
    %94 = vector.load %arg3[%c4_78, %c0_79, %c0_80] : memref<5x16x512xf32, #tpu.memory_space<vmem>>, vector<1x16x512xf32>
    %95 = vector.shape_cast %94 : vector<1x16x512xf32> to vector<16x512xf32>
    %cst_81 = arith.constant dense<0.000000e+00> : vector<8x512xf32>
    %96 = tpu.matmul %93, %95, %cst_81 {dimension_numbers = #tpu.dot_dimension_numbers<[1], [0], [0], [1], [0, 0, 1, 1], [], []>} : vector<8x16xf32>, vector<16x512xf32>, vector<8x512xf32> -> vector<8x512xf32>
    %c4_82 = arith.constant 4 : index
    %c0_83 = arith.constant 0 : index
    %c0_84 = arith.constant 0 : index
    %97 = vector.load %arg4[%c4_82, %c0_83, %c0_84] : memref<5x1x512xf32, #tpu.memory_space<vmem>>, vector<1x1x512xf32>
    %98 = vector.shape_cast %97 : vector<1x1x512xf32> to vector<1x512xf32>
    %99 = vector.broadcast %98 : vector<1x512xf32> to vector<8x512xf32>
    %100 = arith.addf %96, %99 : vector<8x512xf32>
    %c4_85 = arith.constant 4 : index
    %c0_86 = arith.constant 0 : index
    %c0_87 = arith.constant 0 : index
    %101 = vector.load %arg5[%c4_85, %c0_86, %c0_87] : memref<5x8x512xf32, #tpu.memory_space<vmem>>, vector<1x8x512xf32>
    %102 = vector.shape_cast %101 : vector<1x8x512xf32> to vector<8x512xf32>
    %103 = vector.shape_cast %100 : vector<8x512xf32> to vector<1x8x512xf32>
    tpu.vector_store %arg5[%c4_85, %c0_86, %c0_87], %103 {strides = array<i32>} : memref<5x8x512xf32, #tpu.memory_space<vmem>>, vector<1x8x512xf32>,
    return
  }
}

module attributes {stable_mosaic.version = 11 : i64} {
  func.func @kernel(%arg0: memref<8x16xf32, #tpu.memory_space<vmem>>, %arg1: memref<3x16x16xf32, #tpu.memory_space<vmem>>, %arg2: memref<3x1x16xf32, #tpu.memory_space<vmem>>, %arg3: memref<3x16x512xf32, #tpu.memory_space<vmem>>, %arg4: memref<3x1x512xf32, #tpu.memory_space<vmem>>, %arg5: memref<3x8x512xf32, #tpu.memory_space<vmem>>) attributes {dimension_semantics = [], scalar_prefetch = 0 : i64, scratch_operands = 0 : i64, tpu.core_type = #tpu.core_type<tc>} {
    %c0 = arith.constant 0 : index
    %c0_0 = arith.constant 0 : index
    %0 = vector.load %arg0[%c0, %c0_0] : memref<8x16xf32, #tpu.memory_space<vmem>>, vector<8x16xf32>
    %1 = arith.mulf %0, %0 : vector<8x16xf32>
    %cst = arith.constant dense<0.000000e+00> : vector<8xf32>
    %2 = vector.multi_reduction <add>, %1, %cst [1] : vector<8x16xf32> to vector<8xf32>
    %3 = vector.shape_cast %2 : vector<8xf32> to vector<8x1xf32>
    %4 = math.sqrt %3 : vector<8x1xf32>
    %cst_1 = arith.constant 9.99999996E-13 : f32
    %5 = vector.broadcast %cst_1 : f32 to vector<8x1xf32>
    %6 = arith.maximumf %4, %5 : vector<8x1xf32>
    %7 = vector.broadcast %6 : vector<8x1xf32> to vector<8x16xf32>
    %8 = arith.divf %0, %7 : vector<8x16xf32>
    %c0_2 = arith.constant 0 : index
    %c0_3 = arith.constant 0 : index
    %c0_4 = arith.constant 0 : index
    %9 = vector.load %arg1[%c0_2, %c0_3, %c0_4] : memref<3x16x16xf32, #tpu.memory_space<vmem>>, vector<1x16x16xf32>
    %10 = vector.shape_cast %9 : vector<1x16x16xf32> to vector<16x16xf32>
    %cst_5 = arith.constant dense<0.000000e+00> : vector<8x16xf32>
    %11 = tpu.matmul %8, %10, %cst_5 {dimension_numbers = #tpu.dot_dimension_numbers<[1], [0], [0], [1], [0, 0, 1, 1], [], []>} : vector<8x16xf32>, vector<16x16xf32>, vector<8x16xf32> -> vector<8x16xf32>
    %c0_6 = arith.constant 0 : index
    %c0_7 = arith.constant 0 : index
    %c0_8 = arith.constant 0 : index
    %12 = vector.load %arg2[%c0_6, %c0_7, %c0_8] : memref<3x1x16xf32, #tpu.memory_space<vmem>>, vector<1x1x16xf32>
    %13 = vector.shape_cast %12 : vector<1x1x16xf32> to vector<1x16xf32>
    %14 = vector.broadcast %13 : vector<1x16xf32> to vector<8x16xf32>
    %15 = arith.addf %11, %14 : vector<8x16xf32>
    %cst_9 = arith.constant 0.000000e+00 : f32
    %16 = vector.broadcast %cst_9 : f32 to vector<8x16xf32>
    %17 = arith.maximumf %15, %16 : vector<8x16xf32>
    %c0_10 = arith.constant 0 : index
    %c0_11 = arith.constant 0 : index
    %c0_12 = arith.constant 0 : index
    %18 = vector.load %arg3[%c0_10, %c0_11, %c0_12] : memref<3x16x512xf32, #tpu.memory_space<vmem>>, vector<1x16x512xf32>
    %19 = vector.shape_cast %18 : vector<1x16x512xf32> to vector<16x512xf32>
    %cst_13 = arith.constant dense<0.000000e+00> : vector<8x512xf32>
    %20 = tpu.matmul %17, %19, %cst_13 {dimension_numbers = #tpu.dot_dimension_numbers<[1], [0], [0], [1], [0, 0, 1, 1], [], []>} : vector<8x16xf32>, vector<16x512xf32>, vector<8x512xf32> -> vector<8x512xf32>
    %c0_14 = arith.constant 0 : index
    %c0_15 = arith.constant 0 : index
    %c0_16 = arith.constant 0 : index
    %21 = vector.load %arg4[%c0_14, %c0_15, %c0_16] : memref<3x1x512xf32, #tpu.memory_space<vmem>>, vector<1x1x512xf32>
    %22 = vector.shape_cast %21 : vector<1x1x512xf32> to vector<1x512xf32>
    %23 = vector.broadcast %22 : vector<1x512xf32> to vector<8x512xf32>
    %24 = arith.addf %20, %23 : vector<8x512xf32>
    %c0_17 = arith.constant 0 : index
    %c0_18 = arith.constant 0 : index
    %c0_19 = arith.constant 0 : index
    %25 = vector.load %arg5[%c0_17, %c0_18, %c0_19] : memref<3x8x512xf32, #tpu.memory_space<vmem>>, vector<1x8x512xf32>
    %26 = vector.shape_cast %25 : vector<1x8x512xf32> to vector<8x512xf32>
    %27 = vector.shape_cast %24 : vector<8x512xf32> to vector<1x8x512xf32>
    tpu.vector_store %arg5[%c0_17, %c0_18, %c0_19], %27 {strides = array<i32>} : memref<3x8x512xf32, #tpu.memory_space<vmem>>, vector<1x8x512xf32>,
    %c1 = arith.constant 1 : index
    %c0_20 = arith.constant 0 : index
    %c0_21 = arith.constant 0 : index
    %28 = vector.load %arg1[%c1, %c0_20, %c0_21] : memref<3x16x16xf32, #tpu.memory_space<vmem>>, vector<1x16x16xf32>
    %29 = vector.shape_cast %28 : vector<1x16x16xf32> to vector<16x16xf32>
    %cst_22 = arith.constant dense<0.000000e+00> : vector<8x16xf32>
    %30 = tpu.matmul %8, %29, %cst_22 {dimension_numbers = #tpu.dot_dimension_numbers<[1], [0], [0], [1], [0, 0, 1, 1], [], []>} : vector<8x16xf32>, vector<16x16xf32>, vector<8x16xf32> -> vector<8x16xf32>
    %c1_23 = arith.constant 1 : index
    %c0_24 = arith.constant 0 : index
    %c0_25 = arith.constant 0 : index
    %31 = vector.load %arg2[%c1_23, %c0_24, %c0_25] : memref<3x1x16xf32, #tpu.memory_space<vmem>>, vector<1x1x16xf32>
    %32 = vector.shape_cast %31 : vector<1x1x16xf32> to vector<1x16xf32>
    %33 = vector.broadcast %32 : vector<1x16xf32> to vector<8x16xf32>
    %34 = arith.addf %30, %33 : vector<8x16xf32>
    %cst_26 = arith.constant 0.000000e+00 : f32
    %35 = vector.broadcast %cst_26 : f32 to vector<8x16xf32>
    %36 = arith.maximumf %34, %35 : vector<8x16xf32>
    %c1_27 = arith.constant 1 : index
    %c0_28 = arith.constant 0 : index
    %c0_29 = arith.constant 0 : index
    %37 = vector.load %arg3[%c1_27, %c0_28, %c0_29] : memref<3x16x512xf32, #tpu.memory_space<vmem>>, vector<1x16x512xf32>
    %38 = vector.shape_cast %37 : vector<1x16x512xf32> to vector<16x512xf32>
    %cst_30 = arith.constant dense<0.000000e+00> : vector<8x512xf32>
    %39 = tpu.matmul %36, %38, %cst_30 {dimension_numbers = #tpu.dot_dimension_numbers<[1], [0], [0], [1], [0, 0, 1, 1], [], []>} : vector<8x16xf32>, vector<16x512xf32>, vector<8x512xf32> -> vector<8x512xf32>
    %c1_31 = arith.constant 1 : index
    %c0_32 = arith.constant 0 : index
    %c0_33 = arith.constant 0 : index
    %40 = vector.load %arg4[%c1_31, %c0_32, %c0_33] : memref<3x1x512xf32, #tpu.memory_space<vmem>>, vector<1x1x512xf32>
    %41 = vector.shape_cast %40 : vector<1x1x512xf32> to vector<1x512xf32>
    %42 = vector.broadcast %41 : vector<1x512xf32> to vector<8x512xf32>
    %43 = arith.addf %39, %42 : vector<8x512xf32>
    %c1_34 = arith.constant 1 : index
    %c0_35 = arith.constant 0 : index
    %c0_36 = arith.constant 0 : index
    %44 = vector.load %arg5[%c1_34, %c0_35, %c0_36] : memref<3x8x512xf32, #tpu.memory_space<vmem>>, vector<1x8x512xf32>
    %45 = vector.shape_cast %44 : vector<1x8x512xf32> to vector<8x512xf32>
    %46 = vector.shape_cast %43 : vector<8x512xf32> to vector<1x8x512xf32>
    tpu.vector_store %arg5[%c1_34, %c0_35, %c0_36], %46 {strides = array<i32>} : memref<3x8x512xf32, #tpu.memory_space<vmem>>, vector<1x8x512xf32>,
    %c2 = arith.constant 2 : index
    %c0_37 = arith.constant 0 : index
    %c0_38 = arith.constant 0 : index
    %47 = vector.load %arg1[%c2, %c0_37, %c0_38] : memref<3x16x16xf32, #tpu.memory_space<vmem>>, vector<1x16x16xf32>
    %48 = vector.shape_cast %47 : vector<1x16x16xf32> to vector<16x16xf32>
    %cst_39 = arith.constant dense<0.000000e+00> : vector<8x16xf32>
    %49 = tpu.matmul %8, %48, %cst_39 {dimension_numbers = #tpu.dot_dimension_numbers<[1], [0], [0], [1], [0, 0, 1, 1], [], []>} : vector<8x16xf32>, vector<16x16xf32>, vector<8x16xf32> -> vector<8x16xf32>
    %c2_40 = arith.constant 2 : index
    %c0_41 = arith.constant 0 : index
    %c0_42 = arith.constant 0 : index
    %50 = vector.load %arg2[%c2_40, %c0_41, %c0_42] : memref<3x1x16xf32, #tpu.memory_space<vmem>>, vector<1x1x16xf32>
    %51 = vector.shape_cast %50 : vector<1x1x16xf32> to vector<1x16xf32>
    %52 = vector.broadcast %51 : vector<1x16xf32> to vector<8x16xf32>
    %53 = arith.addf %49, %52 : vector<8x16xf32>
    %cst_43 = arith.constant 0.000000e+00 : f32
    %54 = vector.broadcast %cst_43 : f32 to vector<8x16xf32>
    %55 = arith.maximumf %53, %54 : vector<8x16xf32>
    %c2_44 = arith.constant 2 : index
    %c0_45 = arith.constant 0 : index
    %c0_46 = arith.constant 0 : index
    %56 = vector.load %arg3[%c2_44, %c0_45, %c0_46] : memref<3x16x512xf32, #tpu.memory_space<vmem>>, vector<1x16x512xf32>
    %57 = vector.shape_cast %56 : vector<1x16x512xf32> to vector<16x512xf32>
    %cst_47 = arith.constant dense<0.000000e+00> : vector<8x512xf32>
    %58 = tpu.matmul %55, %57, %cst_47 {dimension_numbers = #tpu.dot_dimension_numbers<[1], [0], [0], [1], [0, 0, 1, 1], [], []>} : vector<8x16xf32>, vector<16x512xf32>, vector<8x512xf32> -> vector<8x512xf32>
    %c2_48 = arith.constant 2 : index
    %c0_49 = arith.constant 0 : index
    %c0_50 = arith.constant 0 : index
    %59 = vector.load %arg4[%c2_48, %c0_49, %c0_50] : memref<3x1x512xf32, #tpu.memory_space<vmem>>, vector<1x1x512xf32>
    %60 = vector.shape_cast %59 : vector<1x1x512xf32> to vector<1x512xf32>
    %61 = vector.broadcast %60 : vector<1x512xf32> to vector<8x512xf32>
    %62 = arith.addf %58, %61 : vector<8x512xf32>
    %c2_51 = arith.constant 2 : index
    %c0_52 = arith.constant 0 : index
    %c0_53 = arith.constant 0 : index
    %63 = vector.load %arg5[%c2_51, %c0_52, %c0_53] : memref<3x8x512xf32, #tpu.memory_space<vmem>>, vector<1x8x512xf32>
    %64 = vector.shape_cast %63 : vector<1x8x512xf32> to vector<8x512xf32>
    %65 = vector.shape_cast %62 : vector<8x512xf32> to vector<1x8x512xf32>
    tpu.vector_store %arg5[%c2_51, %c0_52, %c0_53], %65 {strides = array<i32>} : memref<3x8x512xf32, #tpu.memory_space<vmem>>, vector<1x8x512xf32>,
    return
  }
}

module attributes {stable_mosaic.version = 11 : i64} {
  func.func @kernel(%arg0: i32, %arg1: i32, %arg2: memref<1x8x512xbf16, #tpu.memory_space<vmem>>, %arg3: memref<1x8x512xbf16, #tpu.memory_space<vmem>>, %arg4: memref<1x512x512xbf16, #tpu.memory_space<vmem>>, %arg5: memref<1x1x512xf32, #tpu.memory_space<vmem>>, %arg6: memref<1x1x512xf32, #tpu.memory_space<vmem>>, %arg7: memref<1x1x8x128xf32, #tpu.memory_space<vmem>>) attributes {dimension_semantics = [#tpu.dimension_semantics<parallel>, #tpu.dimension_semantics<parallel>], iteration_bounds = array<i64: 6, 1>, scalar_prefetch = 0 : i64, scratch_operands = 0 : i64, tpu.core_type = #tpu.core_type<tc>, window_params = [{transform_indices = @transform_0, window_bounds = array<i64: 1, 8, 512>}, {transform_indices = @transform_1, window_bounds = array<i64: 1, 8, 512>}, {transform_indices = @transform_2, window_bounds = array<i64: 1, 512, 512>}, {transform_indices = @transform_3, window_bounds = array<i64: 1, 1, 512>}, {transform_indices = @transform_4, window_bounds = array<i64: 1, 1, 512>}, {transform_indices = @transform_5, window_bounds = array<i64: 1, 1, 8, 128>}]} {
    %c0 = arith.constant 0 : index
    %c0_0 = arith.constant 0 : index
    %c0_1 = arith.constant 0 : index
    %0 = vector.load %arg2[%c0, %c0_0, %c0_1] : memref<1x8x512xbf16, #tpu.memory_space<vmem>>, vector<1x8x512xbf16>
    %1 = vector.shape_cast %0 : vector<1x8x512xbf16> to vector<8x512xbf16>
    %c0_2 = arith.constant 0 : index
    %c0_3 = arith.constant 0 : index
    %c0_4 = arith.constant 0 : index
    %2 = vector.load %arg3[%c0_2, %c0_3, %c0_4] : memref<1x8x512xbf16, #tpu.memory_space<vmem>>, vector<1x8x512xbf16>
    %3 = vector.shape_cast %2 : vector<1x8x512xbf16> to vector<8x512xbf16>
    %4 = vector.shape_cast %1 : vector<8x512xbf16> to vector<1x8x512xbf16>
    %5 = vector.shape_cast %4 : vector<1x8x512xbf16> to vector<1x8x512xbf16>
    %6 = vector.broadcast %5 : vector<1x8x512xbf16> to vector<8x8x512xbf16>
    %7 = vector.shape_cast %3 : vector<8x512xbf16> to vector<8x1x512xbf16>
    %8 = vector.shape_cast %7 : vector<8x1x512xbf16> to vector<8x1x512xbf16>
    %9 = vector.broadcast %8 : vector<8x1x512xbf16> to vector<8x8x512xbf16>
    %10 = arith.addf %6, %9 : vector<8x8x512xbf16>
    %11 = vector.shape_cast %10 : vector<8x8x512xbf16> to vector<64x512xbf16>
    %cst = arith.constant 0.000000e+00 : bf16
    %12 = vector.broadcast %cst : bf16 to vector<64x512xbf16>
    %13 = arith.maximumf %11, %12 : vector<64x512xbf16>
    %c0_5 = arith.constant 0 : index
    %c0_6 = arith.constant 0 : index
    %c0_7 = arith.constant 0 : index
    %14 = vector.load %arg4[%c0_5, %c0_6, %c0_7] : memref<1x512x512xbf16, #tpu.memory_space<vmem>>, vector<1x512x512xbf16>
    %15 = vector.shape_cast %14 : vector<1x512x512xbf16> to vector<512x512xbf16>
    %cst_8 = arith.constant dense<0.000000e+00> : vector<64x512xf32>
    %16 = tpu.matmul %13, %15, %cst_8 {dimension_numbers = #tpu.dot_dimension_numbers<[1], [0], [0], [1], [0, 0, 1, 1], [], []>} : vector<64x512xbf16>, vector<512x512xbf16>, vector<64x512xf32> -> vector<64x512xf32>
    %c0_9 = arith.constant 0 : index
    %c0_10 = arith.constant 0 : index
    %c0_11 = arith.constant 0 : index
    %17 = vector.load %arg5[%c0_9, %c0_10, %c0_11] : memref<1x1x512xf32, #tpu.memory_space<vmem>>, vector<1x1x512xf32>
    %18 = vector.shape_cast %17 : vector<1x1x512xf32> to vector<1x512xf32>
    %19 = vector.broadcast %18 : vector<1x512xf32> to vector<64x512xf32>
    %20 = arith.addf %16, %19 : vector<64x512xf32>
    %cst_12 = arith.constant 0.000000e+00 : f32
    %21 = vector.broadcast %cst_12 : f32 to vector<64x512xf32>
    %22 = arith.maximumf %20, %21 : vector<64x512xf32>
    %c0_13 = arith.constant 0 : index
    %c0_14 = arith.constant 0 : index
    %c0_15 = arith.constant 0 : index
    %23 = vector.load %arg6[%c0_13, %c0_14, %c0_15] : memref<1x1x512xf32, #tpu.memory_space<vmem>>, vector<1x1x512xf32>
    %24 = vector.shape_cast %23 : vector<1x1x512xf32> to vector<1x512xf32>
    %25 = vector.broadcast %24 : vector<1x512xf32> to vector<64x512xf32>
    %26 = arith.mulf %22, %25 : vector<64x512xf32>
    %27 = vector.shape_cast %26 : vector<64x512xf32> to vector<8x8x512xf32>
    %cst_16 = arith.constant dense<0.000000e+00> : vector<8x8xf32>
    %28 = vector.multi_reduction <add>, %27, %cst_16 [2] : vector<8x8x512xf32> to vector<8x8xf32>
    %c8_i32 = arith.constant 8 : i32
    %29 = arith.muli %arg1, %c8_i32 : i32
    %30 = tpu.iota {dimensions = array<i32: 0>} : vector<8x8xi32>
    %31 = vector.broadcast %29 : i32 to vector<8x8xi32>
    %32 = arith.addi %30, %31 : vector<8x8xi32>
    %33 = tpu.iota {dimensions = array<i32: 1>} : vector<8x8xi32>
    %c8_i32_17 = arith.constant 8 : i32
    %34 = vector.broadcast %c8_i32_17 : i32 to vector<8x8xi32>
    %35 = arith.cmpi slt, %33, %34 : vector<8x8xi32>
    %c8_i32_18 = arith.constant 8 : i32
    %36 = vector.broadcast %c8_i32_18 : i32 to vector<8x8xi32>
    %37 = arith.cmpi slt, %32, %36 : vector<8x8xi32>
    %38 = arith.andi %37, %35 : vector<8x8xi1>
    %39 = arith.cmpi eq, %32, %33 : vector<8x8xi32>
    %40 = arith.andi %38, %39 : vector<8x8xi1>
    %cst_19 = arith.constant 0.000000e+00 : f32
    %41 = vector.broadcast %cst_19 : f32 to vector<8x8xf32>
    %42 = arith.select %40, %28, %41 : vector<8x8xi1>, vector<8x8xf32>
    %43 = vector.shape_cast %42 : vector<8x8xf32> to vector<1x8x8xf32>
    %cst_20 = arith.constant dense<0.000000e+00> : vector<1xf32>
    %44 = vector.multi_reduction <add>, %43, %cst_20 [1, 2] : vector<1x8x8xf32> to vector<1xf32>
    %45 = vector.shape_cast %44 : vector<1xf32> to vector<1x1x1xf32>
    %46 = vector.extract %45[0, 0, 0] : f32 from vector<1x1x1xf32>
    %cst_21 = arith.constant -1.000000e+30 : f32
    %47 = vector.broadcast %cst_21 : f32 to vector<8x8xf32>
    %48 = arith.select %35, %28, %47 : vector<8x8xi1>, vector<8x8xf32>
    %cst_22 = arith.constant dense<0xFF800000> : vector<8xf32>
    %49 = vector.multi_reduction <maximumf>, %48, %cst_22 [1] : vector<8x8xf32> to vector<8xf32>
    %50 = vector.shape_cast %49 : vector<8xf32> to vector<8x1xf32>
    %51 = vector.broadcast %50 : vector<8x1xf32> to vector<8x8xf32>
    %52 = arith.subf %48, %51 : vector<8x8xf32>
    %53 = math.exp %52 : vector<8x8xf32>
    %cst_23 = arith.constant dense<0.000000e+00> : vector<8xf32>
    %54 = vector.multi_reduction <add>, %53, %cst_23 [1] : vector<8x8xf32> to vector<8xf32>
    %55 = vector.shape_cast %54 : vector<8xf32> to vector<8x1xf32>
    %56 = math.log %55 : vector<8x1xf32>
    %57 = arith.addf %50, %56 : vector<8x1xf32>
    %58 = vector.extract_strided_slice %32 {offsets = [0, 0], sizes = [8, 1], strides = [1, 1]} : vector<8x8xi32> to vector<8x1xi32>
    %c8_i32_24 = arith.constant 8 : i32
    %59 = vector.broadcast %c8_i32_24 : i32 to vector<8x1xi32>
    %60 = arith.cmpi slt, %58, %59 : vector<8x1xi32>
    %cst_25 = arith.constant 0.000000e+00 : f32
    %61 = vector.broadcast %cst_25 : f32 to vector<8x1xf32>
    %62 = arith.select %60, %57, %61 : vector<8x1xi1>, vector<8x1xf32>
    %63 = vector.shape_cast %62 : vector<8x1xf32> to vector<1x8x1xf32>
    %cst_26 = arith.constant dense<0.000000e+00> : vector<1xf32>
    %64 = vector.multi_reduction <add>, %63, %cst_26 [1, 2] : vector<1x8x1xf32> to vector<1xf32>
    %65 = vector.shape_cast %64 : vector<1xf32> to vector<1x1x1xf32>
    %66 = vector.extract %65[0, 0, 0] : f32 from vector<1x1x1xf32>
    %cst_27 = arith.constant 0.000000e+00 : f32
    %67 = vector.broadcast %cst_27 : f32 to vector<8x8xf32>
    %68 = arith.select %38, %28, %67 : vector<8x8xi1>, vector<8x8xf32>
    %69 = vector.shape_cast %68 : vector<8x8xf32> to vector<1x8x8xf32>
    %cst_28 = arith.constant dense<0.000000e+00> : vector<1xf32>
    %70 = vector.multi_reduction <add>, %69, %cst_28 [1, 2] : vector<1x8x8xf32> to vector<1xf32>
    %71 = vector.shape_cast %70 : vector<1xf32> to vector<1x1x1xf32>
    %72 = vector.extract %71[0, 0, 0] : f32 from vector<1x1x1xf32>
    %73 = tpu.iota {dimensions = array<i32: 0>} : vector<8x128xi32>
    %74 = tpu.iota {dimensions = array<i32: 1>} : vector<8x128xi32>
    %c0_i32 = arith.constant 0 : i32
    %75 = vector.broadcast %c0_i32 : i32 to vector<8x128xi32>
    %76 = arith.cmpi eq, %73, %75 : vector<8x128xi32>
    %c0_i32_29 = arith.constant 0 : i32
    %77 = vector.broadcast %c0_i32_29 : i32 to vector<8x128xi32>
    %78 = arith.cmpi eq, %74, %77 : vector<8x128xi32>
    %79 = arith.andi %76, %78 : vector<8x128xi1>
    %cst_30 = arith.constant 0.000000e+00 : f32
    %80 = vector.broadcast %46 : f32 to vector<8x128xf32>
    %81 = vector.broadcast %cst_30 : f32 to vector<8x128xf32>
    %82 = arith.select %79, %80, %81 : vector<8x128xi1>, vector<8x128xf32>
    %c0_i32_31 = arith.constant 0 : i32
    %83 = vector.broadcast %c0_i32_31 : i32 to vector<8x128xi32>
    %84 = arith.cmpi eq, %73, %83 : vector<8x128xi32>
    %c1_i32 = arith.constant 1 : i32
    %85 = vector.broadcast %c1_i32 : i32 to vector<8x128xi32>
    %86 = arith.cmpi eq, %74, %85 : vector<8x128xi32>
    %87 = arith.andi %84, %86 : vector<8x128xi1>
    %cst_32 = arith.constant 0.000000e+00 : f32
    %88 = vector.broadcast %66 : f32 to vector<8x128xf32>
    %89 = vector.broadcast %cst_32 : f32 to vector<8x128xf32>
    %90 = arith.select %87, %88, %89 : vector<8x128xi1>, vector<8x128xf32>
    %91 = arith.addf %82, %90 : vector<8x128xf32>
    %c0_i32_33 = arith.constant 0 : i32
    %92 = vector.broadcast %c0_i32_33 : i32 to vector<8x128xi32>
    %93 = arith.cmpi eq, %73, %92 : vector<8x128xi32>
    %c2_i32 = arith.constant 2 : i32
    %94 = vector.broadcast %c2_i32 : i32 to vector<8x128xi32>
    %95 = arith.cmpi eq, %74, %94 : vector<8x128xi32>
    %96 = arith.andi %93, %95 : vector<8x128xi1>
    %cst_34 = arith.constant 0.000000e+00 : f32
    %97 = vector.broadcast %72 : f32 to vector<8x128xf32>
    %98 = vector.broadcast %cst_34 : f32 to vector<8x128xf32>
    %99 = arith.select %96, %97, %98 : vector<8x128xi1>, vector<8x128xf32>
    %100 = arith.addf %91, %99 : vector<8x128xf32>
    %c0_35 = arith.constant 0 : index
    %c0_36 = arith.constant 0 : index
    %c0_37 = arith.constant 0 : index
    %c0_38 = arith.constant 0 : index
    %101 = vector.load %arg7[%c0_35, %c0_36, %c0_37, %c0_38] : memref<1x1x8x128xf32, #tpu.memory_space<vmem>>, vector<1x1x8x128xf32>
    %102 = vector.shape_cast %101 : vector<1x1x8x128xf32> to vector<8x128xf32>
    %103 = vector.shape_cast %100 : vector<8x128xf32> to vector<1x1x8x128xf32>
    tpu.vector_store %arg7[%c0_35, %c0_36, %c0_37, %c0_38], %103 {strides = array<i32>} : memref<1x1x8x128xf32, #tpu.memory_space<vmem>>, vector<1x1x8x128xf32>,
    return
  }
  func.func @transform_0(%arg0: i32, %arg1: i32) -> (i32, i32, i32) {
    %c0_i32 = arith.constant 0 : i32
    %c0_i32_0 = arith.constant 0 : i32
    %c0_i32_1 = arith.constant 0 : i32
    return %arg0, %c0_i32, %c0_i32_0 : i32, i32, i32
  }
  func.func @transform_1(%arg0: i32, %arg1: i32) -> (i32, i32, i32) {
    %c0_i32 = arith.constant 0 : i32
    %c0_i32_0 = arith.constant 0 : i32
    return %arg0, %arg1, %c0_i32 : i32, i32, i32
  }
  func.func @transform_2(%arg0: i32, %arg1: i32) -> (i32, i32, i32) {
    %c0_i32 = arith.constant 0 : i32
    %c0_i32_0 = arith.constant 0 : i32
    %c0_i32_1 = arith.constant 0 : i32
    return %arg0, %c0_i32, %c0_i32_0 : i32, i32, i32
  }
  func.func @transform_3(%arg0: i32, %arg1: i32) -> (i32, i32, i32) {
    %c0_i32 = arith.constant 0 : i32
    %c0_i32_0 = arith.constant 0 : i32
    %c0_i32_1 = arith.constant 0 : i32
    return %arg0, %c0_i32, %c0_i32_0 : i32, i32, i32
  }
  func.func @transform_4(%arg0: i32, %arg1: i32) -> (i32, i32, i32) {
    %c0_i32 = arith.constant 0 : i32
    %c0_i32_0 = arith.constant 0 : i32
    %c0_i32_1 = arith.constant 0 : i32
    return %arg0, %c0_i32, %c0_i32_0 : i32, i32, i32
  }
  func.func @transform_5(%arg0: i32, %arg1: i32) -> (i32, i32, i32, i32) {
    %c0_i32 = arith.constant 0 : i32
    %c0_i32_0 = arith.constant 0 : i32
    %c0_i32_1 = arith.constant 0 : i32
    return %arg0, %arg1, %c0_i32, %c0_i32_0 : i32, i32, i32, i32
  }
}

</mosaic_0001>

<llo_original>
// kernel: factorcl_forward.7
$region0: #{factorcl_forward.7}
  #allocation0 [shape = 'u32[]', space=smem, size = 0x4, offset = 0x4, fixed_abs, tag = 'smem constant byte address 0x4 - core index']
  #allocation1 [shape = 'u32[72,128]{1,0:T(1,128)}', space=vmem, size = 0x9000, scoped, tag = 'internal scratch']
  %s0 = inlined_call_operand.hbm [shape: f32[8,32], index: 0, kind: input, shape index: {}]
  %s1 = inlined_call_operand.hbm [shape: f32[3,32,32], index: 1, kind: input, shape index: {}]
  %s2 = inlined_call_operand.hbm [shape: f32[3,1,32], index: 2, kind: input, shape index: {}]
  %s3 = inlined_call_operand.hbm [shape: f32[3,32,512], index: 3, kind: input, shape index: {}]
  %s4 = inlined_call_operand.hbm [shape: f32[3,1,512], index: 4, kind: input, shape index: {}]
  %s5 = inlined_call_operand.vmem [shape: f32[3,8,512], index: 5, kind: output, shape index: {}]
  %s6 = sld [smem:[#allocation0]]
  $region50: #{factorcl_forward.7} parent=0
    _
  %s8 = ssub.s32 1, %s6
  %s9 = scalar_select 0, %s8, %s6
  $region1: #{factorcl_forward.7} parent=0
    #allocation2 [shape = 'u8[4096]{0}', space=vmem, size = 0x1000, scoped, tag = 'input window, operand 0, single buffered']
    #allocation3 [shape = 's32[1]{0}', space=sflag, size = 0x4, scoped, tag = 'scoped memory for factorcl_forward.7']
    #allocation4 [shape = 'u8[49152]{0}', space=vmem, size = 0xc000, scoped, tag = 'input window, operand 1, single buffered']
    #allocation5 [shape = 's32[1]{0}', space=sflag, size = 0x4, scoped, tag = 'scoped memory for factorcl_forward.7']
    #allocation6 [shape = 'u8[1536]{0}', space=vmem, size = 0x800, scoped, tag = 'input window, operand 2, single buffered']
    #allocation7 [shape = 'u8[196608]{0}', space=vmem, size = 0x30000, scoped, tag = 'input window, operand 3, single buffered']
    #allocation8 [shape = 's32[1]{0}', space=sflag, size = 0x4, scoped, tag = 'scoped memory for factorcl_forward.7']
    #allocation9 [shape = 'u8[6144]{0}', space=vmem, size = 0x1800, scoped, tag = 'input window, operand 4, single buffered']
    %10 = vsyncpa [#allocation3], 0
    %11 = vsyncpa [#allocation5], 0
    %12 = vsyncpa [#allocation8], 0
    // Predicated region
    $region2: #{factorcl_forward.7} parent=1 // pred_check
      _
    $region3: #{factorcl_forward.7} parent=1 // pred_check_branch
      %14 = sbr.rel (0) target = $region5
    $region4: #{factorcl_forward.7} parent=1 // pred_region
      %16 = vsyncadd [#allocation3], 0
      %s18 = sshll.u32 %s0, 4
      %s19 = int_to_ptr.hbm [resolvable:$true] %s18
      %s20 = sshll.u32 [#allocation2], 4
      %s21 = int_to_ptr.vmem [resolvable:$true] %s20
      %23 = dma.hbm_to_vmem [thread:$0]  %s19, 128, %s21, [#allocation3]
    $region5: #{factorcl_forward.7} parent=1 // pred_fallthru
      _
    // Predicated region
    $region6: #{factorcl_forward.7} parent=1 // pred_check
      _
    $region7: #{factorcl_forward.7} parent=1 // pred_check_branch
      %25 = sbr.rel (0) target = $region9
    $region8: #{factorcl_forward.7} parent=1 // pred_region
      %27 = vsyncadd [#allocation5], 0
      %s28 = sshll.u32 %s1, 4
      %s29 = int_to_ptr.hbm [resolvable:$true] %s28
      %s30 = sshll.u32 [#allocation4], 4
      %s31 = int_to_ptr.vmem [resolvable:$true] %s30
      %36 = dma.hbm_to_vmem [thread:$0]  %s29, 1536, %s31, [#allocation5], 128, 128, 8
    $region9: #{factorcl_forward.7} parent=1 // pred_fallthru
      _
    // Predicated region
    $region10: #{factorcl_forward.7} parent=1 // pred_check
      _
    $region11: #{factorcl_forward.7} parent=1 // pred_check_branch
      %38 = sbr.rel (0) target = $region13
    $region12: #{factorcl_forward.7} parent=1 // pred_region
      %40 = vsyncadd [#allocation5], 0
      %s41 = sshll.u32 %s2, 4
      %s42 = int_to_ptr.hbm [resolvable:$true] %s41
      %s43 = sshll.u32 [#allocation6], 4
      %s44 = int_to_ptr.vmem [resolvable:$true] %s43
      %49 = dma.hbm_to_vmem [thread:$0]  %s42, 48, %s44, [#allocation5], 16, 16, 1
    $region13: #{factorcl_forward.7} parent=1 // pred_fallthru
      _
    // Predicated region
    $region14: #{factorcl_forward.7} parent=1 // pred_check
      _
    $region15: #{factorcl_forward.7} parent=1 // pred_check_branch
      %51 = sbr.rel (0) target = $region17
    $region16: #{factorcl_forward.7} parent=1 // pred_region
      %53 = vsyncadd [#allocation8], 0
      %s54 = sshll.u32 %s3, 4
      %s55 = int_to_ptr.hbm [resolvable:$true] %s54
      %s56 = sshll.u32 [#allocation7], 4
      %s57 = int_to_ptr.vmem [resolvable:$true] %s56
      %62 = dma.hbm_to_vmem [thread:$0]  %s55, 6144, %s57, [#allocation8], 512, 512, 32
    $region17: #{factorcl_forward.7} parent=1 // pred_fallthru
      _
    // Predicated region
    $region18: #{factorcl_forward.7} parent=1 // pred_check
      _
    $region19: #{factorcl_forward.7} parent=1 // pred_check_branch
      %64 = sbr.rel (0) target = $region21
    $region20: #{factorcl_forward.7} parent=1 // pred_region
      %66 = vsyncadd [#allocation8], 0
      %s67 = sshll.u32 %s4, 4
      %s68 = int_to_ptr.hbm [resolvable:$true] %s67
      %s69 = sshll.u32 [#allocation9], 4
      %s70 = int_to_ptr.vmem [resolvable:$true] %s69
      %75 = dma.hbm_to_vmem [thread:$0]  %s68, 192, %s70, [#allocation8], 64, 64, 4
    $region21: #{factorcl_forward.7} parent=1 // pred_fallthru
      _
    // Predicated region
    $region22: #{factorcl_forward.7} parent=1 // pred_check
      _
    $region23: #{factorcl_forward.7} parent=1 // pred_check_branch
      %77 = sbr.rel (0) target = $region25
    $region24: #{factorcl_forward.7} parent=1 // pred_region
      %79 = dma.done [#allocation3], 128
    $region25: #{factorcl_forward.7} parent=1 // pred_fallthru
      _
    // Predicated region
    $region26: #{factorcl_forward.7} parent=1 // pred_check
      _
    $region27: #{factorcl_forward.7} parent=1 // pred_check_branch
      %81 = sbr.rel (0) target = $region29
    $region28: #{factorcl_forward.7} parent=1 // pred_region
      %83 = dma.done [#allocation5], 1536
    $region29: #{factorcl_forward.7} parent=1 // pred_fallthru
      _
    // Predicated region
    $region30: #{factorcl_forward.7} parent=1 // pred_check
      _
    $region31: #{factorcl_forward.7} parent=1 // pred_check_branch
      %85 = sbr.rel (0) target = $region33
    $region32: #{factorcl_forward.7} parent=1 // pred_region
      %87 = dma.done [#allocation5], 48
    $region33: #{factorcl_forward.7} parent=1 // pred_fallthru
      _
    // Predicated region
    $region34: #{factorcl_forward.7} parent=1 // pred_check
      _
    $region35: #{factorcl_forward.7} parent=1 // pred_check_branch
      %89 = sbr.rel (0) target = $region37
    $region36: #{factorcl_forward.7} parent=1 // pred_region
      %91 = dma.done [#allocation8], 6144
    $region37: #{factorcl_forward.7} parent=1 // pred_fallthru
      _
    // Predicated region
    $region38: #{factorcl_forward.7} parent=1 // pred_check
      _
    $region39: #{factorcl_forward.7} parent=1 // pred_check_branch
      %93 = sbr.rel (0) target = $region41
    $region40: #{factorcl_forward.7} parent=1 // pred_region
      %95 = dma.done [#allocation8], 192
    $region41: #{factorcl_forward.7} parent=1 // pred_fallthru
      _
    %v96 = vld [vmem:[#allocation2] sm:$0xff]
    %v97 = vmul.f32 %v96, %v96
    %vm98 = vcmask 261120
    %v99 = vsel %vm98, %v97, 0.0
    %100 = vadd.xlane.f32.xlu0 %v99
    %v101 = vpop.xlane.xlu0 %100
    %v102 = vrsqrt.pop %v101
    %v103 = vmul.f32 %v102, %v101
    %v104 = vmul.f32 %v103, %v102
    %v105 = vmul.f32 0.5, %v104
    %v106 = vsub.f32 1.5, %v105
    %v107 = vmul.f32 %v102, %v106
    %v108 = vmul.f32 %v101, %v107
    %vm109 = vcmp.eq.f32.partialorder %v101, inf
    %v110 = vsel %vm109, %v101, %v108
    %vm111 = vcmp.eq.f32.partialorder %v101, 0.0
    %v112 = vand.u32 %v101, 2147483648
    %v113 = vsel %vm111, %v112, %v110
    %v114 = vmax.f32 %v113, 1e-12
    %v115 = vrcp.pop %v114
    %v116 = vmul.f32 %v114, %v115
    %v117 = vsub.f32 1.0, %v116
    %v118 = vmul.f32 %v115, %v117
    %v119 = vadd.f32 %v115, %v118
    %vm120 = vweird.f32 %v114
    %vm121 = vweird.f32 %v115
    %vm122 = vmor %vm120, %vm121
    %v123 = vsel %vm122, %v115, %v119
    %v124 = vand.u32 2147483647, %v114
    %vm125 = vcmp.eq.f32.partialorder %v124, 8.507059e+37
    %v126 = vand.u32 %v114, 2147483648
    %v127 = vor.u32 1.1754944e-38, %v126
    %v128 = vsel %vm125, %v127, %v123
    %v129 = vmul.f32 %v96, %v128
    %v130 = vld [vmem:[#allocation4] sm:$0xff]
    %v131 = vld [vmem:[#allocation4 + $0x8] sm:$0xff]
    %v132 = vld [vmem:[#allocation4 + $0x10] sm:$0xff]
    %v133 = vld [vmem:[#allocation4 + $0x18] sm:$0xff]
    %v134 = vld [vmem:[#allocation6] sm:$0x1]
    %v136 = vperm.slane %v134, 0
    %v139 = vsel %vm98, %v129, 0
    %141 = vmatpush.msra.mxu0 0.0
    %142 = vmatpush.msra.mxu0 0.0
    %143 = vmatpush.msra.mxu0 0.0
    %144 = vmatpush.msra.mxu0 0.0
    %145 = vmatpush.msra.mxu0 0.0
    %146 = vmatpush.msra.mxu0 0.0
    %147 = vmatpush.msra.mxu0 0.0
    %148 = vmatpush.msra.mxu0 0.0
    %149 = vmatpush.msra.mxu0 0.0
    %150 = vmatpush.msra.mxu0 0.0
    %151 = vmatpush.msra.mxu0 0.0
    %152 = vmatpush.msra.mxu0 0.0
    %153 = vmatpush.msra.mxu0 %v133
    %154 = vmatpush.msra.mxu0 %v132
    %155 = vmatpush.msra.mxu0 %v131
    %156 = vmatpush.msra.mxu0 %v130
    %157 = vmatmul.f32.gmra.mxu0 %v139
    %v158 = vpop.f32.mrf.mxu0
    %v159 = vadd.f32 %v136, %v158
    %160 = vdwg.mxu0
    %v161 = vmax.f32 %v159, 0.0
    %v162 = vld [vmem:[#allocation7] sm:$0xff]
    %v163 = vld [vmem:[#allocation7 + $0x8] sm:$0xff]
    %v164 = vld [vmem:[#allocation7 + $0x10] sm:$0xff]
    %v165 = vld [vmem:[#allocation7 + $0x18] sm:$0xff]
    %v166 = vld [vmem:[#allocation7 + $0x20] sm:$0xff]
    %v167 = vld [vmem:[#allocation7 + $0x28] sm:$0xff]
    %v168 = vld [vmem:[#allocation7 + $0x30] sm:$0xff]
    %v169 = vld [vmem:[#allocation7 + $0x38] sm:$0xff]
    %v170 = vld [vmem:[#allocation7 + $0x40] sm:$0xff]
    %v171 = vld [vmem:[#allocation7 + $0x48] sm:$0xff]
    %v172 = vld [vmem:[#allocation7 + $0x50] sm:$0xff]
    %v173 = vld [vmem:[#allocation7 + $0x58] sm:$0xff]
    %v174 = vld [vmem:[#allocation7 + $0x60] sm:$0xff]
    %v175 = vld [vmem:[#allocation7 + $0x68] sm:$0xff]
    %v176 = vld [vmem:[#allocation7 + $0x70] sm:$0xff]
    %v177 = vld [vmem:[#allocation7 + $0x78] sm:$0xff]
    %v178 = vld [vmem:[#allocation9] sm:$0xf]
    %v180 = vperm.slane %v178, 0
    %v181 = vperm.slane %v178, 1
    %v182 = vperm.slane %v178, 2
    %v183 = vperm.slane %v178, 3
    %v189 = vsel %vm98, %v161, 0
    %191 = vmatpush.msra.mxu0 0.0
    %192 = vmatpush.msra.mxu0 0.0
    %193 = vmatpush.msra.mxu0 0.0
    %194 = vmatpush.msra.mxu0 0.0
    %195 = vmatpush.msra.mxu0 0.0
    %196 = vmatpush.msra.mxu0 0.0
    %197 = vmatpush.msra.mxu0 0.0
    %198 = vmatpush.msra.mxu0 0.0
    %199 = vmatpush.msra.mxu0 0.0
    %200 = vmatpush.msra.mxu0 0.0
    %201 = vmatpush.msra.mxu0 0.0
    %202 = vmatpush.msra.mxu0 0.0
    %203 = vmatpush.msra.mxu0 %v174
    %204 = vmatpush.msra.mxu0 %v170
    %205 = vmatpush.msra.mxu0 %v166
    %206 = vmatpush.msra.mxu0 %v162
    %207 = vmatmul.f32.gmra.mxu0 %v189
    %v208 = vpop.f32.mrf.mxu0
    %v209 = vadd.f32 %v180, %v208
    %210 = vdwg.mxu0
    %211 = vmatpush.msra.mxu0 0.0
    %212 = vmatpush.msra.mxu0 0.0
    %213 = vmatpush.msra.mxu0 0.0
    %214 = vmatpush.msra.mxu0 0.0
    %215 = vmatpush.msra.mxu0 0.0
    %216 = vmatpush.msra.mxu0 0.0
    %217 = vmatpush.msra.mxu0 0.0
    %218 = vmatpush.msra.mxu0 0.0
    %219 = vmatpush.msra.mxu0 0.0
    %220 = vmatpush.msra.mxu0 0.0
    %221 = vmatpush.msra.mxu0 0.0
    %222 = vmatpush.msra.mxu0 0.0
    %223 = vmatpush.msra.mxu0 %v175
    %224 = vmatpush.msra.mxu0 %v171
    %225 = vmatpush.msra.mxu0 %v167
    %226 = vmatpush.msra.mxu0 %v163
    %227 = vmatmul.f32.gmra.mxu0 %v189
    %v228 = vpop.f32.mrf.mxu0
    %v229 = vadd.f32 %v181, %v228
    %230 = vdwg.mxu0
    %231 = vmatpush.msra.mxu0 0.0
    %232 = vmatpush.msra.mxu0 0.0
    %233 = vmatpush.msra.mxu0 0.0
    %234 = vmatpush.msra.mxu0 0.0
    %235 = vmatpush.msra.mxu0 0.0
    %236 = vmatpush.msra.mxu0 0.0
    %237 = vmatpush.msra.mxu0 0.0
    %238 = vmatpush.msra.mxu0 0.0
    %239 = vmatpush.msra.mxu0 0.0
    %240 = vmatpush.msra.mxu0 0.0
    %241 = vmatpush.msra.mxu0 0.0
    %242 = vmatpush.msra.mxu0 0.0
    %243 = vmatpush.msra.mxu0 %v176
    %244 = vmatpush.msra.mxu0 %v172
    %245 = vmatpush.msra.mxu0 %v168
    %246 = vmatpush.msra.mxu0 %v164
    %247 = vmatmul.f32.gmra.mxu0 %v189
    %v248 = vpop.f32.mrf.mxu0
    %v249 = vadd.f32 %v182, %v248
    %250 = vdwg.mxu0
    %251 = vmatpush.msra.mxu0 0.0
    %252 = vmatpush.msra.mxu0 0.0
    %253 = vmatpush.msra.mxu0 0.0
    %254 = vmatpush.msra.mxu0 0.0
    %255 = vmatpush.msra.mxu0 0.0
    %256 = vmatpush.msra.mxu0 0.0
    %257 = vmatpush.msra.mxu0 0.0
    %258 = vmatpush.msra.mxu0 0.0
    %259 = vmatpush.msra.mxu0 0.0
    %260 = vmatpush.msra.mxu0 0.0
    %261 = vmatpush.msra.mxu0 0.0
    %262 = vmatpush.msra.mxu0 0.0
    %263 = vmatpush.msra.mxu0 %v177
    %264 = vmatpush.msra.mxu0 %v173
    %265 = vmatpush.msra.mxu0 %v169
    %266 = vmatpush.msra.mxu0 %v165
    %267 = vmatmul.f32.gmra.mxu0 %v189
    %v268 = vpop.f32.mrf.mxu0
    %v269 = vadd.f32 %v183, %v268
    %270 = vdwg.mxu0
    %271 = vst [vmem:[%s5] sm:$0xff] %v209
    %272 = vst [vmem:[%s5 + $0x8] sm:$0xff] %v229
    %273 = vst [vmem:[%s5 + $0x10] sm:$0xff] %v249
    %274 = vst [vmem:[%s5 + $0x18] sm:$0xff] %v269
    %s275 = scalar_lea.vmem [#allocation4], 32
    %v276 = vld [vmem:[%s275] sm:$0xff]
    %v277 = vld [vmem:[%s275 + $0x8] sm:$0xff]
    %v278 = vld [vmem:[%s275 + $0x10] sm:$0xff]
    %v279 = vld [vmem:[%s275 + $0x18] sm:$0xff]
    %s280 = scalar_lea.vmem [#allocation6], 1
    %v281 = vld [vmem:[%s280] sm:$0x1]
    %v283 = vperm.slane %v281, 0
    %285 = vmatpush.msra.mxu0 0.0
    %286 = vmatpush.msra.mxu0 0.0
    %287 = vmatpush.msra.mxu0 0.0
    %288 = vmatpush.msra.mxu0 0.0
    %289 = vmatpush.msra.mxu0 0.0
    %290 = vmatpush.msra.mxu0 0.0
    %291 = vmatpush.msra.mxu0 0.0
    %292 = vmatpush.msra.mxu0 0.0
    %293 = vmatpush.msra.mxu0 0.0
    %294 = vmatpush.msra.mxu0 0.0
    %295 = vmatpush.msra.mxu0 0.0
    %296 = vmatpush.msra.mxu0 0.0
    %297 = vmatpush.msra.mxu0 %v279
    %298 = vmatpush.msra.mxu0 %v278
    %299 = vmatpush.msra.mxu0 %v277
    %300 = vmatpush.msra.mxu0 %v276
    %301 = vmatmul.f32.gmra.mxu0 %v139
    %v302 = vpop.f32.mrf.mxu0
    %v303 = vadd.f32 %v283, %v302
    %304 = vdwg.mxu0
    %v305 = vmax.f32 %v303, 0.0
    %s306 = scalar_lea.vmem [#allocation7], 128
    %v307 = vld [vmem:[%s306] sm:$0xff]
    %v308 = vld [vmem:[%s306 + $0x8] sm:$0xff]
    %v309 = vld [vmem:[%s306 + $0x10] sm:$0xff]
    %v310 = vld [vmem:[%s306 + $0x18] sm:$0xff]
    %v311 = vld [vmem:[%s306 + $0x20] sm:$0xff]
    %v312 = vld [vmem:[%s306 + $0x28] sm:$0xff]
    %v313 = vld [vmem:[%s306 + $0x30] sm:$0xff]
    %v314 = vld [vmem:[%s306 + $0x38] sm:$0xff]
    %v315 = vld [vmem:[%s306 + $0x40] sm:$0xff]
    %v316 = vld [vmem:[%s306 + $0x48] sm:$0xff]
    %v317 = vld [vmem:[%s306 + $0x50] sm:$0xff]
    %v318 = vld [vmem:[%s306 + $0x58] sm:$0xff]
    %v319 = vld [vmem:[%s306 + $0x60] sm:$0xff]
    %v320 = vld [vmem:[%s306 + $0x68] sm:$0xff]
    %v321 = vld [vmem:[%s306 + $0x70] sm:$0xff]
    %v322 = vld [vmem:[%s306 + $0x78] sm:$0xff]
    %s323 = scalar_lea.vmem [#allocation9], 4
    %v324 = vld [vmem:[%s323] sm:$0xf]
    %v326 = vperm.slane %v324, 0
    %v327 = vperm.slane %v324, 1
    %v328 = vperm.slane %v324, 2
    %v329 = vperm.slane %v324, 3
    %v335 = vsel %vm98, %v305, 0
    %337 = vmatpush.msra.mxu0 0.0
    %338 = vmatpush.msra.mxu0 0.0
    %339 = vmatpush.msra.mxu0 0.0
    %340 = vmatpush.msra.mxu0 0.0
    %341 = vmatpush.msra.mxu0 0.0
    %342 = vmatpush.msra.mxu0 0.0
    %343 = vmatpush.msra.mxu0 0.0
    %344 = vmatpush.msra.mxu0 0.0
    %345 = vmatpush.msra.mxu0 0.0
    %346 = vmatpush.msra.mxu0 0.0
    %347 = vmatpush.msra.mxu0 0.0
    %348 = vmatpush.msra.mxu0 0.0
    %349 = vmatpush.msra.mxu0 %v319
    %350 = vmatpush.msra.mxu0 %v315
    %351 = vmatpush.msra.mxu0 %v311
    %352 = vmatpush.msra.mxu0 %v307
    %353 = vmatmul.f32.gmra.mxu0 %v335
    %v354 = vpop.f32.mrf.mxu0
    %v355 = vadd.f32 %v326, %v354
    %356 = vdwg.mxu0
    %357 = vmatpush.msra.mxu0 0.0
    %358 = vmatpush.msra.mxu0 0.0
    %359 = vmatpush.msra.mxu0 0.0
    %360 = vmatpush.msra.mxu0 0.0
    %361 = vmatpush.msra.mxu0 0.0
    %362 = vmatpush.msra.mxu0 0.0
    %363 = vmatpush.msra.mxu0 0.0
    %364 = vmatpush.msra.mxu0 0.0
    %365 = vmatpush.msra.mxu0 0.0
    %366 = vmatpush.msra.mxu0 0.0
    %367 = vmatpush.msra.mxu0 0.0
    %368 = vmatpush.msra.mxu0 0.0
    %369 = vmatpush.msra.mxu0 %v320
    %370 = vmatpush.msra.mxu0 %v316
    %371 = vmatpush.msra.mxu0 %v312
    %372 = vmatpush.msra.mxu0 %v308
    %373 = vmatmul.f32.gmra.mxu0 %v335
    %v374 = vpop.f32.mrf.mxu0
    %v375 = vadd.f32 %v327, %v374
    %376 = vdwg.mxu0
    %377 = vmatpush.msra.mxu0 0.0
    %378 = vmatpush.msra.mxu0 0.0
    %379 = vmatpush.msra.mxu0 0.0
    %380 = vmatpush.msra.mxu0 0.0
    %381 = vmatpush.msra.mxu0 0.0
    %382 = vmatpush.msra.mxu0 0.0
    %383 = vmatpush.msra.mxu0 0.0
    %384 = vmatpush.msra.mxu0 0.0
    %385 = vmatpush.msra.mxu0 0.0
    %386 = vmatpush.msra.mxu0 0.0
    %387 = vmatpush.msra.mxu0 0.0
    %388 = vmatpush.msra.mxu0 0.0
    %389 = vmatpush.msra.mxu0 %v321
    %390 = vmatpush.msra.mxu0 %v317
    %391 = vmatpush.msra.mxu0 %v313
    %392 = vmatpush.msra.mxu0 %v309
    %393 = vmatmul.f32.gmra.mxu0 %v335
    %v394 = vpop.f32.mrf.mxu0
    %v395 = vadd.f32 %v328, %v394
    %396 = vdwg.mxu0
    %397 = vmatpush.msra.mxu0 0.0
    %398 = vmatpush.msra.mxu0 0.0
    %399 = vmatpush.msra.mxu0 0.0
    %400 = vmatpush.msra.mxu0 0.0
    %401 = vmatpush.msra.mxu0 0.0
    %402 = vmatpush.msra.mxu0 0.0
    %403 = vmatpush.msra.mxu0 0.0
    %404 = vmatpush.msra.mxu0 0.0
    %405 = vmatpush.msra.mxu0 0.0
    %406 = vmatpush.msra.mxu0 0.0
    %407 = vmatpush.msra.mxu0 0.0
    %408 = vmatpush.msra.mxu0 0.0
    %409 = vmatpush.msra.mxu0 %v322
    %410 = vmatpush.msra.mxu0 %v318
    %411 = vmatpush.msra.mxu0 %v314
    %412 = vmatpush.msra.mxu0 %v310
    %413 = vmatmul.f32.gmra.mxu0 %v335
    %v414 = vpop.f32.mrf.mxu0
    %v415 = vadd.f32 %v329, %v414
    %416 = vdwg.mxu0
    %s417 = scalar_lea.vmem %s5, 32
    %418 = vst [vmem:[%s417] sm:$0xff] %v355
    %419 = vst [vmem:[%s417 + $0x8] sm:$0xff] %v375
    %420 = vst [vmem:[%s417 + $0x10] sm:$0xff] %v395
    %421 = vst [vmem:[%s417 + $0x18] sm:$0xff] %v415
    %s422 = scalar_lea.vmem [#allocation4], 64
    %v423 = vld [vmem:[%s422] sm:$0xff]
    %v424 = vld [vmem:[%s422 + $0x8] sm:$0xff]
    %v425 = vld [vmem:[%s422 + $0x10] sm:$0xff]
    %v426 = vld [vmem:[%s422 + $0x18] sm:$0xff]
    %s427 = scalar_lea.vmem [#allocation6], 2
    %v428 = vld [vmem:[%s427] sm:$0x1]
    %v430 = vperm.slane %v428, 0
    %432 = vmatpush.msra.mxu0 0.0
    %433 = vmatpush.msra.mxu0 0.0
    %434 = vmatpush.msra.mxu0 0.0
    %435 = vmatpush.msra.mxu0 0.0
    %436 = vmatpush.msra.mxu0 0.0
    %437 = vmatpush.msra.mxu0 0.0
    %438 = vmatpush.msra.mxu0 0.0
    %439 = vmatpush.msra.mxu0 0.0
    %440 = vmatpush.msra.mxu0 0.0
    %441 = vmatpush.msra.mxu0 0.0
    %442 = vmatpush.msra.mxu0 0.0
    %443 = vmatpush.msra.mxu0 0.0
    %444 = vmatpush.msra.mxu0 %v426
    %445 = vmatpush.msra.mxu0 %v425
    %446 = vmatpush.msra.mxu0 %v424
    %447 = vmatpush.msra.mxu0 %v423
    %448 = vmatmul.f32.gmra.mxu0 %v139
    %v449 = vpop.f32.mrf.mxu0
    %v450 = vadd.f32 %v430, %v449
    %451 = vdwg.mxu0
    %v452 = vmax.f32 %v450, 0.0
    %s453 = scalar_lea.vmem [#allocation7], 256
    %v454 = vld [vmem:[%s453] sm:$0xff]
    %v455 = vld [vmem:[%s453 + $0x8] sm:$0xff]
    %v456 = vld [vmem:[%s453 + $0x10] sm:$0xff]
    %v457 = vld [vmem:[%s453 + $0x18] sm:$0xff]
    %v458 = vld [vmem:[%s453 + $0x20] sm:$0xff]
    %v459 = vld [vmem:[%s453 + $0x28] sm:$0xff]
    %v460 = vld [vmem:[%s453 + $0x30] sm:$0xff]
    %v461 = vld [vmem:[%s453 + $0x38] sm:$0xff]
    %v462 = vld [vmem:[%s453 + $0x40] sm:$0xff]
    %v463 = vld [vmem:[%s453 + $0x48] sm:$0xff]
    %v464 = vld [vmem:[%s453 + $0x50] sm:$0xff]
    %v465 = vld [vmem:[%s453 + $0x58] sm:$0xff]
    %v466 = vld [vmem:[%s453 + $0x60] sm:$0xff]
    %v467 = vld [vmem:[%s453 + $0x68] sm:$0xff]
    %v468 = vld [vmem:[%s453 + $0x70] sm:$0xff]
    %v469 = vld [vmem:[%s453 + $0x78] sm:$0xff]
    %s470 = scalar_lea.vmem [#allocation9], 8
    %v471 = vld [vmem:[%s470] sm:$0xf]
    %v473 = vperm.slane %v471, 0
    %v474 = vperm.slane %v471, 1
    %v475 = vperm.slane %v471, 2
    %v476 = vperm.slane %v471, 3
    %v482 = vsel %vm98, %v452, 0
    %484 = vmatpush.msra.mxu0 0.0
    %485 = vmatpush.msra.mxu0 0.0
    %486 = vmatpush.msra.mxu0 0.0
    %487 = vmatpush.msra.mxu0 0.0
    %488 = vmatpush.msra.mxu0 0.0
    %489 = vmatpush.msra.mxu0 0.0
    %490 = vmatpush.msra.mxu0 0.0
    %491 = vmatpush.msra.mxu0 0.0
    %492 = vmatpush.msra.mxu0 0.0
    %493 = vmatpush.msra.mxu0 0.0
    %494 = vmatpush.msra.mxu0 0.0
    %495 = vmatpush.msra.mxu0 0.0
    %496 = vmatpush.msra.mxu0 %v466
    %497 = vmatpush.msra.mxu0 %v462
    %498 = vmatpush.msra.mxu0 %v458
    %499 = vmatpush.msra.mxu0 %v454
    %500 = vmatmul.f32.gmra.mxu0 %v482
    %v501 = vpop.f32.mrf.mxu0
    %v502 = vadd.f32 %v473, %v501
    %503 = vdwg.mxu0
    %504 = vmatpush.msra.mxu0 0.0
    %505 = vmatpush.msra.mxu0 0.0
    %506 = vmatpush.msra.mxu0 0.0
    %507 = vmatpush.msra.mxu0 0.0
    %508 = vmatpush.msra.mxu0 0.0
    %509 = vmatpush.msra.mxu0 0.0
    %510 = vmatpush.msra.mxu0 0.0
    %511 = vmatpush.msra.mxu0 0.0
    %512 = vmatpush.msra.mxu0 0.0
    %513 = vmatpush.msra.mxu0 0.0
    %514 = vmatpush.msra.mxu0 0.0
    %515 = vmatpush.msra.mxu0 0.0
    %516 = vmatpush.msra.mxu0 %v467
    %517 = vmatpush.msra.mxu0 %v463
    %518 = vmatpush.msra.mxu0 %v459
    %519 = vmatpush.msra.mxu0 %v455
    %520 = vmatmul.f32.gmra.mxu0 %v482
    %v521 = vpop.f32.mrf.mxu0
    %v522 = vadd.f32 %v474, %v521
    %523 = vdwg.mxu0
    %524 = vmatpush.msra.mxu0 0.0
    %525 = vmatpush.msra.mxu0 0.0
    %526 = vmatpush.msra.mxu0 0.0
    %527 = vmatpush.msra.mxu0 0.0
    %528 = vmatpush.msra.mxu0 0.0
    %529 = vmatpush.msra.mxu0 0.0
    %530 = vmatpush.msra.mxu0 0.0
    %531 = vmatpush.msra.mxu0 0.0
    %532 = vmatpush.msra.mxu0 0.0
    %533 = vmatpush.msra.mxu0 0.0
    %534 = vmatpush.msra.mxu0 0.0
    %535 = vmatpush.msra.mxu0 0.0
    %536 = vmatpush.msra.mxu0 %v468
    %537 = vmatpush.msra.mxu0 %v464
    %538 = vmatpush.msra.mxu0 %v460
    %539 = vmatpush.msra.mxu0 %v456
    %540 = vmatmul.f32.gmra.mxu0 %v482
    %v541 = vpop.f32.mrf.mxu0
    %v542 = vadd.f32 %v475, %v541
    %543 = vdwg.mxu0
    %544 = vmatpush.msra.mxu0 0.0
    %545 = vmatpush.msra.mxu0 0.0
    %546 = vmatpush.msra.mxu0 0.0
    %547 = vmatpush.msra.mxu0 0.0
    %548 = vmatpush.msra.mxu0 0.0
    %549 = vmatpush.msra.mxu0 0.0
    %550 = vmatpush.msra.mxu0 0.0
    %551 = vmatpush.msra.mxu0 0.0
    %552 = vmatpush.msra.mxu0 0.0
    %553 = vmatpush.msra.mxu0 0.0
    %554 = vmatpush.msra.mxu0 0.0
    %555 = vmatpush.msra.mxu0 0.0
    %556 = vmatpush.msra.mxu0 %v469
    %557 = vmatpush.msra.mxu0 %v465
    %558 = vmatpush.msra.mxu0 %v461
    %559 = vmatpush.msra.mxu0 %v457
    %560 = vmatmul.f32.gmra.mxu0 %v482
    %v561 = vpop.f32.mrf.mxu0
    %v562 = vadd.f32 %v476, %v561
    %563 = vdwg.mxu0
    %s564 = scalar_lea.vmem %s5, 64
    %565 = vst [vmem:[%s564] sm:$0xff] %v502
    %566 = vst [vmem:[%s564 + $0x8] sm:$0xff] %v522
    %567 = vst [vmem:[%s564 + $0x10] sm:$0xff] %v542
    %568 = vst [vmem:[%s564 + $0x18] sm:$0xff] %v562
    // Predicated region
    $region42: #{factorcl_forward.7} parent=1 // pred_check
      _
    $region43: #{factorcl_forward.7} parent=1 // pred_check_branch
      %570 = sbr.rel (0) target = $region45
    $region44: #{factorcl_forward.7} parent=1 // pred_region
      _
    $region45: #{factorcl_forward.7} parent=1 // pred_fallthru
      _
    // Predicated region
    $region46: #{factorcl_forward.7} parent=1 // pred_check
      _
    $region47: #{factorcl_forward.7} parent=1 // pred_check_branch
      %572 = sbr.rel (0) target = $region49
    $region48: #{factorcl_forward.7} parent=1 // pred_region
      _
    $region49: #{factorcl_forward.7} parent=1 // pred_fallthru
      _
    %573 = vsyncpa [#allocation3], 1
    %574 = vsyncpa [#allocation5], 1
    %575 = vsyncpa [#allocation8], 1

// kernel: factorcl_forward.8
$region0: #{factorcl_forward.8}
  #allocation0 [shape = 'u32[]', space=smem, size = 0x4, offset = 0x4, fixed_abs, tag = 'smem constant byte address 0x4 - core index']
  #allocation1 [shape = 'u32[72,128]{1,0:T(1,128)}', space=vmem, size = 0x9000, scoped, tag = 'internal scratch']
  %s0 = inlined_call_operand.hbm [shape: f32[8,16], index: 0, kind: input, shape index: {}]
  %s1 = inlined_call_operand.hbm [shape: f32[3,16,16], index: 1, kind: input, shape index: {}]
  %s2 = inlined_call_operand.hbm [shape: f32[3,1,16], index: 2, kind: input, shape index: {}]
  %s3 = inlined_call_operand.hbm [shape: f32[3,16,512], index: 3, kind: input, shape index: {}]
  %s4 = inlined_call_operand.hbm [shape: f32[3,1,512], index: 4, kind: input, shape index: {}]
  %s5 = inlined_call_operand.vmem [shape: f32[3,8,512], index: 5, kind: output, shape index: {}]
  %s6 = sld [smem:[#allocation0]]
  $region50: #{factorcl_forward.8} parent=0
    _
  %s8 = ssub.s32 1, %s6
  %s9 = scalar_select 0, %s8, %s6
  $region1: #{factorcl_forward.8} parent=0
    #allocation2 [shape = 'u8[4096]{0}', space=vmem, size = 0x1000, scoped, tag = 'input window, operand 0, single buffered']
    #allocation3 [shape = 's32[1]{0}', space=sflag, size = 0x4, scoped, tag = 'scoped memory for factorcl_forward.8']
    #allocation4 [shape = 'u8[24576]{0}', space=vmem, size = 0x6000, scoped, tag = 'input window, operand 1, single buffered']
    #allocation5 [shape = 's32[1]{0}', space=sflag, size = 0x4, scoped, tag = 'scoped memory for factorcl_forward.8']
    #allocation6 [shape = 'u8[1536]{0}', space=vmem, size = 0x800, scoped, tag = 'input window, operand 2, single buffered']
    #allocation7 [shape = 'u8[98304]{0}', space=vmem, size = 0x18000, scoped, tag = 'input window, operand 3, single buffered']
    #allocation8 [shape = 's32[1]{0}', space=sflag, size = 0x4, scoped, tag = 'scoped memory for factorcl_forward.8']
    #allocation9 [shape = 'u8[6144]{0}', space=vmem, size = 0x1800, scoped, tag = 'input window, operand 4, single buffered']
    %10 = vsyncpa [#allocation3], 0
    %11 = vsyncpa [#allocation5], 0
    %12 = vsyncpa [#allocation8], 0
    // Predicated region
    $region2: #{factorcl_forward.8} parent=1 // pred_check
      _
    $region3: #{factorcl_forward.8} parent=1 // pred_check_branch
      %14 = sbr.rel (0) target = $region5
    $region4: #{factorcl_forward.8} parent=1 // pred_region
      %16 = vsyncadd [#allocation3], 0
      %s18 = sshll.u32 %s0, 4
      %s19 = int_to_ptr.hbm [resolvable:$true] %s18
      %s20 = sshll.u32 [#allocation2], 4
      %s21 = int_to_ptr.vmem [resolvable:$true] %s20
      %23 = dma.hbm_to_vmem [thread:$0]  %s19, 128, %s21, [#allocation3]
    $region5: #{factorcl_forward.8} parent=1 // pred_fallthru
      _
    // Predicated region
    $region6: #{factorcl_forward.8} parent=1 // pred_check
      _
    $region7: #{factorcl_forward.8} parent=1 // pred_check_branch
      %25 = sbr.rel (0) target = $region9
    $region8: #{factorcl_forward.8} parent=1 // pred_region
      %27 = vsyncadd [#allocation5], 0
      %s28 = sshll.u32 %s1, 4
      %s29 = int_to_ptr.hbm [resolvable:$true] %s28
      %s30 = sshll.u32 [#allocation4], 4
      %s31 = int_to_ptr.vmem [resolvable:$true] %s30
      %36 = dma.hbm_to_vmem [thread:$0]  %s29, 768, %s31, [#allocation5], 128, 128, 8
    $region9: #{factorcl_forward.8} parent=1 // pred_fallthru
      _
    // Predicated region
    $region10: #{factorcl_forward.8} parent=1 // pred_check
      _
    $region11: #{factorcl_forward.8} parent=1 // pred_check_branch
      %38 = sbr.rel (0) target = $region13
    $region12: #{factorcl_forward.8} parent=1 // pred_region
      %40 = vsyncadd [#allocation5], 0
      %s41 = sshll.u32 %s2, 4
      %s42 = int_to_ptr.hbm [resolvable:$true] %s41
      %s43 = sshll.u32 [#allocation6], 4
      %s44 = int_to_ptr.vmem [resolvable:$true] %s43
      %49 = dma.hbm_to_vmem [thread:$0]  %s42, 48, %s44, [#allocation5], 16, 16, 1
    $region13: #{factorcl_forward.8} parent=1 // pred_fallthru
      _
    // Predicated region
    $region14: #{factorcl_forward.8} parent=1 // pred_check
      _
    $region15: #{factorcl_forward.8} parent=1 // pred_check_branch
      %51 = sbr.rel (0) target = $region17
    $region16: #{factorcl_forward.8} parent=1 // pred_region
      %53 = vsyncadd [#allocation8], 0
      %s54 = sshll.u32 %s3, 4
      %s55 = int_to_ptr.hbm [resolvable:$true] %s54
      %s56 = sshll.u32 [#allocation7], 4
      %s57 = int_to_ptr.vmem [resolvable:$true] %s56
      %62 = dma.hbm_to_vmem [thread:$0]  %s55, 3072, %s57, [#allocation8], 512, 512, 32
    $region17: #{factorcl_forward.8} parent=1 // pred_fallthru
      _
    // Predicated region
    $region18: #{factorcl_forward.8} parent=1 // pred_check
      _
    $region19: #{factorcl_forward.8} parent=1 // pred_check_branch
      %64 = sbr.rel (0) target = $region21
    $region20: #{factorcl_forward.8} parent=1 // pred_region
      %66 = vsyncadd [#allocation8], 0
      %s67 = sshll.u32 %s4, 4
      %s68 = int_to_ptr.hbm [resolvable:$true] %s67
      %s69 = sshll.u32 [#allocation9], 4
      %s70 = int_to_ptr.vmem [resolvable:$true] %s69
      %75 = dma.hbm_to_vmem [thread:$0]  %s68, 192, %s70, [#allocation8], 64, 64, 4
    $region21: #{factorcl_forward.8} parent=1 // pred_fallthru
      _
    // Predicated region
    $region22: #{factorcl_forward.8} parent=1 // pred_check
      _
    $region23: #{factorcl_forward.8} parent=1 // pred_check_branch
      %77 = sbr.rel (0) target = $region25
    $region24: #{factorcl_forward.8} parent=1 // pred_region
      %79 = dma.done [#allocation3], 128
    $region25: #{factorcl_forward.8} parent=1 // pred_fallthru
      _
    // Predicated region
    $region26: #{factorcl_forward.8} parent=1 // pred_check
      _
    $region27: #{factorcl_forward.8} parent=1 // pred_check_branch
      %81 = sbr.rel (0) target = $region29
    $region28: #{factorcl_forward.8} parent=1 // pred_region
      %83 = dma.done [#allocation5], 768
    $region29: #{factorcl_forward.8} parent=1 // pred_fallthru
      _
    // Predicated region
    $region30: #{factorcl_forward.8} parent=1 // pred_check
      _
    $region31: #{factorcl_forward.8} parent=1 // pred_check_branch
      %85 = sbr.rel (0) target = $region33
    $region32: #{factorcl_forward.8} parent=1 // pred_region
      %87 = dma.done [#allocation5], 48
    $region33: #{factorcl_forward.8} parent=1 // pred_fallthru
      _
    // Predicated region
    $region34: #{factorcl_forward.8} parent=1 // pred_check
      _
    $region35: #{factorcl_forward.8} parent=1 // pred_check_branch
      %89 = sbr.rel (0) target = $region37
    $region36: #{factorcl_forward.8} parent=1 // pred_region
      %91 = dma.done [#allocation8], 3072
    $region37: #{factorcl_forward.8} parent=1 // pred_fallthru
      _
    // Predicated region
    $region38: #{factorcl_forward.8} parent=1 // pred_check
      _
    $region39: #{factorcl_forward.8} parent=1 // pred_check_branch
      %93 = sbr.rel (0) target = $region41
    $region40: #{factorcl_forward.8} parent=1 // pred_region
      %95 = dma.done [#allocation8], 192
    $region41: #{factorcl_forward.8} parent=1 // pred_fallthru
      _
    %v96 = vld [vmem:[#allocation2] sm:$0xff]
    %v97 = vmul.f32 %v96, %v96
    %vm98 = vcmask 130048
    %v99 = vsel %vm98, %v97, 0.0
    %100 = vadd.xlane.f32.xlu0 %v99
    %v101 = vpop.xlane.xlu0 %100
    %v102 = vrsqrt.pop %v101
    %v103 = vmul.f32 %v102, %v101
    %v104 = vmul.f32 %v103, %v102
    %v105 = vmul.f32 0.5, %v104
    %v106 = vsub.f32 1.5, %v105
    %v107 = vmul.f32 %v102, %v106
    %v108 = vmul.f32 %v101, %v107
    %vm109 = vcmp.eq.f32.partialorder %v101, inf
    %v110 = vsel %vm109, %v101, %v108
    %vm111 = vcmp.eq.f32.partialorder %v101, 0.0
    %v112 = vand.u32 %v101, 2147483648
    %v113 = vsel %vm111, %v112, %v110
    %v114 = vmax.f32 %v113, 1e-12
    %v115 = vrcp.pop %v114
    %v116 = vmul.f32 %v114, %v115
    %v117 = vsub.f32 1.0, %v116
    %v118 = vmul.f32 %v115, %v117
    %v119 = vadd.f32 %v115, %v118
    %vm120 = vweird.f32 %v114
    %vm121 = vweird.f32 %v115
    %vm122 = vmor %vm120, %vm121
    %v123 = vsel %vm122, %v115, %v119
    %v124 = vand.u32 2147483647, %v114
    %vm125 = vcmp.eq.f32.partialorder %v124, 8.507059e+37
    %v126 = vand.u32 %v114, 2147483648
    %v127 = vor.u32 1.1754944e-38, %v126
    %v128 = vsel %vm125, %v127, %v123
    %v129 = vmul.f32 %v96, %v128
    %v130 = vld [vmem:[#allocation4] sm:$0xff]
    %v131 = vld [vmem:[#allocation4 + $0x8] sm:$0xff]
    %v132 = vld [vmem:[#allocation6] sm:$0x1]
    %v134 = vperm.slane %v132, 0
    %v137 = vsel %vm98, %v129, 0
    %139 = vmatpush.msra.mxu0 0.0
    %140 = vmatpush.msra.mxu0 0.0
    %141 = vmatpush.msra.mxu0 0.0
    %142 = vmatpush.msra.mxu0 0.0
    %143 = vmatpush.msra.mxu0 0.0
    %144 = vmatpush.msra.mxu0 0.0
    %145 = vmatpush.msra.mxu0 0.0
    %146 = vmatpush.msra.mxu0 0.0
    %147 = vmatpush.msra.mxu0 0.0
    %148 = vmatpush.msra.mxu0 0.0
    %149 = vmatpush.msra.mxu0 0.0
    %150 = vmatpush.msra.mxu0 0.0
    %151 = vmatpush.msra.mxu0 0.0
    %152 = vmatpush.msra.mxu0 0.0
    %153 = vmatpush.msra.mxu0 %v131
    %154 = vmatpush.msra.mxu0 %v130
    %155 = vmatmul.f32.gmra.mxu0 %v137
    %v156 = vpop.f32.mrf.mxu0
    %v157 = vadd.f32 %v134, %v156
    %158 = vdwg.mxu0
    %v159 = vmax.f32 %v157, 0.0
    %v160 = vld [vmem:[#allocation7] sm:$0xff]
    %v161 = vld [vmem:[#allocation7 + $0x8] sm:$0xff]
    %v162 = vld [vmem:[#allocation7 + $0x10] sm:$0xff]
    %v163 = vld [vmem:[#allocation7 + $0x18] sm:$0xff]
    %v164 = vld [vmem:[#allocation7 + $0x20] sm:$0xff]
    %v165 = vld [vmem:[#allocation7 + $0x28] sm:$0xff]
    %v166 = vld [vmem:[#allocation7 + $0x30] sm:$0xff]
    %v167 = vld [vmem:[#allocation7 + $0x38] sm:$0xff]
    %v168 = vld [vmem:[#allocation9] sm:$0xf]
    %v170 = vperm.slane %v168, 0
    %v171 = vperm.slane %v168, 1
    %v172 = vperm.slane %v168, 2
    %v173 = vperm.slane %v168, 3
    %v179 = vsel %vm98, %v159, 0
    %181 = vmatpush.msra.mxu0 0.0
    %182 = vmatpush.msra.mxu0 0.0
    %183 = vmatpush.msra.mxu0 0.0
    %184 = vmatpush.msra.mxu0 0.0
    %185 = vmatpush.msra.mxu0 0.0
    %186 = vmatpush.msra.mxu0 0.0
    %187 = vmatpush.msra.mxu0 0.0
    %188 = vmatpush.msra.mxu0 0.0
    %189 = vmatpush.msra.mxu0 0.0
    %190 = vmatpush.msra.mxu0 0.0
    %191 = vmatpush.msra.mxu0 0.0
    %192 = vmatpush.msra.mxu0 0.0
    %193 = vmatpush.msra.mxu0 0.0
    %194 = vmatpush.msra.mxu0 0.0
    %195 = vmatpush.msra.mxu0 %v164
    %196 = vmatpush.msra.mxu0 %v160
    %197 = vmatmul.f32.gmra.mxu0 %v179
    %v198 = vpop.f32.mrf.mxu0
    %v199 = vadd.f32 %v170, %v198
    %200 = vdwg.mxu0
    %201 = vmatpush.msra.mxu0 0.0
    %202 = vmatpush.msra.mxu0 0.0
    %203 = vmatpush.msra.mxu0 0.0
    %204 = vmatpush.msra.mxu0 0.0
    %205 = vmatpush.msra.mxu0 0.0
    %206 = vmatpush.msra.mxu0 0.0
    %207 = vmatpush.msra.mxu0 0.0
    %208 = vmatpush.msra.mxu0 0.0
    %209 = vmatpush.msra.mxu0 0.0
    %210 = vmatpush.msra.mxu0 0.0
    %211 = vmatpush.msra.mxu0 0.0
    %212 = vmatpush.msra.mxu0 0.0
    %213 = vmatpush.msra.mxu0 0.0
    %214 = vmatpush.msra.mxu0 0.0
    %215 = vmatpush.msra.mxu0 %v165
    %216 = vmatpush.msra.mxu0 %v161
    %217 = vmatmul.f32.gmra.mxu0 %v179
    %v218 = vpop.f32.mrf.mxu0
    %v219 = vadd.f32 %v171, %v218
    %220 = vdwg.mxu0
    %221 = vmatpush.msra.mxu0 0.0
    %222 = vmatpush.msra.mxu0 0.0
    %223 = vmatpush.msra.mxu0 0.0
    %224 = vmatpush.msra.mxu0 0.0
    %225 = vmatpush.msra.mxu0 0.0
    %226 = vmatpush.msra.mxu0 0.0
    %227 = vmatpush.msra.mxu0 0.0
    %228 = vmatpush.msra.mxu0 0.0
    %229 = vmatpush.msra.mxu0 0.0
    %230 = vmatpush.msra.mxu0 0.0
    %231 = vmatpush.msra.mxu0 0.0
    %232 = vmatpush.msra.mxu0 0.0
    %233 = vmatpush.msra.mxu0 0.0
    %234 = vmatpush.msra.mxu0 0.0
    %235 = vmatpush.msra.mxu0 %v166
    %236 = vmatpush.msra.mxu0 %v162
    %237 = vmatmul.f32.gmra.mxu0 %v179
    %v238 = vpop.f32.mrf.mxu0
    %v239 = vadd.f32 %v172, %v238
    %240 = vdwg.mxu0
    %241 = vmatpush.msra.mxu0 0.0
    %242 = vmatpush.msra.mxu0 0.0
    %243 = vmatpush.msra.mxu0 0.0
    %244 = vmatpush.msra.mxu0 0.0
    %245 = vmatpush.msra.mxu0 0.0
    %246 = vmatpush.msra.mxu0 0.0
    %247 = vmatpush.msra.mxu0 0.0
    %248 = vmatpush.msra.mxu0 0.0
    %249 = vmatpush.msra.mxu0 0.0
    %250 = vmatpush.msra.mxu0 0.0
    %251 = vmatpush.msra.mxu0 0.0
    %252 = vmatpush.msra.mxu0 0.0
    %253 = vmatpush.msra.mxu0 0.0
    %254 = vmatpush.msra.mxu0 0.0
    %255 = vmatpush.msra.mxu0 %v167
    %256 = vmatpush.msra.mxu0 %v163
    %257 = vmatmul.f32.gmra.mxu0 %v179
    %v258 = vpop.f32.mrf.mxu0
    %v259 = vadd.f32 %v173, %v258
    %260 = vdwg.mxu0
    %261 = vst [vmem:[%s5] sm:$0xff] %v199
    %262 = vst [vmem:[%s5 + $0x8] sm:$0xff] %v219
    %263 = vst [vmem:[%s5 + $0x10] sm:$0xff] %v239
    %264 = vst [vmem:[%s5 + $0x18] sm:$0xff] %v259
    %s265 = scalar_lea.vmem [#allocation4], 16
    %v266 = vld [vmem:[%s265] sm:$0xff]
    %v267 = vld [vmem:[%s265 + $0x8] sm:$0xff]
    %s268 = scalar_lea.vmem [#allocation6], 1
    %v269 = vld [vmem:[%s268] sm:$0x1]
    %v271 = vperm.slane %v269, 0
    %273 = vmatpush.msra.mxu0 0.0
    %274 = vmatpush.msra.mxu0 0.0
    %275 = vmatpush.msra.mxu0 0.0
    %276 = vmatpush.msra.mxu0 0.0
    %277 = vmatpush.msra.mxu0 0.0
    %278 = vmatpush.msra.mxu0 0.0
    %279 = vmatpush.msra.mxu0 0.0
    %280 = vmatpush.msra.mxu0 0.0
    %281 = vmatpush.msra.mxu0 0.0
    %282 = vmatpush.msra.mxu0 0.0
    %283 = vmatpush.msra.mxu0 0.0
    %284 = vmatpush.msra.mxu0 0.0
    %285 = vmatpush.msra.mxu0 0.0
    %286 = vmatpush.msra.mxu0 0.0
    %287 = vmatpush.msra.mxu0 %v267
    %288 = vmatpush.msra.mxu0 %v266
    %289 = vmatmul.f32.gmra.mxu0 %v137
    %v290 = vpop.f32.mrf.mxu0
    %v291 = vadd.f32 %v271, %v290
    %292 = vdwg.mxu0
    %v293 = vmax.f32 %v291, 0.0
    %s294 = scalar_lea.vmem [#allocation7], 64
    %v295 = vld [vmem:[%s294] sm:$0xff]
    %v296 = vld [vmem:[%s294 + $0x8] sm:$0xff]
    %v297 = vld [vmem:[%s294 + $0x10] sm:$0xff]
    %v298 = vld [vmem:[%s294 + $0x18] sm:$0xff]
    %v299 = vld [vmem:[%s294 + $0x20] sm:$0xff]
    %v300 = vld [vmem:[%s294 + $0x28] sm:$0xff]
    %v301 = vld [vmem:[%s294 + $0x30] sm:$0xff]
    %v302 = vld [vmem:[%s294 + $0x38] sm:$0xff]
    %s303 = scalar_lea.vmem [#allocation9], 4
    %v304 = vld [vmem:[%s303] sm:$0xf]
    %v306 = vperm.slane %v304, 0
    %v307 = vperm.slane %v304, 1
    %v308 = vperm.slane %v304, 2
    %v309 = vperm.slane %v304, 3
    %v315 = vsel %vm98, %v293, 0
    %317 = vmatpush.msra.mxu0 0.0
    %318 = vmatpush.msra.mxu0 0.0
    %319 = vmatpush.msra.mxu0 0.0
    %320 = vmatpush.msra.mxu0 0.0
    %321 = vmatpush.msra.mxu0 0.0
    %322 = vmatpush.msra.mxu0 0.0
    %323 = vmatpush.msra.mxu0 0.0
    %324 = vmatpush.msra.mxu0 0.0
    %325 = vmatpush.msra.mxu0 0.0
    %326 = vmatpush.msra.mxu0 0.0
    %327 = vmatpush.msra.mxu0 0.0
    %328 = vmatpush.msra.mxu0 0.0
    %329 = vmatpush.msra.mxu0 0.0
    %330 = vmatpush.msra.mxu0 0.0
    %331 = vmatpush.msra.mxu0 %v299
    %332 = vmatpush.msra.mxu0 %v295
    %333 = vmatmul.f32.gmra.mxu0 %v315
    %v334 = vpop.f32.mrf.mxu0
    %v335 = vadd.f32 %v306, %v334
    %336 = vdwg.mxu0
    %337 = vmatpush.msra.mxu0 0.0
    %338 = vmatpush.msra.mxu0 0.0
    %339 = vmatpush.msra.mxu0 0.0
    %340 = vmatpush.msra.mxu0 0.0
    %341 = vmatpush.msra.mxu0 0.0
    %342 = vmatpush.msra.mxu0 0.0
    %343 = vmatpush.msra.mxu0 0.0
    %344 = vmatpush.msra.mxu0 0.0
    %345 = vmatpush.msra.mxu0 0.0
    %346 = vmatpush.msra.mxu0 0.0
    %347 = vmatpush.msra.mxu0 0.0
    %348 = vmatpush.msra.mxu0 0.0
    %349 = vmatpush.msra.mxu0 0.0
    %350 = vmatpush.msra.mxu0 0.0
    %351 = vmatpush.msra.mxu0 %v300
    %352 = vmatpush.msra.mxu0 %v296
    %353 = vmatmul.f32.gmra.mxu0 %v315
    %v354 = vpop.f32.mrf.mxu0
    %v355 = vadd.f32 %v307, %v354
    %356 = vdwg.mxu0
    %357 = vmatpush.msra.mxu0 0.0
    %358 = vmatpush.msra.mxu0 0.0
    %359 = vmatpush.msra.mxu0 0.0
    %360 = vmatpush.msra.mxu0 0.0
    %361 = vmatpush.msra.mxu0 0.0
    %362 = vmatpush.msra.mxu0 0.0
    %363 = vmatpush.msra.mxu0 0.0
    %364 = vmatpush.msra.mxu0 0.0
    %365 = vmatpush.msra.mxu0 0.0
    %366 = vmatpush.msra.mxu0 0.0
    %367 = vmatpush.msra.mxu0 0.0
    %368 = vmatpush.msra.mxu0 0.0
    %369 = vmatpush.msra.mxu0 0.0
    %370 = vmatpush.msra.mxu0 0.0
    %371 = vmatpush.msra.mxu0 %v301
    %372 = vmatpush.msra.mxu0 %v297
    %373 = vmatmul.f32.gmra.mxu0 %v315
    %v374 = vpop.f32.mrf.mxu0
    %v375 = vadd.f32 %v308, %v374
    %376 = vdwg.mxu0
    %377 = vmatpush.msra.mxu0 0.0
    %378 = vmatpush.msra.mxu0 0.0
    %379 = vmatpush.msra.mxu0 0.0
    %380 = vmatpush.msra.mxu0 0.0
    %381 = vmatpush.msra.mxu0 0.0
    %382 = vmatpush.msra.mxu0 0.0
    %383 = vmatpush.msra.mxu0 0.0
    %384 = vmatpush.msra.mxu0 0.0
    %385 = vmatpush.msra.mxu0 0.0
    %386 = vmatpush.msra.mxu0 0.0
    %387 = vmatpush.msra.mxu0 0.0
    %388 = vmatpush.msra.mxu0 0.0
    %389 = vmatpush.msra.mxu0 0.0
    %390 = vmatpush.msra.mxu0 0.0
    %391 = vmatpush.msra.mxu0 %v302
    %392 = vmatpush.msra.mxu0 %v298
    %393 = vmatmul.f32.gmra.mxu0 %v315
    %v394 = vpop.f32.mrf.mxu0
    %v395 = vadd.f32 %v309, %v394
    %396 = vdwg.mxu0
    %s397 = scalar_lea.vmem %s5, 32
    %398 = vst [vmem:[%s397] sm:$0xff] %v335
    %399 = vst [vmem:[%s397 + $0x8] sm:$0xff] %v355
    %400 = vst [vmem:[%s397 + $0x10] sm:$0xff] %v375
    %401 = vst [vmem:[%s397 + $0x18] sm:$0xff] %v395
    %s402 = scalar_lea.vmem [#allocation4], 32
    %v403 = vld [vmem:[%s402] sm:$0xff]
    %v404 = vld [vmem:[%s402 + $0x8] sm:$0xff]
    %s405 = scalar_lea.vmem [#allocation6], 2
    %v406 = vld [vmem:[%s405] sm:$0x1]
    %v408 = vperm.slane %v406, 0
    %410 = vmatpush.msra.mxu0 0.0
    %411 = vmatpush.msra.mxu0 0.0
    %412 = vmatpush.msra.mxu0 0.0
    %413 = vmatpush.msra.mxu0 0.0
    %414 = vmatpush.msra.mxu0 0.0
    %415 = vmatpush.msra.mxu0 0.0
    %416 = vmatpush.msra.mxu0 0.0
    %417 = vmatpush.msra.mxu0 0.0
    %418 = vmatpush.msra.mxu0 0.0
    %419 = vmatpush.msra.mxu0 0.0
    %420 = vmatpush.msra.mxu0 0.0
    %421 = vmatpush.msra.mxu0 0.0
    %422 = vmatpush.msra.mxu0 0.0
    %423 = vmatpush.msra.mxu0 0.0
    %424 = vmatpush.msra.mxu0 %v404
    %425 = vmatpush.msra.mxu0 %v403
    %426 = vmatmul.f32.gmra.mxu0 %v137
    %v427 = vpop.f32.mrf.mxu0
    %v428 = vadd.f32 %v408, %v427
    %429 = vdwg.mxu0
    %v430 = vmax.f32 %v428, 0.0
    %s431 = scalar_lea.vmem [#allocation7], 128
    %v432 = vld [vmem:[%s431] sm:$0xff]
    %v433 = vld [vmem:[%s431 + $0x8] sm:$0xff]
    %v434 = vld [vmem:[%s431 + $0x10] sm:$0xff]
    %v435 = vld [vmem:[%s431 + $0x18] sm:$0xff]
    %v436 = vld [vmem:[%s431 + $0x20] sm:$0xff]
    %v437 = vld [vmem:[%s431 + $0x28] sm:$0xff]
    %v438 = vld [vmem:[%s431 + $0x30] sm:$0xff]
    %v439 = vld [vmem:[%s431 + $0x38] sm:$0xff]
    %s440 = scalar_lea.vmem [#allocation9], 8
    %v441 = vld [vmem:[%s440] sm:$0xf]
    %v443 = vperm.slane %v441, 0
    %v444 = vperm.slane %v441, 1
    %v445 = vperm.slane %v441, 2
    %v446 = vperm.slane %v441, 3
    %v452 = vsel %vm98, %v430, 0
    %454 = vmatpush.msra.mxu0 0.0
    %455 = vmatpush.msra.mxu0 0.0
    %456 = vmatpush.msra.mxu0 0.0
    %457 = vmatpush.msra.mxu0 0.0
    %458 = vmatpush.msra.mxu0 0.0
    %459 = vmatpush.msra.mxu0 0.0
    %460 = vmatpush.msra.mxu0 0.0
    %461 = vmatpush.msra.mxu0 0.0
    %462 = vmatpush.msra.mxu0 0.0
    %463 = vmatpush.msra.mxu0 0.0
    %464 = vmatpush.msra.mxu0 0.0
    %465 = vmatpush.msra.mxu0 0.0
    %466 = vmatpush.msra.mxu0 0.0
    %467 = vmatpush.msra.mxu0 0.0
    %468 = vmatpush.msra.mxu0 %v436
    %469 = vmatpush.msra.mxu0 %v432
    %470 = vmatmul.f32.gmra.mxu0 %v452
    %v471 = vpop.f32.mrf.mxu0
    %v472 = vadd.f32 %v443, %v471
    %473 = vdwg.mxu0
    %474 = vmatpush.msra.mxu0 0.0
    %475 = vmatpush.msra.mxu0 0.0
    %476 = vmatpush.msra.mxu0 0.0
    %477 = vmatpush.msra.mxu0 0.0
    %478 = vmatpush.msra.mxu0 0.0
    %479 = vmatpush.msra.mxu0 0.0
    %480 = vmatpush.msra.mxu0 0.0
    %481 = vmatpush.msra.mxu0 0.0
    %482 = vmatpush.msra.mxu0 0.0
    %483 = vmatpush.msra.mxu0 0.0
    %484 = vmatpush.msra.mxu0 0.0
    %485 = vmatpush.msra.mxu0 0.0
    %486 = vmatpush.msra.mxu0 0.0
    %487 = vmatpush.msra.mxu0 0.0
    %488 = vmatpush.msra.mxu0 %v437
    %489 = vmatpush.msra.mxu0 %v433
    %490 = vmatmul.f32.gmra.mxu0 %v452
    %v491 = vpop.f32.mrf.mxu0
    %v492 = vadd.f32 %v444, %v491
    %493 = vdwg.mxu0
    %494 = vmatpush.msra.mxu0 0.0
    %495 = vmatpush.msra.mxu0 0.0
    %496 = vmatpush.msra.mxu0 0.0
    %497 = vmatpush.msra.mxu0 0.0
    %498 = vmatpush.msra.mxu0 0.0
    %499 = vmatpush.msra.mxu0 0.0
    %500 = vmatpush.msra.mxu0 0.0
    %501 = vmatpush.msra.mxu0 0.0
    %502 = vmatpush.msra.mxu0 0.0
    %503 = vmatpush.msra.mxu0 0.0
    %504 = vmatpush.msra.mxu0 0.0
    %505 = vmatpush.msra.mxu0 0.0
    %506 = vmatpush.msra.mxu0 0.0
    %507 = vmatpush.msra.mxu0 0.0
    %508 = vmatpush.msra.mxu0 %v438
    %509 = vmatpush.msra.mxu0 %v434
    %510 = vmatmul.f32.gmra.mxu0 %v452
    %v511 = vpop.f32.mrf.mxu0
    %v512 = vadd.f32 %v445, %v511
    %513 = vdwg.mxu0
    %514 = vmatpush.msra.mxu0 0.0
    %515 = vmatpush.msra.mxu0 0.0
    %516 = vmatpush.msra.mxu0 0.0
    %517 = vmatpush.msra.mxu0 0.0
    %518 = vmatpush.msra.mxu0 0.0
    %519 = vmatpush.msra.mxu0 0.0
    %520 = vmatpush.msra.mxu0 0.0
    %521 = vmatpush.msra.mxu0 0.0
    %522 = vmatpush.msra.mxu0 0.0
    %523 = vmatpush.msra.mxu0 0.0
    %524 = vmatpush.msra.mxu0 0.0
    %525 = vmatpush.msra.mxu0 0.0
    %526 = vmatpush.msra.mxu0 0.0
    %527 = vmatpush.msra.mxu0 0.0
    %528 = vmatpush.msra.mxu0 %v439
    %529 = vmatpush.msra.mxu0 %v435
    %530 = vmatmul.f32.gmra.mxu0 %v452
    %v531 = vpop.f32.mrf.mxu0
    %v532 = vadd.f32 %v446, %v531
    %533 = vdwg.mxu0
    %s534 = scalar_lea.vmem %s5, 64
    %535 = vst [vmem:[%s534] sm:$0xff] %v472
    %536 = vst [vmem:[%s534 + $0x8] sm:$0xff] %v492
    %537 = vst [vmem:[%s534 + $0x10] sm:$0xff] %v512
    %538 = vst [vmem:[%s534 + $0x18] sm:$0xff] %v532
    // Predicated region
    $region42: #{factorcl_forward.8} parent=1 // pred_check
      _
    $region43: #{factorcl_forward.8} parent=1 // pred_check_branch
      %540 = sbr.rel (0) target = $region45
    $region44: #{factorcl_forward.8} parent=1 // pred_region
      _
    $region45: #{factorcl_forward.8} parent=1 // pred_fallthru
      _
    // Predicated region
    $region46: #{factorcl_forward.8} parent=1 // pred_check
      _
    $region47: #{factorcl_forward.8} parent=1 // pred_check_branch
      %542 = sbr.rel (0) target = $region49
    $region48: #{factorcl_forward.8} parent=1 // pred_region
      _
    $region49: #{factorcl_forward.8} parent=1 // pred_fallthru
      _
    %543 = vsyncpa [#allocation3], 1
    %544 = vsyncpa [#allocation5], 1
    %545 = vsyncpa [#allocation8], 1

// kernel: factorcl_forward.6
$region0: #{factorcl_forward.6}
  #allocation0 [shape = 'u32[]', space=smem, size = 0x4, offset = 0x4, fixed_abs, tag = 'smem constant byte address 0x4 - core index']
  #allocation1 [shape = 'u32[72,128]{1,0:T(1,128)}', space=vmem, size = 0x9000, scoped, tag = 'internal scratch']
  %s0 = inlined_call_operand.hbm [shape: f32[8,16], index: 0, kind: input, shape index: {}]
  %s1 = inlined_call_operand.hbm [shape: f32[5,16,16], index: 1, kind: input, shape index: {}]
  %s2 = inlined_call_operand.hbm [shape: f32[5,1,16], index: 2, kind: input, shape index: {}]
  %s3 = inlined_call_operand.hbm [shape: f32[5,16,512], index: 3, kind: input, shape index: {}]
  %s4 = inlined_call_operand.hbm [shape: f32[5,1,512], index: 4, kind: input, shape index: {}]
  %s5 = inlined_call_operand.vmem [shape: f32[5,8,512], index: 5, kind: output, shape index: {}]
  %s6 = sld [smem:[#allocation0]]
  $region50: #{factorcl_forward.6} parent=0
    _
  %s8 = ssub.s32 1, %s6
  %s9 = scalar_select 0, %s8, %s6
  $region1: #{factorcl_forward.6} parent=0
    #allocation2 [shape = 'u8[4096]{0}', space=vmem, size = 0x1000, scoped, tag = 'input window, operand 0, single buffered']
    #allocation3 [shape = 's32[1]{0}', space=sflag, size = 0x4, scoped, tag = 'scoped memory for factorcl_forward.6']
    #allocation4 [shape = 'u8[40960]{0}', space=vmem, size = 0xa000, scoped, tag = 'input window, operand 1, single buffered']
    #allocation5 [shape = 's32[1]{0}', space=sflag, size = 0x4, scoped, tag = 'scoped memory for factorcl_forward.6']
    #allocation6 [shape = 'u8[2560]{0}', space=vmem, size = 0xc00, scoped, tag = 'input window, operand 2, single buffered']
    #allocation7 [shape = 'u8[163840]{0}', space=vmem, size = 0x28000, scoped, tag = 'input window, operand 3, single buffered']
    #allocation8 [shape = 's32[1]{0}', space=sflag, size = 0x4, scoped, tag = 'scoped memory for factorcl_forward.6']
    #allocation9 [shape = 'u8[10240]{0}', space=vmem, size = 0x2800, scoped, tag = 'input window, operand 4, single buffered']
    %10 = vsyncpa [#allocation3], 0
    %11 = vsyncpa [#allocation5], 0
    %12 = vsyncpa [#allocation8], 0
    // Predicated region
    $region2: #{factorcl_forward.6} parent=1 // pred_check
      _
    $region3: #{factorcl_forward.6} parent=1 // pred_check_branch
      %14 = sbr.rel (0) target = $region5
    $region4: #{factorcl_forward.6} parent=1 // pred_region
      %16 = vsyncadd [#allocation3], 0
      %s18 = sshll.u32 %s0, 4
      %s19 = int_to_ptr.hbm [resolvable:$true] %s18
      %s20 = sshll.u32 [#allocation2], 4
      %s21 = int_to_ptr.vmem [resolvable:$true] %s20
      %23 = dma.hbm_to_vmem [thread:$0]  %s19, 128, %s21, [#allocation3]
    $region5: #{factorcl_forward.6} parent=1 // pred_fallthru
      _
    // Predicated region
    $region6: #{factorcl_forward.6} parent=1 // pred_check
      _
    $region7: #{factorcl_forward.6} parent=1 // pred_check_branch
      %25 = sbr.rel (0) target = $region9
    $region8: #{factorcl_forward.6} parent=1 // pred_region
      %27 = vsyncadd [#allocation5], 0
      %s28 = sshll.u32 %s1, 4
      %s29 = int_to_ptr.hbm [resolvable:$true] %s28
      %s30 = sshll.u32 [#allocation4], 4
      %s31 = int_to_ptr.vmem [resolvable:$true] %s30
      %36 = dma.hbm_to_vmem [thread:$0]  %s29, 1280, %s31, [#allocation5], 128, 128, 8
    $region9: #{factorcl_forward.6} parent=1 // pred_fallthru
      _
    // Predicated region
    $region10: #{factorcl_forward.6} parent=1 // pred_check
      _
    $region11: #{factorcl_forward.6} parent=1 // pred_check_branch
      %38 = sbr.rel (0) target = $region13
    $region12: #{factorcl_forward.6} parent=1 // pred_region
      %40 = vsyncadd [#allocation5], 0
      %s41 = sshll.u32 %s2, 4
      %s42 = int_to_ptr.hbm [resolvable:$true] %s41
      %s43 = sshll.u32 [#allocation6], 4
      %s44 = int_to_ptr.vmem [resolvable:$true] %s43
      %49 = dma.hbm_to_vmem [thread:$0]  %s42, 80, %s44, [#allocation5], 16, 16, 1
    $region13: #{factorcl_forward.6} parent=1 // pred_fallthru
      _
    // Predicated region
    $region14: #{factorcl_forward.6} parent=1 // pred_check
      _
    $region15: #{factorcl_forward.6} parent=1 // pred_check_branch
      %51 = sbr.rel (0) target = $region17
    $region16: #{factorcl_forward.6} parent=1 // pred_region
      %53 = vsyncadd [#allocation8], 0
      %s54 = sshll.u32 %s3, 4
      %s55 = int_to_ptr.hbm [resolvable:$true] %s54
      %s56 = sshll.u32 [#allocation7], 4
      %s57 = int_to_ptr.vmem [resolvable:$true] %s56
      %62 = dma.hbm_to_vmem [thread:$0]  %s55, 5120, %s57, [#allocation8], 512, 512, 32
    $region17: #{factorcl_forward.6} parent=1 // pred_fallthru
      _
    // Predicated region
    $region18: #{factorcl_forward.6} parent=1 // pred_check
      _
    $region19: #{factorcl_forward.6} parent=1 // pred_check_branch
      %64 = sbr.rel (0) target = $region21
    $region20: #{factorcl_forward.6} parent=1 // pred_region
      %66 = vsyncadd [#allocation8], 0
      %s67 = sshll.u32 %s4, 4
      %s68 = int_to_ptr.hbm [resolvable:$true] %s67
      %s69 = sshll.u32 [#allocation9], 4
      %s70 = int_to_ptr.vmem [resolvable:$true] %s69
      %75 = dma.hbm_to_vmem [thread:$0]  %s68, 320, %s70, [#allocation8], 64, 64, 4
    $region21: #{factorcl_forward.6} parent=1 // pred_fallthru
      _
    // Predicated region
    $region22: #{factorcl_forward.6} parent=1 // pred_check
      _
    $region23: #{factorcl_forward.6} parent=1 // pred_check_branch
      %77 = sbr.rel (0) target = $region25
    $region24: #{factorcl_forward.6} parent=1 // pred_region
      %79 = dma.done [#allocation3], 128
    $region25: #{factorcl_forward.6} parent=1 // pred_fallthru
      _
    // Predicated region
    $region26: #{factorcl_forward.6} parent=1 // pred_check
      _
    $region27: #{factorcl_forward.6} parent=1 // pred_check_branch
      %81 = sbr.rel (0) target = $region29
    $region28: #{factorcl_forward.6} parent=1 // pred_region
      %83 = dma.done [#allocation5], 1280
    $region29: #{factorcl_forward.6} parent=1 // pred_fallthru
      _
    // Predicated region
    $region30: #{factorcl_forward.6} parent=1 // pred_check
      _
    $region31: #{factorcl_forward.6} parent=1 // pred_check_branch
      %85 = sbr.rel (0) target = $region33
    $region32: #{factorcl_forward.6} parent=1 // pred_region
      %87 = dma.done [#allocation5], 80
    $region33: #{factorcl_forward.6} parent=1 // pred_fallthru
      _
    // Predicated region
    $region34: #{factorcl_forward.6} parent=1 // pred_check
      _
    $region35: #{factorcl_forward.6} parent=1 // pred_check_branch
      %89 = sbr.rel (0) target = $region37
    $region36: #{factorcl_forward.6} parent=1 // pred_region
      %91 = dma.done [#allocation8], 5120
    $region37: #{factorcl_forward.6} parent=1 // pred_fallthru
      _
    // Predicated region
    $region38: #{factorcl_forward.6} parent=1 // pred_check
      _
    $region39: #{factorcl_forward.6} parent=1 // pred_check_branch
      %93 = sbr.rel (0) target = $region41
    $region40: #{factorcl_forward.6} parent=1 // pred_region
      %95 = dma.done [#allocation8], 320
    $region41: #{factorcl_forward.6} parent=1 // pred_fallthru
      _
    %v96 = vld [vmem:[#allocation2] sm:$0xff]
    %v97 = vmul.f32 %v96, %v96
    %vm98 = vcmask 130048
    %v99 = vsel %vm98, %v97, 0.0
    %100 = vadd.xlane.f32.xlu0 %v99
    %v101 = vpop.xlane.xlu0 %100
    %v102 = vrsqrt.pop %v101
    %v103 = vmul.f32 %v102, %v101
    %v104 = vmul.f32 %v103, %v102
    %v105 = vmul.f32 0.5, %v104
    %v106 = vsub.f32 1.5, %v105
    %v107 = vmul.f32 %v102, %v106
    %v108 = vmul.f32 %v101, %v107
    %vm109 = vcmp.eq.f32.partialorder %v101, inf
    %v110 = vsel %vm109, %v101, %v108
    %vm111 = vcmp.eq.f32.partialorder %v101, 0.0
    %v112 = vand.u32 %v101, 2147483648
    %v113 = vsel %vm111, %v112, %v110
    %v114 = vmax.f32 %v113, 1e-12
    %v115 = vrcp.pop %v114
    %v116 = vmul.f32 %v114, %v115
    %v117 = vsub.f32 1.0, %v116
    %v118 = vmul.f32 %v115, %v117
    %v119 = vadd.f32 %v115, %v118
    %vm120 = vweird.f32 %v114
    %vm121 = vweird.f32 %v115
    %vm122 = vmor %vm120, %vm121
    %v123 = vsel %vm122, %v115, %v119
    %v124 = vand.u32 2147483647, %v114
    %vm125 = vcmp.eq.f32.partialorder %v124, 8.507059e+37
    %v126 = vand.u32 %v114, 2147483648
    %v127 = vor.u32 1.1754944e-38, %v126
    %v128 = vsel %vm125, %v127, %v123
    %v129 = vmul.f32 %v96, %v128
    %v130 = vld [vmem:[#allocation4] sm:$0xff]
    %v131 = vld [vmem:[#allocation4 + $0x8] sm:$0xff]
    %v132 = vld [vmem:[#allocation6] sm:$0x1]
    %v134 = vperm.slane %v132, 0
    %v137 = vsel %vm98, %v129, 0
    %139 = vmatpush.msra.mxu0 0.0
    %140 = vmatpush.msra.mxu0 0.0
    %141 = vmatpush.msra.mxu0 0.0
    %142 = vmatpush.msra.mxu0 0.0
    %143 = vmatpush.msra.mxu0 0.0
    %144 = vmatpush.msra.mxu0 0.0
    %145 = vmatpush.msra.mxu0 0.0
    %146 = vmatpush.msra.mxu0 0.0
    %147 = vmatpush.msra.mxu0 0.0
    %148 = vmatpush.msra.mxu0 0.0
    %149 = vmatpush.msra.mxu0 0.0
    %150 = vmatpush.msra.mxu0 0.0
    %151 = vmatpush.msra.mxu0 0.0
    %152 = vmatpush.msra.mxu0 0.0
    %153 = vmatpush.msra.mxu0 %v131
    %154 = vmatpush.msra.mxu0 %v130
    %155 = vmatmul.f32.gmra.mxu0 %v137
    %v156 = vpop.f32.mrf.mxu0
    %v157 = vadd.f32 %v134, %v156
    %158 = vdwg.mxu0
    %v159 = vmax.f32 %v157, 0.0
    %v160 = vld [vmem:[#allocation7] sm:$0xff]
    %v161 = vld [vmem:[#allocation7 + $0x8] sm:$0xff]
    %v162 = vld [vmem:[#allocation7 + $0x10] sm:$0xff]
    %v163 = vld [vmem:[#allocation7 + $0x18] sm:$0xff]
    %v164 = vld [vmem:[#allocation7 + $0x20] sm:$0xff]
    %v165 = vld [vmem:[#allocation7 + $0x28] sm:$0xff]
    %v166 = vld [vmem:[#allocation7 + $0x30] sm:$0xff]
    %v167 = vld [vmem:[#allocation7 + $0x38] sm:$0xff]
    %v168 = vld [vmem:[#allocation9] sm:$0xf]
    %v170 = vperm.slane %v168, 0
    %v171 = vperm.slane %v168, 1
    %v172 = vperm.slane %v168, 2
    %v173 = vperm.slane %v168, 3
    %v179 = vsel %vm98, %v159, 0
    %181 = vmatpush.msra.mxu0 0.0
    %182 = vmatpush.msra.mxu0 0.0
    %183 = vmatpush.msra.mxu0 0.0
    %184 = vmatpush.msra.mxu0 0.0
    %185 = vmatpush.msra.mxu0 0.0
    %186 = vmatpush.msra.mxu0 0.0
    %187 = vmatpush.msra.mxu0 0.0
    %188 = vmatpush.msra.mxu0 0.0
    %189 = vmatpush.msra.mxu0 0.0
    %190 = vmatpush.msra.mxu0 0.0
    %191 = vmatpush.msra.mxu0 0.0
    %192 = vmatpush.msra.mxu0 0.0
    %193 = vmatpush.msra.mxu0 0.0
    %194 = vmatpush.msra.mxu0 0.0
    %195 = vmatpush.msra.mxu0 %v164
    %196 = vmatpush.msra.mxu0 %v160
    %197 = vmatmul.f32.gmra.mxu0 %v179
    %v198 = vpop.f32.mrf.mxu0
    %v199 = vadd.f32 %v170, %v198
    %200 = vdwg.mxu0
    %201 = vmatpush.msra.mxu0 0.0
    %202 = vmatpush.msra.mxu0 0.0
    %203 = vmatpush.msra.mxu0 0.0
    %204 = vmatpush.msra.mxu0 0.0
    %205 = vmatpush.msra.mxu0 0.0
    %206 = vmatpush.msra.mxu0 0.0
    %207 = vmatpush.msra.mxu0 0.0
    %208 = vmatpush.msra.mxu0 0.0
    %209 = vmatpush.msra.mxu0 0.0
    %210 = vmatpush.msra.mxu0 0.0
    %211 = vmatpush.msra.mxu0 0.0
    %212 = vmatpush.msra.mxu0 0.0
    %213 = vmatpush.msra.mxu0 0.0
    %214 = vmatpush.msra.mxu0 0.0
    %215 = vmatpush.msra.mxu0 %v165
    %216 = vmatpush.msra.mxu0 %v161
    %217 = vmatmul.f32.gmra.mxu0 %v179
    %v218 = vpop.f32.mrf.mxu0
    %v219 = vadd.f32 %v171, %v218
    %220 = vdwg.mxu0
    %221 = vmatpush.msra.mxu0 0.0
    %222 = vmatpush.msra.mxu0 0.0
    %223 = vmatpush.msra.mxu0 0.0
    %224 = vmatpush.msra.mxu0 0.0
    %225 = vmatpush.msra.mxu0 0.0
    %226 = vmatpush.msra.mxu0 0.0
    %227 = vmatpush.msra.mxu0 0.0
    %228 = vmatpush.msra.mxu0 0.0
    %229 = vmatpush.msra.mxu0 0.0
    %230 = vmatpush.msra.mxu0 0.0
    %231 = vmatpush.msra.mxu0 0.0
    %232 = vmatpush.msra.mxu0 0.0
    %233 = vmatpush.msra.mxu0 0.0
    %234 = vmatpush.msra.mxu0 0.0
    %235 = vmatpush.msra.mxu0 %v166
    %236 = vmatpush.msra.mxu0 %v162
    %237 = vmatmul.f32.gmra.mxu0 %v179
    %v238 = vpop.f32.mrf.mxu0
    %v239 = vadd.f32 %v172, %v238
    %240 = vdwg.mxu0
    %241 = vmatpush.msra.mxu0 0.0
    %242 = vmatpush.msra.mxu0 0.0
    %243 = vmatpush.msra.mxu0 0.0
    %244 = vmatpush.msra.mxu0 0.0
    %245 = vmatpush.msra.mxu0 0.0
    %246 = vmatpush.msra.mxu0 0.0
    %247 = vmatpush.msra.mxu0 0.0
    %248 = vmatpush.msra.mxu0 0.0
    %249 = vmatpush.msra.mxu0 0.0
    %250 = vmatpush.msra.mxu0 0.0
    %251 = vmatpush.msra.mxu0 0.0
    %252 = vmatpush.msra.mxu0 0.0
    %253 = vmatpush.msra.mxu0 0.0
    %254 = vmatpush.msra.mxu0 0.0
    %255 = vmatpush.msra.mxu0 %v167
    %256 = vmatpush.msra.mxu0 %v163
    %257 = vmatmul.f32.gmra.mxu0 %v179
    %v258 = vpop.f32.mrf.mxu0
    %v259 = vadd.f32 %v173, %v258
    %260 = vdwg.mxu0
    %261 = vst [vmem:[%s5] sm:$0xff] %v199
    %262 = vst [vmem:[%s5 + $0x8] sm:$0xff] %v219
    %263 = vst [vmem:[%s5 + $0x10] sm:$0xff] %v239
    %264 = vst [vmem:[%s5 + $0x18] sm:$0xff] %v259
    %s265 = scalar_lea.vmem [#allocation4], 16
    %v266 = vld [vmem:[%s265] sm:$0xff]
    %v267 = vld [vmem:[%s265 + $0x8] sm:$0xff]
    %s268 = scalar_lea.vmem [#allocation6], 1
    %v269 = vld [vmem:[%s268] sm:$0x1]
    %v271 = vperm.slane %v269, 0
    %273 = vmatpush.msra.mxu0 0.0
    %274 = vmatpush.msra.mxu0 0.0
    %275 = vmatpush.msra.mxu0 0.0
    %276 = vmatpush.msra.mxu0 0.0
    %277 = vmatpush.msra.mxu0 0.0
    %278 = vmatpush.msra.mxu0 0.0
    %279 = vmatpush.msra.mxu0 0.0
    %280 = vmatpush.msra.mxu0 0.0
    %281 = vmatpush.msra.mxu0 0.0
    %282 = vmatpush.msra.mxu0 0.0
    %283 = vmatpush.msra.mxu0 0.0
    %284 = vmatpush.msra.mxu0 0.0
    %285 = vmatpush.msra.mxu0 0.0
    %286 = vmatpush.msra.mxu0 0.0
    %287 = vmatpush.msra.mxu0 %v267
    %288 = vmatpush.msra.mxu0 %v266
    %289 = vmatmul.f32.gmra.mxu0 %v137
    %v290 = vpop.f32.mrf.mxu0
    %v291 = vadd.f32 %v271, %v290
    %292 = vdwg.mxu0
    %v293 = vmax.f32 %v291, 0.0
    %s294 = scalar_lea.vmem [#allocation7], 64
    %v295 = vld [vmem:[%s294] sm:$0xff]
    %v296 = vld [vmem:[%s294 + $0x8] sm:$0xff]
    %v297 = vld [vmem:[%s294 + $0x10] sm:$0xff]
    %v298 = vld [vmem:[%s294 + $0x18] sm:$0xff]
    %v299 = vld [vmem:[%s294 + $0x20] sm:$0xff]
    %v300 = vld [vmem:[%s294 + $0x28] sm:$0xff]
    %v301 = vld [vmem:[%s294 + $0x30] sm:$0xff]
    %v302 = vld [vmem:[%s294 + $0x38] sm:$0xff]
    %s303 = scalar_lea.vmem [#allocation9], 4
    %v304 = vld [vmem:[%s303] sm:$0xf]
    %v306 = vperm.slane %v304, 0
    %v307 = vperm.slane %v304, 1
    %v308 = vperm.slane %v304, 2
    %v309 = vperm.slane %v304, 3
    %v315 = vsel %vm98, %v293, 0
    %317 = vmatpush.msra.mxu0 0.0
    %318 = vmatpush.msra.mxu0 0.0
    %319 = vmatpush.msra.mxu0 0.0
    %320 = vmatpush.msra.mxu0 0.0
    %321 = vmatpush.msra.mxu0 0.0
    %322 = vmatpush.msra.mxu0 0.0
    %323 = vmatpush.msra.mxu0 0.0
    %324 = vmatpush.msra.mxu0 0.0
    %325 = vmatpush.msra.mxu0 0.0
    %326 = vmatpush.msra.mxu0 0.0
    %327 = vmatpush.msra.mxu0 0.0
    %328 = vmatpush.msra.mxu0 0.0
    %329 = vmatpush.msra.mxu0 0.0
    %330 = vmatpush.msra.mxu0 0.0
    %331 = vmatpush.msra.mxu0 %v299
    %332 = vmatpush.msra.mxu0 %v295
    %333 = vmatmul.f32.gmra.mxu0 %v315
    %v334 = vpop.f32.mrf.mxu0
    %v335 = vadd.f32 %v306, %v334
    %336 = vdwg.mxu0
    %337 = vmatpush.msra.mxu0 0.0
    %338 = vmatpush.msra.mxu0 0.0
    %339 = vmatpush.msra.mxu0 0.0
    %340 = vmatpush.msra.mxu0 0.0
    %341 = vmatpush.msra.mxu0 0.0
    %342 = vmatpush.msra.mxu0 0.0
    %343 = vmatpush.msra.mxu0 0.0
    %344 = vmatpush.msra.mxu0 0.0
    %345 = vmatpush.msra.mxu0 0.0
    %346 = vmatpush.msra.mxu0 0.0
    %347 = vmatpush.msra.mxu0 0.0
    %348 = vmatpush.msra.mxu0 0.0
    %349 = vmatpush.msra.mxu0 0.0
    %350 = vmatpush.msra.mxu0 0.0
    %351 = vmatpush.msra.mxu0 %v300
    %352 = vmatpush.msra.mxu0 %v296
    %353 = vmatmul.f32.gmra.mxu0 %v315
    %v354 = vpop.f32.mrf.mxu0
    %v355 = vadd.f32 %v307, %v354
    %356 = vdwg.mxu0
    %357 = vmatpush.msra.mxu0 0.0
    %358 = vmatpush.msra.mxu0 0.0
    %359 = vmatpush.msra.mxu0 0.0
    %360 = vmatpush.msra.mxu0 0.0
    %361 = vmatpush.msra.mxu0 0.0
    %362 = vmatpush.msra.mxu0 0.0
    %363 = vmatpush.msra.mxu0 0.0
    %364 = vmatpush.msra.mxu0 0.0
    %365 = vmatpush.msra.mxu0 0.0
    %366 = vmatpush.msra.mxu0 0.0
    %367 = vmatpush.msra.mxu0 0.0
    %368 = vmatpush.msra.mxu0 0.0
    %369 = vmatpush.msra.mxu0 0.0
    %370 = vmatpush.msra.mxu0 0.0
    %371 = vmatpush.msra.mxu0 %v301
    %372 = vmatpush.msra.mxu0 %v297
    %373 = vmatmul.f32.gmra.mxu0 %v315
    %v374 = vpop.f32.mrf.mxu0
    %v375 = vadd.f32 %v308, %v374
    %376 = vdwg.mxu0
    %377 = vmatpush.msra.mxu0 0.0
    %378 = vmatpush.msra.mxu0 0.0
    %379 = vmatpush.msra.mxu0 0.0
    %380 = vmatpush.msra.mxu0 0.0
    %381 = vmatpush.msra.mxu0 0.0
    %382 = vmatpush.msra.mxu0 0.0
    %383 = vmatpush.msra.mxu0 0.0
    %384 = vmatpush.msra.mxu0 0.0
    %385 = vmatpush.msra.mxu0 0.0
    %386 = vmatpush.msra.mxu0 0.0
    %387 = vmatpush.msra.mxu0 0.0
    %388 = vmatpush.msra.mxu0 0.0
    %389 = vmatpush.msra.mxu0 0.0
    %390 = vmatpush.msra.mxu0 0.0
    %391 = vmatpush.msra.mxu0 %v302
    %392 = vmatpush.msra.mxu0 %v298
    %393 = vmatmul.f32.gmra.mxu0 %v315
    %v394 = vpop.f32.mrf.mxu0
    %v395 = vadd.f32 %v309, %v394
    %396 = vdwg.mxu0
    %s397 = scalar_lea.vmem %s5, 32
    %398 = vst [vmem:[%s397] sm:$0xff] %v335
    %399 = vst [vmem:[%s397 + $0x8] sm:$0xff] %v355
    %400 = vst [vmem:[%s397 + $0x10] sm:$0xff] %v375
    %401 = vst [vmem:[%s397 + $0x18] sm:$0xff] %v395
    %s402 = scalar_lea.vmem [#allocation4], 32
    %v403 = vld [vmem:[%s402] sm:$0xff]
    %v404 = vld [vmem:[%s402 + $0x8] sm:$0xff]
    %s405 = scalar_lea.vmem [#allocation6], 2
    %v406 = vld [vmem:[%s405] sm:$0x1]
    %v408 = vperm.slane %v406, 0
    %410 = vmatpush.msra.mxu0 0.0
    %411 = vmatpush.msra.mxu0 0.0
    %412 = vmatpush.msra.mxu0 0.0
    %413 = vmatpush.msra.mxu0 0.0
    %414 = vmatpush.msra.mxu0 0.0
    %415 = vmatpush.msra.mxu0 0.0
    %416 = vmatpush.msra.mxu0 0.0
    %417 = vmatpush.msra.mxu0 0.0
    %418 = vmatpush.msra.mxu0 0.0
    %419 = vmatpush.msra.mxu0 0.0
    %420 = vmatpush.msra.mxu0 0.0
    %421 = vmatpush.msra.mxu0 0.0
    %422 = vmatpush.msra.mxu0 0.0
    %423 = vmatpush.msra.mxu0 0.0
    %424 = vmatpush.msra.mxu0 %v404
    %425 = vmatpush.msra.mxu0 %v403
    %426 = vmatmul.f32.gmra.mxu0 %v137
    %v427 = vpop.f32.mrf.mxu0
    %v428 = vadd.f32 %v408, %v427
    %429 = vdwg.mxu0
    %v430 = vmax.f32 %v428, 0.0
    %s431 = scalar_lea.vmem [#allocation7], 128
    %v432 = vld [vmem:[%s431] sm:$0xff]
    %v433 = vld [vmem:[%s431 + $0x8] sm:$0xff]
    %v434 = vld [vmem:[%s431 + $0x10] sm:$0xff]
    %v435 = vld [vmem:[%s431 + $0x18] sm:$0xff]
    %v436 = vld [vmem:[%s431 + $0x20] sm:$0xff]
    %v437 = vld [vmem:[%s431 + $0x28] sm:$0xff]
    %v438 = vld [vmem:[%s431 + $0x30] sm:$0xff]
    %v439 = vld [vmem:[%s431 + $0x38] sm:$0xff]
    %s440 = scalar_lea.vmem [#allocation9], 8
    %v441 = vld [vmem:[%s440] sm:$0xf]
    %v443 = vperm.slane %v441, 0
    %v444 = vperm.slane %v441, 1
    %v445 = vperm.slane %v441, 2
    %v446 = vperm.slane %v441, 3
    %v452 = vsel %vm98, %v430, 0
    %454 = vmatpush.msra.mxu0 0.0
    %455 = vmatpush.msra.mxu0 0.0
    %456 = vmatpush.msra.mxu0 0.0
    %457 = vmatpush.msra.mxu0 0.0
    %458 = vmatpush.msra.mxu0 0.0
    %459 = vmatpush.msra.mxu0 0.0
    %460 = vmatpush.msra.mxu0 0.0
    %461 = vmatpush.msra.mxu0 0.0
    %462 = vmatpush.msra.mxu0 0.0
    %463 = vmatpush.msra.mxu0 0.0
    %464 = vmatpush.msra.mxu0 0.0
    %465 = vmatpush.msra.mxu0 0.0
    %466 = vmatpush.msra.mxu0 0.0
    %467 = vmatpush.msra.mxu0 0.0
    %468 = vmatpush.msra.mxu0 %v436
    %469 = vmatpush.msra.mxu0 %v432
    %470 = vmatmul.f32.gmra.mxu0 %v452
    %v471 = vpop.f32.mrf.mxu0
    %v472 = vadd.f32 %v443, %v471
    %473 = vdwg.mxu0
    %474 = vmatpush.msra.mxu0 0.0
    %475 = vmatpush.msra.mxu0 0.0
    %476 = vmatpush.msra.mxu0 0.0
    %477 = vmatpush.msra.mxu0 0.0
    %478 = vmatpush.msra.mxu0 0.0
    %479 = vmatpush.msra.mxu0 0.0
    %480 = vmatpush.msra.mxu0 0.0
    %481 = vmatpush.msra.mxu0 0.0
    %482 = vmatpush.msra.mxu0 0.0
    %483 = vmatpush.msra.mxu0 0.0
    %484 = vmatpush.msra.mxu0 0.0
    %485 = vmatpush.msra.mxu0 0.0
    %486 = vmatpush.msra.mxu0 0.0
    %487 = vmatpush.msra.mxu0 0.0
    %488 = vmatpush.msra.mxu0 %v437
    %489 = vmatpush.msra.mxu0 %v433
    %490 = vmatmul.f32.gmra.mxu0 %v452
    %v491 = vpop.f32.mrf.mxu0
    %v492 = vadd.f32 %v444, %v491
    %493 = vdwg.mxu0
    %494 = vmatpush.msra.mxu0 0.0
    %495 = vmatpush.msra.mxu0 0.0
    %496 = vmatpush.msra.mxu0 0.0
    %497 = vmatpush.msra.mxu0 0.0
    %498 = vmatpush.msra.mxu0 0.0
    %499 = vmatpush.msra.mxu0 0.0
    %500 = vmatpush.msra.mxu0 0.0
    %501 = vmatpush.msra.mxu0 0.0
    %502 = vmatpush.msra.mxu0 0.0
    %503 = vmatpush.msra.mxu0 0.0
    %504 = vmatpush.msra.mxu0 0.0
    %505 = vmatpush.msra.mxu0 0.0
    %506 = vmatpush.msra.mxu0 0.0
    %507 = vmatpush.msra.mxu0 0.0
    %508 = vmatpush.msra.mxu0 %v438
    %509 = vmatpush.msra.mxu0 %v434
    %510 = vmatmul.f32.gmra.mxu0 %v452
    %v511 = vpop.f32.mrf.mxu0
    %v512 = vadd.f32 %v445, %v511
    %513 = vdwg.mxu0
    %514 = vmatpush.msra.mxu0 0.0
    %515 = vmatpush.msra.mxu0 0.0
    %516 = vmatpush.msra.mxu0 0.0
    %517 = vmatpush.msra.mxu0 0.0
    %518 = vmatpush.msra.mxu0 0.0
    %519 = vmatpush.msra.mxu0 0.0
    %520 = vmatpush.msra.mxu0 0.0
    %521 = vmatpush.msra.mxu0 0.0
    %522 = vmatpush.msra.mxu0 0.0
    %523 = vmatpush.msra.mxu0 0.0
    %524 = vmatpush.msra.mxu0 0.0
    %525 = vmatpush.msra.mxu0 0.0
    %526 = vmatpush.msra.mxu0 0.0
    %527 = vmatpush.msra.mxu0 0.0
    %528 = vmatpush.msra.mxu0 %v439
    %529 = vmatpush.msra.mxu0 %v435
    %530 = vmatmul.f32.gmra.mxu0 %v452
    %v531 = vpop.f32.mrf.mxu0
    %v532 = vadd.f32 %v446, %v531
    %533 = vdwg.mxu0
    %s534 = scalar_lea.vmem %s5, 64
    %535 = vst [vmem:[%s534] sm:$0xff] %v472
    %536 = vst [vmem:[%s534 + $0x8] sm:$0xff] %v492
    %537 = vst [vmem:[%s534 + $0x10] sm:$0xff] %v512
    %538 = vst [vmem:[%s534 + $0x18] sm:$0xff] %v532
    %s539 = scalar_lea.vmem [#allocation4], 48
    %v540 = vld [vmem:[%s539] sm:$0xff]
    %v541 = vld [vmem:[%s539 + $0x8] sm:$0xff]
    %s542 = scalar_lea.vmem [#allocation6], 3
    %v543 = vld [vmem:[%s542] sm:$0x1]
    %v545 = vperm.slane %v543, 0
    %547 = vmatpush.msra.mxu0 0.0
    %548 = vmatpush.msra.mxu0 0.0
    %549 = vmatpush.msra.mxu0 0.0
    %550 = vmatpush.msra.mxu0 0.0
    %551 = vmatpush.msra.mxu0 0.0
    %552 = vmatpush.msra.mxu0 0.0
    %553 = vmatpush.msra.mxu0 0.0
    %554 = vmatpush.msra.mxu0 0.0
    %555 = vmatpush.msra.mxu0 0.0
    %556 = vmatpush.msra.mxu0 0.0
    %557 = vmatpush.msra.mxu0 0.0
    %558 = vmatpush.msra.mxu0 0.0
    %559 = vmatpush.msra.mxu0 0.0
    %560 = vmatpush.msra.mxu0 0.0
    %561 = vmatpush.msra.mxu0 %v541
    %562 = vmatpush.msra.mxu0 %v540
    %563 = vmatmul.f32.gmra.mxu0 %v137
    %v564 = vpop.f32.mrf.mxu0
    %v565 = vadd.f32 %v545, %v564
    %566 = vdwg.mxu0
    %v567 = vmax.f32 %v565, 0.0
    %s568 = scalar_lea.vmem [#allocation7], 192
    %v569 = vld [vmem:[%s568] sm:$0xff]
    %v570 = vld [vmem:[%s568 + $0x8] sm:$0xff]
    %v571 = vld [vmem:[%s568 + $0x10] sm:$0xff]
    %v572 = vld [vmem:[%s568 + $0x18] sm:$0xff]
    %v573 = vld [vmem:[%s568 + $0x20] sm:$0xff]
    %v574 = vld [vmem:[%s568 + $0x28] sm:$0xff]
    %v575 = vld [vmem:[%s568 + $0x30] sm:$0xff]
    %v576 = vld [vmem:[%s568 + $0x38] sm:$0xff]
    %s577 = scalar_lea.vmem [#allocation9], 12
    %v578 = vld [vmem:[%s577] sm:$0xf]
    %v580 = vperm.slane %v578, 0
    %v581 = vperm.slane %v578, 1
    %v582 = vperm.slane %v578, 2
    %v583 = vperm.slane %v578, 3
    %v589 = vsel %vm98, %v567, 0
    %591 = vmatpush.msra.mxu0 0.0
    %592 = vmatpush.msra.mxu0 0.0
    %593 = vmatpush.msra.mxu0 0.0
    %594 = vmatpush.msra.mxu0 0.0
    %595 = vmatpush.msra.mxu0 0.0
    %596 = vmatpush.msra.mxu0 0.0
    %597 = vmatpush.msra.mxu0 0.0
    %598 = vmatpush.msra.mxu0 0.0
    %599 = vmatpush.msra.mxu0 0.0
    %600 = vmatpush.msra.mxu0 0.0
    %601 = vmatpush.msra.mxu0 0.0
    %602 = vmatpush.msra.mxu0 0.0
    %603 = vmatpush.msra.mxu0 0.0
    %604 = vmatpush.msra.mxu0 0.0
    %605 = vmatpush.msra.mxu0 %v573
    %606 = vmatpush.msra.mxu0 %v569
    %607 = vmatmul.f32.gmra.mxu0 %v589
    %v608 = vpop.f32.mrf.mxu0
    %v609 = vadd.f32 %v580, %v608
    %610 = vdwg.mxu0
    %611 = vmatpush.msra.mxu0 0.0
    %612 = vmatpush.msra.mxu0 0.0
    %613 = vmatpush.msra.mxu0 0.0
    %614 = vmatpush.msra.mxu0 0.0
    %615 = vmatpush.msra.mxu0 0.0
    %616 = vmatpush.msra.mxu0 0.0
    %617 = vmatpush.msra.mxu0 0.0
    %618 = vmatpush.msra.mxu0 0.0
    %619 = vmatpush.msra.mxu0 0.0
    %620 = vmatpush.msra.mxu0 0.0
    %621 = vmatpush.msra.mxu0 0.0
    %622 = vmatpush.msra.mxu0 0.0
    %623 = vmatpush.msra.mxu0 0.0
    %624 = vmatpush.msra.mxu0 0.0
    %625 = vmatpush.msra.mxu0 %v574
    %626 = vmatpush.msra.mxu0 %v570
    %627 = vmatmul.f32.gmra.mxu0 %v589
    %v628 = vpop.f32.mrf.mxu0
    %v629 = vadd.f32 %v581, %v628
    %630 = vdwg.mxu0
    %631 = vmatpush.msra.mxu0 0.0
    %632 = vmatpush.msra.mxu0 0.0
    %633 = vmatpush.msra.mxu0 0.0
    %634 = vmatpush.msra.mxu0 0.0
    %635 = vmatpush.msra.mxu0 0.0
    %636 = vmatpush.msra.mxu0 0.0
    %637 = vmatpush.msra.mxu0 0.0
    %638 = vmatpush.msra.mxu0 0.0
    %639 = vmatpush.msra.mxu0 0.0
    %640 = vmatpush.msra.mxu0 0.0
    %641 = vmatpush.msra.mxu0 0.0
    %642 = vmatpush.msra.mxu0 0.0
    %643 = vmatpush.msra.mxu0 0.0
    %644 = vmatpush.msra.mxu0 0.0
    %645 = vmatpush.msra.mxu0 %v575
    %646 = vmatpush.msra.mxu0 %v571
    %647 = vmatmul.f32.gmra.mxu0 %v589
    %v648 = vpop.f32.mrf.mxu0
    %v649 = vadd.f32 %v582, %v648
    %650 = vdwg.mxu0
    %651 = vmatpush.msra.mxu0 0.0
    %652 = vmatpush.msra.mxu0 0.0
    %653 = vmatpush.msra.mxu0 0.0
    %654 = vmatpush.msra.mxu0 0.0
    %655 = vmatpush.msra.mxu0 0.0
    %656 = vmatpush.msra.mxu0 0.0
    %657 = vmatpush.msra.mxu0 0.0
    %658 = vmatpush.msra.mxu0 0.0
    %659 = vmatpush.msra.mxu0 0.0
    %660 = vmatpush.msra.mxu0 0.0
    %661 = vmatpush.msra.mxu0 0.0
    %662 = vmatpush.msra.mxu0 0.0
    %663 = vmatpush.msra.mxu0 0.0
    %664 = vmatpush.msra.mxu0 0.0
    %665 = vmatpush.msra.mxu0 %v576
    %666 = vmatpush.msra.mxu0 %v572
    %667 = vmatmul.f32.gmra.mxu0 %v589
    %v668 = vpop.f32.mrf.mxu0
    %v669 = vadd.f32 %v583, %v668
    %670 = vdwg.mxu0
    %s671 = scalar_lea.vmem %s5, 96
    %672 = vst [vmem:[%s671] sm:$0xff] %v609
    %673 = vst [vmem:[%s671 + $0x8] sm:$0xff] %v629
    %674 = vst [vmem:[%s671 + $0x10] sm:$0xff] %v649
    %675 = vst [vmem:[%s671 + $0x18] sm:$0xff] %v669
    %s676 = scalar_lea.vmem [#allocation4], 64
    %v677 = vld [vmem:[%s676] sm:$0xff]
    %v678 = vld [vmem:[%s676 + $0x8] sm:$0xff]
    %s679 = scalar_lea.vmem [#allocation6], 4
    %v680 = vld [vmem:[%s679] sm:$0x1]
    %v682 = vperm.slane %v680, 0
    %684 = vmatpush.msra.mxu0 0.0
    %685 = vmatpush.msra.mxu0 0.0
    %686 = vmatpush.msra.mxu0 0.0
    %687 = vmatpush.msra.mxu0 0.0
    %688 = vmatpush.msra.mxu0 0.0
    %689 = vmatpush.msra.mxu0 0.0
    %690 = vmatpush.msra.mxu0 0.0
    %691 = vmatpush.msra.mxu0 0.0
    %692 = vmatpush.msra.mxu0 0.0
    %693 = vmatpush.msra.mxu0 0.0
    %694 = vmatpush.msra.mxu0 0.0
    %695 = vmatpush.msra.mxu0 0.0
    %696 = vmatpush.msra.mxu0 0.0
    %697 = vmatpush.msra.mxu0 0.0
    %698 = vmatpush.msra.mxu0 %v678
    %699 = vmatpush.msra.mxu0 %v677
    %700 = vmatmul.f32.gmra.mxu0 %v137
    %v701 = vpop.f32.mrf.mxu0
    %v702 = vadd.f32 %v682, %v701
    %703 = vdwg.mxu0
    %v704 = vmax.f32 %v702, 0.0
    %s705 = scalar_lea.vmem [#allocation7], 256
    %v706 = vld [vmem:[%s705] sm:$0xff]
    %v707 = vld [vmem:[%s705 + $0x8] sm:$0xff]
    %v708 = vld [vmem:[%s705 + $0x10] sm:$0xff]
    %v709 = vld [vmem:[%s705 + $0x18] sm:$0xff]
    %v710 = vld [vmem:[%s705 + $0x20] sm:$0xff]
    %v711 = vld [vmem:[%s705 + $0x28] sm:$0xff]
    %v712 = vld [vmem:[%s705 + $0x30] sm:$0xff]
    %v713 = vld [vmem:[%s705 + $0x38] sm:$0xff]
    %s714 = scalar_lea.vmem [#allocation9], 16
    %v715 = vld [vmem:[%s714] sm:$0xf]
    %v717 = vperm.slane %v715, 0
    %v718 = vperm.slane %v715, 1
    %v719 = vperm.slane %v715, 2
    %v720 = vperm.slane %v715, 3
    %v726 = vsel %vm98, %v704, 0
    %728 = vmatpush.msra.mxu0 0.0
    %729 = vmatpush.msra.mxu0 0.0
    %730 = vmatpush.msra.mxu0 0.0
    %731 = vmatpush.msra.mxu0 0.0
    %732 = vmatpush.msra.mxu0 0.0
    %733 = vmatpush.msra.mxu0 0.0
    %734 = vmatpush.msra.mxu0 0.0
    %735 = vmatpush.msra.mxu0 0.0
    %736 = vmatpush.msra.mxu0 0.0
    %737 = vmatpush.msra.mxu0 0.0
    %738 = vmatpush.msra.mxu0 0.0
    %739 = vmatpush.msra.mxu0 0.0
    %740 = vmatpush.msra.mxu0 0.0
    %741 = vmatpush.msra.mxu0 0.0
    %742 = vmatpush.msra.mxu0 %v710
    %743 = vmatpush.msra.mxu0 %v706
    %744 = vmatmul.f32.gmra.mxu0 %v726
    %v745 = vpop.f32.mrf.mxu0
    %v746 = vadd.f32 %v717, %v745
    %747 = vdwg.mxu0
    %748 = vmatpush.msra.mxu0 0.0
    %749 = vmatpush.msra.mxu0 0.0
    %750 = vmatpush.msra.mxu0 0.0
    %751 = vmatpush.msra.mxu0 0.0
    %752 = vmatpush.msra.mxu0 0.0
    %753 = vmatpush.msra.mxu0 0.0
    %754 = vmatpush.msra.mxu0 0.0
    %755 = vmatpush.msra.mxu0 0.0
    %756 = vmatpush.msra.mxu0 0.0
    %757 = vmatpush.msra.mxu0 0.0
    %758 = vmatpush.msra.mxu0 0.0
    %759 = vmatpush.msra.mxu0 0.0
    %760 = vmatpush.msra.mxu0 0.0
    %761 = vmatpush.msra.mxu0 0.0
    %762 = vmatpush.msra.mxu0 %v711
    %763 = vmatpush.msra.mxu0 %v707
    %764 = vmatmul.f32.gmra.mxu0 %v726
    %v765 = vpop.f32.mrf.mxu0
    %v766 = vadd.f32 %v718, %v765
    %767 = vdwg.mxu0
    %768 = vmatpush.msra.mxu0 0.0
    %769 = vmatpush.msra.mxu0 0.0
    %770 = vmatpush.msra.mxu0 0.0
    %771 = vmatpush.msra.mxu0 0.0
    %772 = vmatpush.msra.mxu0 0.0
    %773 = vmatpush.msra.mxu0 0.0
    %774 = vmatpush.msra.mxu0 0.0
    %775 = vmatpush.msra.mxu0 0.0
    %776 = vmatpush.msra.mxu0 0.0
    %777 = vmatpush.msra.mxu0 0.0
    %778 = vmatpush.msra.mxu0 0.0
    %779 = vmatpush.msra.mxu0 0.0
    %780 = vmatpush.msra.mxu0 0.0
    %781 = vmatpush.msra.mxu0 0.0
    %782 = vmatpush.msra.mxu0 %v712
    %783 = vmatpush.msra.mxu0 %v708
    %784 = vmatmul.f32.gmra.mxu0 %v726
    %v785 = vpop.f32.mrf.mxu0
    %v786 = vadd.f32 %v719, %v785
    %787 = vdwg.mxu0
    %788 = vmatpush.msra.mxu0 0.0
    %789 = vmatpush.msra.mxu0 0.0
    %790 = vmatpush.msra.mxu0 0.0
    %791 = vmatpush.msra.mxu0 0.0
    %792 = vmatpush.msra.mxu0 0.0
    %793 = vmatpush.msra.mxu0 0.0
    %794 = vmatpush.msra.mxu0 0.0
    %795 = vmatpush.msra.mxu0 0.0
    %796 = vmatpush.msra.mxu0 0.0
    %797 = vmatpush.msra.mxu0 0.0
    %798 = vmatpush.msra.mxu0 0.0
    %799 = vmatpush.msra.mxu0 0.0
    %800 = vmatpush.msra.mxu0 0.0
    %801 = vmatpush.msra.mxu0 0.0
    %802 = vmatpush.msra.mxu0 %v713
    %803 = vmatpush.msra.mxu0 %v709
    %804 = vmatmul.f32.gmra.mxu0 %v726
    %v805 = vpop.f32.mrf.mxu0
    %v806 = vadd.f32 %v720, %v805
    %807 = vdwg.mxu0
    %s808 = scalar_lea.vmem %s5, 128
    %809 = vst [vmem:[%s808] sm:$0xff] %v746
    %810 = vst [vmem:[%s808 + $0x8] sm:$0xff] %v766
    %811 = vst [vmem:[%s808 + $0x10] sm:$0xff] %v786
    %812 = vst [vmem:[%s808 + $0x18] sm:$0xff] %v806
    // Predicated region
    $region42: #{factorcl_forward.6} parent=1 // pred_check
      _
    $region43: #{factorcl_forward.6} parent=1 // pred_check_branch
      %814 = sbr.rel (0) target = $region45
    $region44: #{factorcl_forward.6} parent=1 // pred_region
      _
    $region45: #{factorcl_forward.6} parent=1 // pred_fallthru
      _
    // Predicated region
    $region46: #{factorcl_forward.6} parent=1 // pred_check
      _
    $region47: #{factorcl_forward.6} parent=1 // pred_check_branch
      %816 = sbr.rel (0) target = $region49
    $region48: #{factorcl_forward.6} parent=1 // pred_region
      _
    $region49: #{factorcl_forward.6} parent=1 // pred_fallthru
      _
    %817 = vsyncpa [#allocation3], 1
    %818 = vsyncpa [#allocation5], 1
    %819 = vsyncpa [#allocation8], 1

// kernel: factorcl_forward.5
$region0: #{factorcl_forward.5}
  #allocation0 [shape = 'u32[]', space=smem, size = 0x4, offset = 0x4, fixed_abs, tag = 'smem constant byte address 0x4 - core index']
  #allocation1 [shape = 'u32[72,128]{1,0:T(1,128)}', space=vmem, size = 0x9000, scoped, tag = 'internal scratch']
  %s0 = inlined_call_operand.hbm [shape: f32[8,32], index: 0, kind: input, shape index: {}]
  %s1 = inlined_call_operand.hbm [shape: f32[5,32,32], index: 1, kind: input, shape index: {}]
  %s2 = inlined_call_operand.hbm [shape: f32[5,1,32], index: 2, kind: input, shape index: {}]
  %s3 = inlined_call_operand.hbm [shape: f32[5,32,512], index: 3, kind: input, shape index: {}]
  %s4 = inlined_call_operand.hbm [shape: f32[5,1,512], index: 4, kind: input, shape index: {}]
  %s5 = inlined_call_operand.vmem [shape: f32[5,8,512], index: 5, kind: output, shape index: {}]
  %s6 = sld [smem:[#allocation0]]
  $region50: #{factorcl_forward.5} parent=0
    _
  %s8 = ssub.s32 1, %s6
  %s9 = scalar_select 0, %s8, %s6
  $region1: #{factorcl_forward.5} parent=0
    #allocation2 [shape = 'u8[4096]{0}', space=vmem, size = 0x1000, scoped, tag = 'input window, operand 0, single buffered']
    #allocation3 [shape = 's32[1]{0}', space=sflag, size = 0x4, scoped, tag = 'scoped memory for factorcl_forward.5']
    #allocation4 [shape = 'u8[81920]{0}', space=vmem, size = 0x14000, scoped, tag = 'input window, operand 1, single buffered']
    #allocation5 [shape = 's32[1]{0}', space=sflag, size = 0x4, scoped, tag = 'scoped memory for factorcl_forward.5']
    #allocation6 [shape = 'u8[2560]{0}', space=vmem, size = 0xc00, scoped, tag = 'input window, operand 2, single buffered']
    #allocation7 [shape = 'u8[327680]{0}', space=vmem, size = 0x50000, scoped, tag = 'input window, operand 3, single buffered']
    #allocation8 [shape = 's32[1]{0}', space=sflag, size = 0x4, scoped, tag = 'scoped memory for factorcl_forward.5']
    #allocation9 [shape = 'u8[10240]{0}', space=vmem, size = 0x2800, scoped, tag = 'input window, operand 4, single buffered']
    %10 = vsyncpa [#allocation3], 0
    %11 = vsyncpa [#allocation5], 0
    %12 = vsyncpa [#allocation8], 0
    // Predicated region
    $region2: #{factorcl_forward.5} parent=1 // pred_check
      _
    $region3: #{factorcl_forward.5} parent=1 // pred_check_branch
      %14 = sbr.rel (0) target = $region5
    $region4: #{factorcl_forward.5} parent=1 // pred_region
      %16 = vsyncadd [#allocation3], 0
      %s18 = sshll.u32 %s0, 4
      %s19 = int_to_ptr.hbm [resolvable:$true] %s18
      %s20 = sshll.u32 [#allocation2], 4
      %s21 = int_to_ptr.vmem [resolvable:$true] %s20
      %23 = dma.hbm_to_vmem [thread:$0]  %s19, 128, %s21, [#allocation3]
    $region5: #{factorcl_forward.5} parent=1 // pred_fallthru
      _
    // Predicated region
    $region6: #{factorcl_forward.5} parent=1 // pred_check
      _
    $region7: #{factorcl_forward.5} parent=1 // pred_check_branch
      %25 = sbr.rel (0) target = $region9
    $region8: #{factorcl_forward.5} parent=1 // pred_region
      %27 = vsyncadd [#allocation5], 0
      %s28 = sshll.u32 %s1, 4
      %s29 = int_to_ptr.hbm [resolvable:$true] %s28
      %s30 = sshll.u32 [#allocation4], 4
      %s31 = int_to_ptr.vmem [resolvable:$true] %s30
      %36 = dma.hbm_to_vmem [thread:$0]  %s29, 2560, %s31, [#allocation5], 128, 128, 8
    $region9: #{factorcl_forward.5} parent=1 // pred_fallthru
      _
    // Predicated region
    $region10: #{factorcl_forward.5} parent=1 // pred_check
      _
    $region11: #{factorcl_forward.5} parent=1 // pred_check_branch
      %38 = sbr.rel (0) target = $region13
    $region12: #{factorcl_forward.5} parent=1 // pred_region
      %40 = vsyncadd [#allocation5], 0
      %s41 = sshll.u32 %s2, 4
      %s42 = int_to_ptr.hbm [resolvable:$true] %s41
      %s43 = sshll.u32 [#allocation6], 4
      %s44 = int_to_ptr.vmem [resolvable:$true] %s43
      %49 = dma.hbm_to_vmem [thread:$0]  %s42, 80, %s44, [#allocation5], 16, 16, 1
    $region13: #{factorcl_forward.5} parent=1 // pred_fallthru
      _
    // Predicated region
    $region14: #{factorcl_forward.5} parent=1 // pred_check
      _
    $region15: #{factorcl_forward.5} parent=1 // pred_check_branch
      %51 = sbr.rel (0) target = $region17
    $region16: #{factorcl_forward.5} parent=1 // pred_region
      %53 = vsyncadd [#allocation8], 0
      %s54 = sshll.u32 %s3, 4
      %s55 = int_to_ptr.hbm [resolvable:$true] %s54
      %s56 = sshll.u32 [#allocation7], 4
      %s57 = int_to_ptr.vmem [resolvable:$true] %s56
      %62 = dma.hbm_to_vmem [thread:$0]  %s55, 10240, %s57, [#allocation8], 512, 512, 32
    $region17: #{factorcl_forward.5} parent=1 // pred_fallthru
      _
    // Predicated region
    $region18: #{factorcl_forward.5} parent=1 // pred_check
      _
    $region19: #{factorcl_forward.5} parent=1 // pred_check_branch
      %64 = sbr.rel (0) target = $region21
    $region20: #{factorcl_forward.5} parent=1 // pred_region
      %66 = vsyncadd [#allocation8], 0
      %s67 = sshll.u32 %s4, 4
      %s68 = int_to_ptr.hbm [resolvable:$true] %s67
      %s69 = sshll.u32 [#allocation9], 4
      %s70 = int_to_ptr.vmem [resolvable:$true] %s69
      %75 = dma.hbm_to_vmem [thread:$0]  %s68, 320, %s70, [#allocation8], 64, 64, 4
    $region21: #{factorcl_forward.5} parent=1 // pred_fallthru
      _
    // Predicated region
    $region22: #{factorcl_forward.5} parent=1 // pred_check
      _
    $region23: #{factorcl_forward.5} parent=1 // pred_check_branch
      %77 = sbr.rel (0) target = $region25
    $region24: #{factorcl_forward.5} parent=1 // pred_region
      %79 = dma.done [#allocation3], 128
    $region25: #{factorcl_forward.5} parent=1 // pred_fallthru
      _
    // Predicated region
    $region26: #{factorcl_forward.5} parent=1 // pred_check
      _
    $region27: #{factorcl_forward.5} parent=1 // pred_check_branch
      %81 = sbr.rel (0) target = $region29
    $region28: #{factorcl_forward.5} parent=1 // pred_region
      %83 = dma.done [#allocation5], 2560
    $region29: #{factorcl_forward.5} parent=1 // pred_fallthru
      _
    // Predicated region
    $region30: #{factorcl_forward.5} parent=1 // pred_check
      _
    $region31: #{factorcl_forward.5} parent=1 // pred_check_branch
      %85 = sbr.rel (0) target = $region33
    $region32: #{factorcl_forward.5} parent=1 // pred_region
      %87 = dma.done [#allocation5], 80
    $region33: #{factorcl_forward.5} parent=1 // pred_fallthru
      _
    // Predicated region
    $region34: #{factorcl_forward.5} parent=1 // pred_check
      _
    $region35: #{factorcl_forward.5} parent=1 // pred_check_branch
      %89 = sbr.rel (0) target = $region37
    $region36: #{factorcl_forward.5} parent=1 // pred_region
      %91 = dma.done [#allocation8], 10240
    $region37: #{factorcl_forward.5} parent=1 // pred_fallthru
      _
    // Predicated region
    $region38: #{factorcl_forward.5} parent=1 // pred_check
      _
    $region39: #{factorcl_forward.5} parent=1 // pred_check_branch
      %93 = sbr.rel (0) target = $region41
    $region40: #{factorcl_forward.5} parent=1 // pred_region
      %95 = dma.done [#allocation8], 320
    $region41: #{factorcl_forward.5} parent=1 // pred_fallthru
      _
    %v96 = vld [vmem:[#allocation2] sm:$0xff]
    %v97 = vmul.f32 %v96, %v96
    %vm98 = vcmask 261120
    %v99 = vsel %vm98, %v97, 0.0
    %100 = vadd.xlane.f32.xlu0 %v99
    %v101 = vpop.xlane.xlu0 %100
    %v102 = vrsqrt.pop %v101
    %v103 = vmul.f32 %v102, %v101
    %v104 = vmul.f32 %v103, %v102
    %v105 = vmul.f32 0.5, %v104
    %v106 = vsub.f32 1.5, %v105
    %v107 = vmul.f32 %v102, %v106
    %v108 = vmul.f32 %v101, %v107
    %vm109 = vcmp.eq.f32.partialorder %v101, inf
    %v110 = vsel %vm109, %v101, %v108
    %vm111 = vcmp.eq.f32.partialorder %v101, 0.0
    %v112 = vand.u32 %v101, 2147483648
    %v113 = vsel %vm111, %v112, %v110
    %v114 = vmax.f32 %v113, 1e-12
    %v115 = vrcp.pop %v114
    %v116 = vmul.f32 %v114, %v115
    %v117 = vsub.f32 1.0, %v116
    %v118 = vmul.f32 %v115, %v117
    %v119 = vadd.f32 %v115, %v118
    %vm120 = vweird.f32 %v114
    %vm121 = vweird.f32 %v115
    %vm122 = vmor %vm120, %vm121
    %v123 = vsel %vm122, %v115, %v119
    %v124 = vand.u32 2147483647, %v114
    %vm125 = vcmp.eq.f32.partialorder %v124, 8.507059e+37
    %v126 = vand.u32 %v114, 2147483648
    %v127 = vor.u32 1.1754944e-38, %v126
    %v128 = vsel %vm125, %v127, %v123
    %v129 = vmul.f32 %v96, %v128
    %v130 = vld [vmem:[#allocation4] sm:$0xff]
    %v131 = vld [vmem:[#allocation4 + $0x8] sm:$0xff]
    %v132 = vld [vmem:[#allocation4 + $0x10] sm:$0xff]
    %v133 = vld [vmem:[#allocation4 + $0x18] sm:$0xff]
    %v134 = vld [vmem:[#allocation6] sm:$0x1]
    %v136 = vperm.slane %v134, 0
    %v139 = vsel %vm98, %v129, 0
    %141 = vmatpush.msra.mxu0 0.0
    %142 = vmatpush.msra.mxu0 0.0
    %143 = vmatpush.msra.mxu0 0.0
    %144 = vmatpush.msra.mxu0 0.0
    %145 = vmatpush.msra.mxu0 0.0
    %146 = vmatpush.msra.mxu0 0.0
    %147 = vmatpush.msra.mxu0 0.0
    %148 = vmatpush.msra.mxu0 0.0
    %149 = vmatpush.msra.mxu0 0.0
    %150 = vmatpush.msra.mxu0 0.0
    %151 = vmatpush.msra.mxu0 0.0
    %152 = vmatpush.msra.mxu0 0.0
    %153 = vmatpush.msra.mxu0 %v133
    %154 = vmatpush.msra.mxu0 %v132
    %155 = vmatpush.msra.mxu0 %v131
    %156 = vmatpush.msra.mxu0 %v130
    %157 = vmatmul.f32.gmra.mxu0 %v139
    %v158 = vpop.f32.mrf.mxu0
    %v159 = vadd.f32 %v136, %v158
    %160 = vdwg.mxu0
    %v161 = vmax.f32 %v159, 0.0
    %v162 = vld [vmem:[#allocation7] sm:$0xff]
    %v163 = vld [vmem:[#allocation7 + $0x8] sm:$0xff]
    %v164 = vld [vmem:[#allocation7 + $0x10] sm:$0xff]
    %v165 = vld [vmem:[#allocation7 + $0x18] sm:$0xff]
    %v166 = vld [vmem:[#allocation7 + $0x20] sm:$0xff]
    %v167 = vld [vmem:[#allocation7 + $0x28] sm:$0xff]
    %v168 = vld [vmem:[#allocation7 + $0x30] sm:$0xff]
    %v169 = vld [vmem:[#allocation7 + $0x38] sm:$0xff]
    %v170 = vld [vmem:[#allocation7 + $0x40] sm:$0xff]
    %v171 = vld [vmem:[#allocation7 + $0x48] sm:$0xff]
    %v172 = vld [vmem:[#allocation7 + $0x50] sm:$0xff]
    %v173 = vld [vmem:[#allocation7 + $0x58] sm:$0xff]
    %v174 = vld [vmem:[#allocation7 + $0x60] sm:$0xff]
    %v175 = vld [vmem:[#allocation7 + $0x68] sm:$0xff]
    %v176 = vld [vmem:[#allocation7 + $0x70] sm:$0xff]
    %v177 = vld [vmem:[#allocation7 + $0x78] sm:$0xff]
    %v178 = vld [vmem:[#allocation9] sm:$0xf]
    %v180 = vperm.slane %v178, 0
    %v181 = vperm.slane %v178, 1
    %v182 = vperm.slane %v178, 2
    %v183 = vperm.slane %v178, 3
    %v189 = vsel %vm98, %v161, 0
    %191 = vmatpush.msra.mxu0 0.0
    %192 = vmatpush.msra.mxu0 0.0
    %193 = vmatpush.msra.mxu0 0.0
    %194 = vmatpush.msra.mxu0 0.0
    %195 = vmatpush.msra.mxu0 0.0
    %196 = vmatpush.msra.mxu0 0.0
    %197 = vmatpush.msra.mxu0 0.0
    %198 = vmatpush.msra.mxu0 0.0
    %199 = vmatpush.msra.mxu0 0.0
    %200 = vmatpush.msra.mxu0 0.0
    %201 = vmatpush.msra.mxu0 0.0
    %202 = vmatpush.msra.mxu0 0.0
    %203 = vmatpush.msra.mxu0 %v174
    %204 = vmatpush.msra.mxu0 %v170
    %205 = vmatpush.msra.mxu0 %v166
    %206 = vmatpush.msra.mxu0 %v162
    %207 = vmatmul.f32.gmra.mxu0 %v189
    %v208 = vpop.f32.mrf.mxu0
    %v209 = vadd.f32 %v180, %v208
    %210 = vdwg.mxu0
    %211 = vmatpush.msra.mxu0 0.0
    %212 = vmatpush.msra.mxu0 0.0
    %213 = vmatpush.msra.mxu0 0.0
    %214 = vmatpush.msra.mxu0 0.0
    %215 = vmatpush.msra.mxu0 0.0
    %216 = vmatpush.msra.mxu0 0.0
    %217 = vmatpush.msra.mxu0 0.0
    %218 = vmatpush.msra.mxu0 0.0
    %219 = vmatpush.msra.mxu0 0.0
    %220 = vmatpush.msra.mxu0 0.0
    %221 = vmatpush.msra.mxu0 0.0
    %222 = vmatpush.msra.mxu0 0.0
    %223 = vmatpush.msra.mxu0 %v175
    %224 = vmatpush.msra.mxu0 %v171
    %225 = vmatpush.msra.mxu0 %v167
    %226 = vmatpush.msra.mxu0 %v163
    %227 = vmatmul.f32.gmra.mxu0 %v189
    %v228 = vpop.f32.mrf.mxu0
    %v229 = vadd.f32 %v181, %v228
    %230 = vdwg.mxu0
    %231 = vmatpush.msra.mxu0 0.0
    %232 = vmatpush.msra.mxu0 0.0
    %233 = vmatpush.msra.mxu0 0.0
    %234 = vmatpush.msra.mxu0 0.0
    %235 = vmatpush.msra.mxu0 0.0
    %236 = vmatpush.msra.mxu0 0.0
    %237 = vmatpush.msra.mxu0 0.0
    %238 = vmatpush.msra.mxu0 0.0
    %239 = vmatpush.msra.mxu0 0.0
    %240 = vmatpush.msra.mxu0 0.0
    %241 = vmatpush.msra.mxu0 0.0
    %242 = vmatpush.msra.mxu0 0.0
    %243 = vmatpush.msra.mxu0 %v176
    %244 = vmatpush.msra.mxu0 %v172
    %245 = vmatpush.msra.mxu0 %v168
    %246 = vmatpush.msra.mxu0 %v164
    %247 = vmatmul.f32.gmra.mxu0 %v189
    %v248 = vpop.f32.mrf.mxu0
    %v249 = vadd.f32 %v182, %v248
    %250 = vdwg.mxu0
    %251 = vmatpush.msra.mxu0 0.0
    %252 = vmatpush.msra.mxu0 0.0
    %253 = vmatpush.msra.mxu0 0.0
    %254 = vmatpush.msra.mxu0 0.0
    %255 = vmatpush.msra.mxu0 0.0
    %256 = vmatpush.msra.mxu0 0.0
    %257 = vmatpush.msra.mxu0 0.0
    %258 = vmatpush.msra.mxu0 0.0
    %259 = vmatpush.msra.mxu0 0.0
    %260 = vmatpush.msra.mxu0 0.0
    %261 = vmatpush.msra.mxu0 0.0
    %262 = vmatpush.msra.mxu0 0.0
    %263 = vmatpush.msra.mxu0 %v177
    %264 = vmatpush.msra.mxu0 %v173
    %265 = vmatpush.msra.mxu0 %v169
    %266 = vmatpush.msra.mxu0 %v165
    %267 = vmatmul.f32.gmra.mxu0 %v189
    %v268 = vpop.f32.mrf.mxu0
    %v269 = vadd.f32 %v183, %v268
    %270 = vdwg.mxu0
    %271 = vst [vmem:[%s5] sm:$0xff] %v209
    %272 = vst [vmem:[%s5 + $0x8] sm:$0xff] %v229
    %273 = vst [vmem:[%s5 + $0x10] sm:$0xff] %v249
    %274 = vst [vmem:[%s5 + $0x18] sm:$0xff] %v269
    %s275 = scalar_lea.vmem [#allocation4], 32
    %v276 = vld [vmem:[%s275] sm:$0xff]
    %v277 = vld [vmem:[%s275 + $0x8] sm:$0xff]
    %v278 = vld [vmem:[%s275 + $0x10] sm:$0xff]
    %v279 = vld [vmem:[%s275 + $0x18] sm:$0xff]
    %s280 = scalar_lea.vmem [#allocation6], 1
    %v281 = vld [vmem:[%s280] sm:$0x1]
    %v283 = vperm.slane %v281, 0
    %285 = vmatpush.msra.mxu0 0.0
    %286 = vmatpush.msra.mxu0 0.0
    %287 = vmatpush.msra.mxu0 0.0
    %288 = vmatpush.msra.mxu0 0.0
    %289 = vmatpush.msra.mxu0 0.0
    %290 = vmatpush.msra.mxu0 0.0
    %291 = vmatpush.msra.mxu0 0.0
    %292 = vmatpush.msra.mxu0 0.0
    %293 = vmatpush.msra.mxu0 0.0
    %294 = vmatpush.msra.mxu0 0.0
    %295 = vmatpush.msra.mxu0 0.0
    %296 = vmatpush.msra.mxu0 0.0
    %297 = vmatpush.msra.mxu0 %v279
    %298 = vmatpush.msra.mxu0 %v278
    %299 = vmatpush.msra.mxu0 %v277
    %300 = vmatpush.msra.mxu0 %v276
    %301 = vmatmul.f32.gmra.mxu0 %v139
    %v302 = vpop.f32.mrf.mxu0
    %v303 = vadd.f32 %v283, %v302
    %304 = vdwg.mxu0
    %v305 = vmax.f32 %v303, 0.0
    %s306 = scalar_lea.vmem [#allocation7], 128
    %v307 = vld [vmem:[%s306] sm:$0xff]
    %v308 = vld [vmem:[%s306 + $0x8] sm:$0xff]
    %v309 = vld [vmem:[%s306 + $0x10] sm:$0xff]
    %v310 = vld [vmem:[%s306 + $0x18] sm:$0xff]
    %v311 = vld [vmem:[%s306 + $0x20] sm:$0xff]
    %v312 = vld [vmem:[%s306 + $0x28] sm:$0xff]
    %v313 = vld [vmem:[%s306 + $0x30] sm:$0xff]
    %v314 = vld [vmem:[%s306 + $0x38] sm:$0xff]
    %v315 = vld [vmem:[%s306 + $0x40] sm:$0xff]
    %v316 = vld [vmem:[%s306 + $0x48] sm:$0xff]
    %v317 = vld [vmem:[%s306 + $0x50] sm:$0xff]
    %v318 = vld [vmem:[%s306 + $0x58] sm:$0xff]
    %v319 = vld [vmem:[%s306 + $0x60] sm:$0xff]
    %v320 = vld [vmem:[%s306 + $0x68] sm:$0xff]
    %v321 = vld [vmem:[%s306 + $0x70] sm:$0xff]
    %v322 = vld [vmem:[%s306 + $0x78] sm:$0xff]
    %s323 = scalar_lea.vmem [#allocation9], 4
    %v324 = vld [vmem:[%s323] sm:$0xf]
    %v326 = vperm.slane %v324, 0
    %v327 = vperm.slane %v324, 1
    %v328 = vperm.slane %v324, 2
    %v329 = vperm.slane %v324, 3
    %v335 = vsel %vm98, %v305, 0
    %337 = vmatpush.msra.mxu0 0.0
    %338 = vmatpush.msra.mxu0 0.0
    %339 = vmatpush.msra.mxu0 0.0
    %340 = vmatpush.msra.mxu0 0.0
    %341 = vmatpush.msra.mxu0 0.0
    %342 = vmatpush.msra.mxu0 0.0
    %343 = vmatpush.msra.mxu0 0.0
    %344 = vmatpush.msra.mxu0 0.0
    %345 = vmatpush.msra.mxu0 0.0
    %346 = vmatpush.msra.mxu0 0.0
    %347 = vmatpush.msra.mxu0 0.0
    %348 = vmatpush.msra.mxu0 0.0
    %349 = vmatpush.msra.mxu0 %v319
    %350 = vmatpush.msra.mxu0 %v315
    %351 = vmatpush.msra.mxu0 %v311
    %352 = vmatpush.msra.mxu0 %v307
    %353 = vmatmul.f32.gmra.mxu0 %v335
    %v354 = vpop.f32.mrf.mxu0
    %v355 = vadd.f32 %v326, %v354
    %356 = vdwg.mxu0
    %357 = vmatpush.msra.mxu0 0.0
    %358 = vmatpush.msra.mxu0 0.0
    %359 = vmatpush.msra.mxu0 0.0
    %360 = vmatpush.msra.mxu0 0.0
    %361 = vmatpush.msra.mxu0 0.0
    %362 = vmatpush.msra.mxu0 0.0
    %363 = vmatpush.msra.mxu0 0.0
    %364 = vmatpush.msra.mxu0 0.0
    %365 = vmatpush.msra.mxu0 0.0
    %366 = vmatpush.msra.mxu0 0.0
    %367 = vmatpush.msra.mxu0 0.0
    %368 = vmatpush.msra.mxu0 0.0
    %369 = vmatpush.msra.mxu0 %v320
    %370 = vmatpush.msra.mxu0 %v316
    %371 = vmatpush.msra.mxu0 %v312
    %372 = vmatpush.msra.mxu0 %v308
    %373 = vmatmul.f32.gmra.mxu0 %v335
    %v374 = vpop.f32.mrf.mxu0
    %v375 = vadd.f32 %v327, %v374
    %376 = vdwg.mxu0
    %377 = vmatpush.msra.mxu0 0.0
    %378 = vmatpush.msra.mxu0 0.0
    %379 = vmatpush.msra.mxu0 0.0
    %380 = vmatpush.msra.mxu0 0.0
    %381 = vmatpush.msra.mxu0 0.0
    %382 = vmatpush.msra.mxu0 0.0
    %383 = vmatpush.msra.mxu0 0.0
    %384 = vmatpush.msra.mxu0 0.0
    %385 = vmatpush.msra.mxu0 0.0
    %386 = vmatpush.msra.mxu0 0.0
    %387 = vmatpush.msra.mxu0 0.0
    %388 = vmatpush.msra.mxu0 0.0
    %389 = vmatpush.msra.mxu0 %v321
    %390 = vmatpush.msra.mxu0 %v317
    %391 = vmatpush.msra.mxu0 %v313
    %392 = vmatpush.msra.mxu0 %v309
    %393 = vmatmul.f32.gmra.mxu0 %v335
    %v394 = vpop.f32.mrf.mxu0
    %v395 = vadd.f32 %v328, %v394
    %396 = vdwg.mxu0
    %397 = vmatpush.msra.mxu0 0.0
    %398 = vmatpush.msra.mxu0 0.0
    %399 = vmatpush.msra.mxu0 0.0
    %400 = vmatpush.msra.mxu0 0.0
    %401 = vmatpush.msra.mxu0 0.0
    %402 = vmatpush.msra.mxu0 0.0
    %403 = vmatpush.msra.mxu0 0.0
    %404 = vmatpush.msra.mxu0 0.0
    %405 = vmatpush.msra.mxu0 0.0
    %406 = vmatpush.msra.mxu0 0.0
    %407 = vmatpush.msra.mxu0 0.0
    %408 = vmatpush.msra.mxu0 0.0
    %409 = vmatpush.msra.mxu0 %v322
    %410 = vmatpush.msra.mxu0 %v318
    %411 = vmatpush.msra.mxu0 %v314
    %412 = vmatpush.msra.mxu0 %v310
    %413 = vmatmul.f32.gmra.mxu0 %v335
    %v414 = vpop.f32.mrf.mxu0
    %v415 = vadd.f32 %v329, %v414
    %416 = vdwg.mxu0
    %s417 = scalar_lea.vmem %s5, 32
    %418 = vst [vmem:[%s417] sm:$0xff] %v355
    %419 = vst [vmem:[%s417 + $0x8] sm:$0xff] %v375
    %420 = vst [vmem:[%s417 + $0x10] sm:$0xff] %v395
    %421 = vst [vmem:[%s417 + $0x18] sm:$0xff] %v415
    %s422 = scalar_lea.vmem [#allocation4], 64
    %v423 = vld [vmem:[%s422] sm:$0xff]
    %v424 = vld [vmem:[%s422 + $0x8] sm:$0xff]
    %v425 = vld [vmem:[%s422 + $0x10] sm:$0xff]
    %v426 = vld [vmem:[%s422 + $0x18] sm:$0xff]
    %s427 = scalar_lea.vmem [#allocation6], 2
    %v428 = vld [vmem:[%s427] sm:$0x1]
    %v430 = vperm.slane %v428, 0
    %432 = vmatpush.msra.mxu0 0.0
    %433 = vmatpush.msra.mxu0 0.0
    %434 = vmatpush.msra.mxu0 0.0
    %435 = vmatpush.msra.mxu0 0.0
    %436 = vmatpush.msra.mxu0 0.0
    %437 = vmatpush.msra.mxu0 0.0
    %438 = vmatpush.msra.mxu0 0.0
    %439 = vmatpush.msra.mxu0 0.0
    %440 = vmatpush.msra.mxu0 0.0
    %441 = vmatpush.msra.mxu0 0.0
    %442 = vmatpush.msra.mxu0 0.0
    %443 = vmatpush.msra.mxu0 0.0
    %444 = vmatpush.msra.mxu0 %v426
    %445 = vmatpush.msra.mxu0 %v425
    %446 = vmatpush.msra.mxu0 %v424
    %447 = vmatpush.msra.mxu0 %v423
    %448 = vmatmul.f32.gmra.mxu0 %v139
    %v449 = vpop.f32.mrf.mxu0
    %v450 = vadd.f32 %v430, %v449
    %451 = vdwg.mxu0
    %v452 = vmax.f32 %v450, 0.0
    %s453 = scalar_lea.vmem [#allocation7], 256
    %v454 = vld [vmem:[%s453] sm:$0xff]
    %v455 = vld [vmem:[%s453 + $0x8] sm:$0xff]
    %v456 = vld [vmem:[%s453 + $0x10] sm:$0xff]
    %v457 = vld [vmem:[%s453 + $0x18] sm:$0xff]
    %v458 = vld [vmem:[%s453 + $0x20] sm:$0xff]
    %v459 = vld [vmem:[%s453 + $0x28] sm:$0xff]
    %v460 = vld [vmem:[%s453 + $0x30] sm:$0xff]
    %v461 = vld [vmem:[%s453 + $0x38] sm:$0xff]
    %v462 = vld [vmem:[%s453 + $0x40] sm:$0xff]
    %v463 = vld [vmem:[%s453 + $0x48] sm:$0xff]
    %v464 = vld [vmem:[%s453 + $0x50] sm:$0xff]
    %v465 = vld [vmem:[%s453 + $0x58] sm:$0xff]
    %v466 = vld [vmem:[%s453 + $0x60] sm:$0xff]
    %v467 = vld [vmem:[%s453 + $0x68] sm:$0xff]
    %v468 = vld [vmem:[%s453 + $0x70] sm:$0xff]
    %v469 = vld [vmem:[%s453 + $0x78] sm:$0xff]
    %s470 = scalar_lea.vmem [#allocation9], 8
    %v471 = vld [vmem:[%s470] sm:$0xf]
    %v473 = vperm.slane %v471, 0
    %v474 = vperm.slane %v471, 1
    %v475 = vperm.slane %v471, 2
    %v476 = vperm.slane %v471, 3
    %v482 = vsel %vm98, %v452, 0
    %484 = vmatpush.msra.mxu0 0.0
    %485 = vmatpush.msra.mxu0 0.0
    %486 = vmatpush.msra.mxu0 0.0
    %487 = vmatpush.msra.mxu0 0.0
    %488 = vmatpush.msra.mxu0 0.0
    %489 = vmatpush.msra.mxu0 0.0
    %490 = vmatpush.msra.mxu0 0.0
    %491 = vmatpush.msra.mxu0 0.0
    %492 = vmatpush.msra.mxu0 0.0
    %493 = vmatpush.msra.mxu0 0.0
    %494 = vmatpush.msra.mxu0 0.0
    %495 = vmatpush.msra.mxu0 0.0
    %496 = vmatpush.msra.mxu0 %v466
    %497 = vmatpush.msra.mxu0 %v462
    %498 = vmatpush.msra.mxu0 %v458
    %499 = vmatpush.msra.mxu0 %v454
    %500 = vmatmul.f32.gmra.mxu0 %v482
    %v501 = vpop.f32.mrf.mxu0
    %v502 = vadd.f32 %v473, %v501
    %503 = vdwg.mxu0
    %504 = vmatpush.msra.mxu0 0.0
    %505 = vmatpush.msra.mxu0 0.0
    %506 = vmatpush.msra.mxu0 0.0
    %507 = vmatpush.msra.mxu0 0.0
    %508 = vmatpush.msra.mxu0 0.0
    %509 = vmatpush.msra.mxu0 0.0
    %510 = vmatpush.msra.mxu0 0.0
    %511 = vmatpush.msra.mxu0 0.0
    %512 = vmatpush.msra.mxu0 0.0
    %513 = vmatpush.msra.mxu0 0.0
    %514 = vmatpush.msra.mxu0 0.0
    %515 = vmatpush.msra.mxu0 0.0
    %516 = vmatpush.msra.mxu0 %v467
    %517 = vmatpush.msra.mxu0 %v463
    %518 = vmatpush.msra.mxu0 %v459
    %519 = vmatpush.msra.mxu0 %v455
    %520 = vmatmul.f32.gmra.mxu0 %v482
    %v521 = vpop.f32.mrf.mxu0
    %v522 = vadd.f32 %v474, %v521
    %523 = vdwg.mxu0
    %524 = vmatpush.msra.mxu0 0.0
    %525 = vmatpush.msra.mxu0 0.0
    %526 = vmatpush.msra.mxu0 0.0
    %527 = vmatpush.msra.mxu0 0.0
    %528 = vmatpush.msra.mxu0 0.0
    %529 = vmatpush.msra.mxu0 0.0
    %530 = vmatpush.msra.mxu0 0.0
    %531 = vmatpush.msra.mxu0 0.0
    %532 = vmatpush.msra.mxu0 0.0
    %533 = vmatpush.msra.mxu0 0.0
    %534 = vmatpush.msra.mxu0 0.0
    %535 = vmatpush.msra.mxu0 0.0
    %536 = vmatpush.msra.mxu0 %v468
    %537 = vmatpush.msra.mxu0 %v464
    %538 = vmatpush.msra.mxu0 %v460
    %539 = vmatpush.msra.mxu0 %v456
    %540 = vmatmul.f32.gmra.mxu0 %v482
    %v541 = vpop.f32.mrf.mxu0
    %v542 = vadd.f32 %v475, %v541
    %543 = vdwg.mxu0
    %544 = vmatpush.msra.mxu0 0.0
    %545 = vmatpush.msra.mxu0 0.0
    %546 = vmatpush.msra.mxu0 0.0
    %547 = vmatpush.msra.mxu0 0.0
    %548 = vmatpush.msra.mxu0 0.0
    %549 = vmatpush.msra.mxu0 0.0
    %550 = vmatpush.msra.mxu0 0.0
    %551 = vmatpush.msra.mxu0 0.0
    %552 = vmatpush.msra.mxu0 0.0
    %553 = vmatpush.msra.mxu0 0.0
    %554 = vmatpush.msra.mxu0 0.0
    %555 = vmatpush.msra.mxu0 0.0
    %556 = vmatpush.msra.mxu0 %v469
    %557 = vmatpush.msra.mxu0 %v465
    %558 = vmatpush.msra.mxu0 %v461
    %559 = vmatpush.msra.mxu0 %v457
    %560 = vmatmul.f32.gmra.mxu0 %v482
    %v561 = vpop.f32.mrf.mxu0
    %v562 = vadd.f32 %v476, %v561
    %563 = vdwg.mxu0
    %s564 = scalar_lea.vmem %s5, 64
    %565 = vst [vmem:[%s564] sm:$0xff] %v502
    %566 = vst [vmem:[%s564 + $0x8] sm:$0xff] %v522
    %567 = vst [vmem:[%s564 + $0x10] sm:$0xff] %v542
    %568 = vst [vmem:[%s564 + $0x18] sm:$0xff] %v562
    %s569 = scalar_lea.vmem [#allocation4], 96
    %v570 = vld [vmem:[%s569] sm:$0xff]
    %v571 = vld [vmem:[%s569 + $0x8] sm:$0xff]
    %v572 = vld [vmem:[%s569 + $0x10] sm:$0xff]
    %v573 = vld [vmem:[%s569 + $0x18] sm:$0xff]
    %s574 = scalar_lea.vmem [#allocation6], 3
    %v575 = vld [vmem:[%s574] sm:$0x1]
    %v577 = vperm.slane %v575, 0
    %579 = vmatpush.msra.mxu0 0.0
    %580 = vmatpush.msra.mxu0 0.0
    %581 = vmatpush.msra.mxu0 0.0
    %582 = vmatpush.msra.mxu0 0.0
    %583 = vmatpush.msra.mxu0 0.0
    %584 = vmatpush.msra.mxu0 0.0
    %585 = vmatpush.msra.mxu0 0.0
    %586 = vmatpush.msra.mxu0 0.0
    %587 = vmatpush.msra.mxu0 0.0
    %588 = vmatpush.msra.mxu0 0.0
    %589 = vmatpush.msra.mxu0 0.0
    %590 = vmatpush.msra.mxu0 0.0
    %591 = vmatpush.msra.mxu0 %v573
    %592 = vmatpush.msra.mxu0 %v572
    %593 = vmatpush.msra.mxu0 %v571
    %594 = vmatpush.msra.mxu0 %v570
    %595 = vmatmul.f32.gmra.mxu0 %v139
    %v596 = vpop.f32.mrf.mxu0
    %v597 = vadd.f32 %v577, %v596
    %598 = vdwg.mxu0
    %v599 = vmax.f32 %v597, 0.0
    %s600 = scalar_lea.vmem [#allocation7], 384
    %v601 = vld [vmem:[%s600] sm:$0xff]
    %v602 = vld [vmem:[%s600 + $0x8] sm:$0xff]
    %v603 = vld [vmem:[%s600 + $0x10] sm:$0xff]
    %v604 = vld [vmem:[%s600 + $0x18] sm:$0xff]
    %v605 = vld [vmem:[%s600 + $0x20] sm:$0xff]
    %v606 = vld [vmem:[%s600 + $0x28] sm:$0xff]
    %v607 = vld [vmem:[%s600 + $0x30] sm:$0xff]
    %v608 = vld [vmem:[%s600 + $0x38] sm:$0xff]
    %v609 = vld [vmem:[%s600 + $0x40] sm:$0xff]
    %v610 = vld [vmem:[%s600 + $0x48] sm:$0xff]
    %v611 = vld [vmem:[%s600 + $0x50] sm:$0xff]
    %v612 = vld [vmem:[%s600 + $0x58] sm:$0xff]
    %v613 = vld [vmem:[%s600 + $0x60] sm:$0xff]
    %v614 = vld [vmem:[%s600 + $0x68] sm:$0xff]
    %v615 = vld [vmem:[%s600 + $0x70] sm:$0xff]
    %v616 = vld [vmem:[%s600 + $0x78] sm:$0xff]
    %s617 = scalar_lea.vmem [#allocation9], 12
    %v618 = vld [vmem:[%s617] sm:$0xf]
    %v620 = vperm.slane %v618, 0
    %v621 = vperm.slane %v618, 1
    %v622 = vperm.slane %v618, 2
    %v623 = vperm.slane %v618, 3
    %v629 = vsel %vm98, %v599, 0
    %631 = vmatpush.msra.mxu0 0.0
    %632 = vmatpush.msra.mxu0 0.0
    %633 = vmatpush.msra.mxu0 0.0
    %634 = vmatpush.msra.mxu0 0.0
    %635 = vmatpush.msra.mxu0 0.0
    %636 = vmatpush.msra.mxu0 0.0
    %637 = vmatpush.msra.mxu0 0.0
    %638 = vmatpush.msra.mxu0 0.0
    %639 = vmatpush.msra.mxu0 0.0
    %640 = vmatpush.msra.mxu0 0.0
    %641 = vmatpush.msra.mxu0 0.0
    %642 = vmatpush.msra.mxu0 0.0
    %643 = vmatpush.msra.mxu0 %v613
    %644 = vmatpush.msra.mxu0 %v609
    %645 = vmatpush.msra.mxu0 %v605
    %646 = vmatpush.msra.mxu0 %v601
    %647 = vmatmul.f32.gmra.mxu0 %v629
    %v648 = vpop.f32.mrf.mxu0
    %v649 = vadd.f32 %v620, %v648
    %650 = vdwg.mxu0
    %651 = vmatpush.msra.mxu0 0.0
    %652 = vmatpush.msra.mxu0 0.0
    %653 = vmatpush.msra.mxu0 0.0
    %654 = vmatpush.msra.mxu0 0.0
    %655 = vmatpush.msra.mxu0 0.0
    %656 = vmatpush.msra.mxu0 0.0
    %657 = vmatpush.msra.mxu0 0.0
    %658 = vmatpush.msra.mxu0 0.0
    %659 = vmatpush.msra.mxu0 0.0
    %660 = vmatpush.msra.mxu0 0.0
    %661 = vmatpush.msra.mxu0 0.0
    %662 = vmatpush.msra.mxu0 0.0
    %663 = vmatpush.msra.mxu0 %v614
    %664 = vmatpush.msra.mxu0 %v610
    %665 = vmatpush.msra.mxu0 %v606
    %666 = vmatpush.msra.mxu0 %v602
    %667 = vmatmul.f32.gmra.mxu0 %v629
    %v668 = vpop.f32.mrf.mxu0
    %v669 = vadd.f32 %v621, %v668
    %670 = vdwg.mxu0
    %671 = vmatpush.msra.mxu0 0.0
    %672 = vmatpush.msra.mxu0 0.0
    %673 = vmatpush.msra.mxu0 0.0
    %674 = vmatpush.msra.mxu0 0.0
    %675 = vmatpush.msra.mxu0 0.0
    %676 = vmatpush.msra.mxu0 0.0
    %677 = vmatpush.msra.mxu0 0.0
    %678 = vmatpush.msra.mxu0 0.0
    %679 = vmatpush.msra.mxu0 0.0
    %680 = vmatpush.msra.mxu0 0.0
    %681 = vmatpush.msra.mxu0 0.0
    %682 = vmatpush.msra.mxu0 0.0
    %683 = vmatpush.msra.mxu0 %v615
    %684 = vmatpush.msra.mxu0 %v611
    %685 = vmatpush.msra.mxu0 %v607
    %686 = vmatpush.msra.mxu0 %v603
    %687 = vmatmul.f32.gmra.mxu0 %v629
    %v688 = vpop.f32.mrf.mxu0
    %v689 = vadd.f32 %v622, %v688
    %690 = vdwg.mxu0
    %691 = vmatpush.msra.mxu0 0.0
    %692 = vmatpush.msra.mxu0 0.0
    %693 = vmatpush.msra.mxu0 0.0
    %694 = vmatpush.msra.mxu0 0.0
    %695 = vmatpush.msra.mxu0 0.0
    %696 = vmatpush.msra.mxu0 0.0
    %697 = vmatpush.msra.mxu0 0.0
    %698 = vmatpush.msra.mxu0 0.0
    %699 = vmatpush.msra.mxu0 0.0
    %700 = vmatpush.msra.mxu0 0.0
    %701 = vmatpush.msra.mxu0 0.0
    %702 = vmatpush.msra.mxu0 0.0
    %703 = vmatpush.msra.mxu0 %v616
    %704 = vmatpush.msra.mxu0 %v612
    %705 = vmatpush.msra.mxu0 %v608
    %706 = vmatpush.msra.mxu0 %v604
    %707 = vmatmul.f32.gmra.mxu0 %v629
    %v708 = vpop.f32.mrf.mxu0
    %v709 = vadd.f32 %v623, %v708
    %710 = vdwg.mxu0
    %s711 = scalar_lea.vmem %s5, 96
    %712 = vst [vmem:[%s711] sm:$0xff] %v649
    %713 = vst [vmem:[%s711 + $0x8] sm:$0xff] %v669
    %714 = vst [vmem:[%s711 + $0x10] sm:$0xff] %v689
    %715 = vst [vmem:[%s711 + $0x18] sm:$0xff] %v709
    %s716 = scalar_lea.vmem [#allocation4], 128
    %v717 = vld [vmem:[%s716] sm:$0xff]
    %v718 = vld [vmem:[%s716 + $0x8] sm:$0xff]
    %v719 = vld [vmem:[%s716 + $0x10] sm:$0xff]
    %v720 = vld [vmem:[%s716 + $0x18] sm:$0xff]
    %s721 = scalar_lea.vmem [#allocation6], 4
    %v722 = vld [vmem:[%s721] sm:$0x1]
    %v724 = vperm.slane %v722, 0
    %726 = vmatpush.msra.mxu0 0.0
    %727 = vmatpush.msra.mxu0 0.0
    %728 = vmatpush.msra.mxu0 0.0
    %729 = vmatpush.msra.mxu0 0.0
    %730 = vmatpush.msra.mxu0 0.0
    %731 = vmatpush.msra.mxu0 0.0
    %732 = vmatpush.msra.mxu0 0.0
    %733 = vmatpush.msra.mxu0 0.0
    %734 = vmatpush.msra.mxu0 0.0
    %735 = vmatpush.msra.mxu0 0.0
    %736 = vmatpush.msra.mxu0 0.0
    %737 = vmatpush.msra.mxu0 0.0
    %738 = vmatpush.msra.mxu0 %v720
    %739 = vmatpush.msra.mxu0 %v719
    %740 = vmatpush.msra.mxu0 %v718
    %741 = vmatpush.msra.mxu0 %v717
    %742 = vmatmul.f32.gmra.mxu0 %v139
    %v743 = vpop.f32.mrf.mxu0
    %v744 = vadd.f32 %v724, %v743
    %745 = vdwg.mxu0
    %v746 = vmax.f32 %v744, 0.0
    %s747 = scalar_lea.vmem [#allocation7], 512
    %v748 = vld [vmem:[%s747] sm:$0xff]
    %v749 = vld [vmem:[%s747 + $0x8] sm:$0xff]
    %v750 = vld [vmem:[%s747 + $0x10] sm:$0xff]
    %v751 = vld [vmem:[%s747 + $0x18] sm:$0xff]
    %v752 = vld [vmem:[%s747 + $0x20] sm:$0xff]
    %v753 = vld [vmem:[%s747 + $0x28] sm:$0xff]
    %v754 = vld [vmem:[%s747 + $0x30] sm:$0xff]
    %v755 = vld [vmem:[%s747 + $0x38] sm:$0xff]
    %v756 = vld [vmem:[%s747 + $0x40] sm:$0xff]
    %v757 = vld [vmem:[%s747 + $0x48] sm:$0xff]
    %v758 = vld [vmem:[%s747 + $0x50] sm:$0xff]
    %v759 = vld [vmem:[%s747 + $0x58] sm:$0xff]
    %v760 = vld [vmem:[%s747 + $0x60] sm:$0xff]
    %v761 = vld [vmem:[%s747 + $0x68] sm:$0xff]
    %v762 = vld [vmem:[%s747 + $0x70] sm:$0xff]
    %v763 = vld [vmem:[%s747 + $0x78] sm:$0xff]
    %s764 = scalar_lea.vmem [#allocation9], 16
    %v765 = vld [vmem:[%s764] sm:$0xf]
    %v767 = vperm.slane %v765, 0
    %v768 = vperm.slane %v765, 1
    %v769 = vperm.slane %v765, 2
    %v770 = vperm.slane %v765, 3
    %v776 = vsel %vm98, %v746, 0
    %778 = vmatpush.msra.mxu0 0.0
    %779 = vmatpush.msra.mxu0 0.0
    %780 = vmatpush.msra.mxu0 0.0
    %781 = vmatpush.msra.mxu0 0.0
    %782 = vmatpush.msra.mxu0 0.0
    %783 = vmatpush.msra.mxu0 0.0
    %784 = vmatpush.msra.mxu0 0.0
    %785 = vmatpush.msra.mxu0 0.0
    %786 = vmatpush.msra.mxu0 0.0
    %787 = vmatpush.msra.mxu0 0.0
    %788 = vmatpush.msra.mxu0 0.0
    %789 = vmatpush.msra.mxu0 0.0
    %790 = vmatpush.msra.mxu0 %v760
    %791 = vmatpush.msra.mxu0 %v756
    %792 = vmatpush.msra.mxu0 %v752
    %793 = vmatpush.msra.mxu0 %v748
    %794 = vmatmul.f32.gmra.mxu0 %v776
    %v795 = vpop.f32.mrf.mxu0
    %v796 = vadd.f32 %v767, %v795
    %797 = vdwg.mxu0
    %798 = vmatpush.msra.mxu0 0.0
    %799 = vmatpush.msra.mxu0 0.0
    %800 = vmatpush.msra.mxu0 0.0
    %801 = vmatpush.msra.mxu0 0.0
    %802 = vmatpush.msra.mxu0 0.0
    %803 = vmatpush.msra.mxu0 0.0
    %804 = vmatpush.msra.mxu0 0.0
    %805 = vmatpush.msra.mxu0 0.0
    %806 = vmatpush.msra.mxu0 0.0
    %807 = vmatpush.msra.mxu0 0.0
    %808 = vmatpush.msra.mxu0 0.0
    %809 = vmatpush.msra.mxu0 0.0
    %810 = vmatpush.msra.mxu0 %v761
    %811 = vmatpush.msra.mxu0 %v757
    %812 = vmatpush.msra.mxu0 %v753
    %813 = vmatpush.msra.mxu0 %v749
    %814 = vmatmul.f32.gmra.mxu0 %v776
    %v815 = vpop.f32.mrf.mxu0
    %v816 = vadd.f32 %v768, %v815
    %817 = vdwg.mxu0
    %818 = vmatpush.msra.mxu0 0.0
    %819 = vmatpush.msra.mxu0 0.0
    %820 = vmatpush.msra.mxu0 0.0
    %821 = vmatpush.msra.mxu0 0.0
    %822 = vmatpush.msra.mxu0 0.0
    %823 = vmatpush.msra.mxu0 0.0
    %824 = vmatpush.msra.mxu0 0.0
    %825 = vmatpush.msra.mxu0 0.0
    %826 = vmatpush.msra.mxu0 0.0
    %827 = vmatpush.msra.mxu0 0.0
    %828 = vmatpush.msra.mxu0 0.0
    %829 = vmatpush.msra.mxu0 0.0
    %830 = vmatpush.msra.mxu0 %v762
    %831 = vmatpush.msra.mxu0 %v758
    %832 = vmatpush.msra.mxu0 %v754
    %833 = vmatpush.msra.mxu0 %v750
    %834 = vmatmul.f32.gmra.mxu0 %v776
    %v835 = vpop.f32.mrf.mxu0
    %v836 = vadd.f32 %v769, %v835
    %837 = vdwg.mxu0
    %838 = vmatpush.msra.mxu0 0.0
    %839 = vmatpush.msra.mxu0 0.0
    %840 = vmatpush.msra.mxu0 0.0
    %841 = vmatpush.msra.mxu0 0.0
    %842 = vmatpush.msra.mxu0 0.0
    %843 = vmatpush.msra.mxu0 0.0
    %844 = vmatpush.msra.mxu0 0.0
    %845 = vmatpush.msra.mxu0 0.0
    %846 = vmatpush.msra.mxu0 0.0
    %847 = vmatpush.msra.mxu0 0.0
    %848 = vmatpush.msra.mxu0 0.0
    %849 = vmatpush.msra.mxu0 0.0
    %850 = vmatpush.msra.mxu0 %v763
    %851 = vmatpush.msra.mxu0 %v759
    %852 = vmatpush.msra.mxu0 %v755
    %853 = vmatpush.msra.mxu0 %v751
    %854 = vmatmul.f32.gmra.mxu0 %v776
    %v855 = vpop.f32.mrf.mxu0
    %v856 = vadd.f32 %v770, %v855
    %857 = vdwg.mxu0
    %s858 = scalar_lea.vmem %s5, 128
    %859 = vst [vmem:[%s858] sm:$0xff] %v796
    %860 = vst [vmem:[%s858 + $0x8] sm:$0xff] %v816
    %861 = vst [vmem:[%s858 + $0x10] sm:$0xff] %v836
    %862 = vst [vmem:[%s858 + $0x18] sm:$0xff] %v856
    // Predicated region
    $region42: #{factorcl_forward.5} parent=1 // pred_check
      _
    $region43: #{factorcl_forward.5} parent=1 // pred_check_branch
      %864 = sbr.rel (0) target = $region45
    $region44: #{factorcl_forward.5} parent=1 // pred_region
      _
    $region45: #{factorcl_forward.5} parent=1 // pred_fallthru
      _
    // Predicated region
    $region46: #{factorcl_forward.5} parent=1 // pred_check
      _
    $region47: #{factorcl_forward.5} parent=1 // pred_check_branch
      %866 = sbr.rel (0) target = $region49
    $region48: #{factorcl_forward.5} parent=1 // pred_region
      _
    $region49: #{factorcl_forward.5} parent=1 // pred_fallthru
      _
    %867 = vsyncpa [#allocation3], 1
    %868 = vsyncpa [#allocation5], 1
    %869 = vsyncpa [#allocation8], 1

// kernel: factorcl_forward.9
$region0: #{factorcl_forward.9}
  #allocation0 [shape = 'u32[]', space=smem, size = 0x4, offset = 0x4, fixed_abs, tag = 'smem constant byte address 0x4 - core index']
  #allocation1 [shape = 'u32[72,128]{1,0:T(1,128)}', space=vmem, size = 0x9000, scoped, tag = 'internal scratch']
  %s0 = inlined_call_operand.vmem [shape: bf16[6,8,512], index: 0, kind: input, shape index: {}]
  %s1 = inlined_call_operand.vmem [shape: bf16[6,8,512], index: 1, kind: input, shape index: {}]
  %s2 = inlined_call_operand.hbm [shape: bf16[6,512,512], index: 2, kind: input, shape index: {}]
  %s3 = inlined_call_operand.hbm [shape: f32[6,1,512], index: 3, kind: input, shape index: {}]
  %s4 = inlined_call_operand.hbm [shape: f32[6,1,512], index: 4, kind: input, shape index: {}]
  %s5 = inlined_call_operand.vmem [shape: f32[6,1,8,128], index: 5, kind: output, shape index: {}]
  %s6 = sld [smem:[#allocation0]]
  $region65: #{factorcl_forward.9} parent=0
    _
  %s8 = ssub.s32 1, %s6
  %s9 = scalar_select 0, %s8, %s6
  $region1: #{factorcl_forward.9} parent=0
    #allocation2 [shape = 'u8[1048576]{0}', space=vmem, size = 0x100000, scoped, tag = 'input window, operand 2']
    #allocation3 [shape = 's32[2]{0}', space=sflag, size = 0x8, scoped, tag = 'scoped memory for factorcl_forward.9']
    #allocation4 [shape = 'u8[4096]{0}', space=vmem, size = 0x1000, scoped, tag = 'input window, operand 3']
    #allocation5 [shape = 's32[2]{0}', space=sflag, size = 0x8, scoped, tag = 'scoped memory for factorcl_forward.9']
    #allocation6 [shape = 'u8[4096]{0}', space=vmem, size = 0x1000, scoped, tag = 'input window, operand 4']
    %10 = vsyncpa [#allocation3], 0
    %s11 = scalar_lea.sflag [#allocation3], 1
    %12 = vsyncpa %s11, 0
    %13 = vsyncpa [#allocation5], 0
    %s14 = scalar_lea.sflag [#allocation5], 1
    %15 = vsyncpa %s14, 0
    loop: start=0, step=1, limit=8
    $region2: #{factorcl_forward.9} parent=1 // loop_pre_header
      _
    $region3: #{factorcl_forward.9} parent=1 // loop_header
      %s17 = sphi 0, %s21
      %p18 = scmp.ge.s32.totalorder %s17, 8
      %s24 = sphi 0, %s36
      %s25 = sphi 0, %s32
      %s26 = sphi 0, %s24
      %s27 = sphi 0, %s25
      %s28 = sphi 0, %s26
      %s29 = sphi 0, %s27
      %s39 = sphi 0, %s41
      %s42 = sphi 0, %s39
      %s43 = sphi 0, %s42
      %s59 = sphi 0, %s43
      %s67 = sphi 0, %s69
      %s70 = sphi 0, %s67
      %s71 = sphi 0, %s70
      %s87 = sphi 0, %s71
      %s93 = sphi 0, %s95
      %s96 = sphi 0, %s93
      %s97 = sphi 0, %s96
      %s113 = sphi 0, %s97
      %s119 = sphi 0, %s121
      %s122 = sphi 0, %s119
      %s123 = sphi 0, %s122
      %s139 = sphi 0, %s123
      %s145 = sphi 0, %s147
      %s148 = sphi 0, %s145
      %s149 = sphi 0, %s148
      %s165 = sphi 0, %s149
      %s173 = sphi 0, %s175
      %s176 = sphi 0, %s173
      %s177 = sphi 0, %s176
      %s193 = sphi 0, %s177
    $region4: #{factorcl_forward.9} parent=1 // loop_header_branch
      %20 = sbr.rel (%p18) target = $region8
    $region5: #{factorcl_forward.9} parent=1 // loop_body
      %s22 = ssub.s32 %s17, 1
      %s23 = ssub.s32 %s17, 2
      %s30 = sadd.s32 1, %s25
      %p31 = scmp.ge.s32.totalorder %s30, 1
      %s32 = scalar_select %p31, 0, %s30
      %s33 = sadd.s32 1, %s24
      %s34 = scalar_select %p31, %s33, %s24
      %p35 = scmp.ge.s32.totalorder %s34, 6
      %s36 = scalar_select %p35, 0, %s34
      %s37 = ssub.s32 %s24, %s36
      %p38 = scmp.eq.s32.totalorder %s37, 0
      %s40 = sadd.s32 %s39, 1
      %s41 = scalar_select %p38, %s39, %s40
      %p44 = pneg %p38
      %p45 = scmp.eq.s32.totalorder %s17, 5
      %p46 = por %p44, %p45
      %p47 = scmp.ne.s32.totalorder %s39, %s42
      %p48 = scmp.eq.s32.totalorder %s17, 0
      %p49 = por %p47, %p48
      %p50 = scmp.ne.s32.totalorder %s39, %s42
      %p51 = scmp.eq.s32.totalorder %s22, 5
      %p52 = por %p50, %p51
      %p53 = scmp.ne.s32.totalorder %s42, %s43
      %p54 = scmp.eq.s32.totalorder %s22, 0
      %p55 = por %p53, %p54
      %p56 = scmp.ne.s32.totalorder %s42, %s43
      %p57 = scmp.eq.s32.totalorder %s23, 5
      %p58 = por %p56, %p57
      %p60 = scmp.ne.s32.totalorder %s43, %s59
      %p61 = scmp.eq.s32.totalorder %s23, 0
      %p62 = por %p60, %p61
      %s63 = ssub.s32 %s24, %s36
      %s64 = ssub.s32 %s25, %s32
      %s65 = sor.u32 %s63, %s64
      %p66 = scmp.eq.s32.totalorder %s65, 0
      %s68 = sadd.s32 %s67, 1
      %s69 = scalar_select %p66, %s67, %s68
      %p72 = pneg %p66
      %p73 = scmp.eq.s32.totalorder %s17, 5
      %p74 = por %p72, %p73
      %p75 = scmp.ne.s32.totalorder %s67, %s70
      %p76 = scmp.eq.s32.totalorder %s17, 0
      %p77 = por %p75, %p76
      %p78 = scmp.ne.s32.totalorder %s67, %s70
      %p79 = scmp.eq.s32.totalorder %s22, 5
      %p80 = por %p78, %p79
      %p81 = scmp.ne.s32.totalorder %s70, %s71
      %p82 = scmp.eq.s32.totalorder %s22, 0
      %p83 = por %p81, %p82
      %p84 = scmp.ne.s32.totalorder %s70, %s71
      %p85 = scmp.eq.s32.totalorder %s23, 5
      %p86 = por %p84, %p85
      %p88 = scmp.ne.s32.totalorder %s71, %s87
      %p89 = scmp.eq.s32.totalorder %s23, 0
      %p90 = por %p88, %p89
      %s91 = ssub.s32 %s24, %s36
      %p92 = scmp.eq.s32.totalorder %s91, 0
      %s94 = sadd.s32 %s93, 1
      %s95 = scalar_select %p92, %s93, %s94
      %p98 = pneg %p92
      %p99 = scmp.eq.s32.totalorder %s17, 5
      %p100 = por %p98, %p99
      %p101 = scmp.ne.s32.totalorder %s93, %s96
      %p102 = scmp.eq.s32.totalorder %s17, 0
      %p103 = por %p101, %p102
      %p104 = scmp.ne.s32.totalorder %s93, %s96
      %p105 = scmp.eq.s32.totalorder %s22, 5
      %p106 = por %p104, %p105
      %p107 = scmp.ne.s32.totalorder %s96, %s97
      %p108 = scmp.eq.s32.totalorder %s22, 0
      %p109 = por %p107, %p108
      %p110 = scmp.ne.s32.totalorder %s96, %s97
      %p111 = scmp.eq.s32.totalorder %s23, 5
      %p112 = por %p110, %p111
      %p114 = scmp.ne.s32.totalorder %s97, %s113
      %p115 = scmp.eq.s32.totalorder %s23, 0
      %p116 = por %p114, %p115
      %s117 = ssub.s32 %s24, %s36
      %p118 = scmp.eq.s32.totalorder %s117, 0
      %s120 = sadd.s32 %s119, 1
      %s121 = scalar_select %p118, %s119, %s120
      %p124 = pneg %p118
      %p125 = scmp.eq.s32.totalorder %s17, 5
      %p126 = por %p124, %p125
      %p127 = scmp.ne.s32.totalorder %s119, %s122
      %p128 = scmp.eq.s32.totalorder %s17, 0
      %p129 = por %p127, %p128
      %p130 = scmp.ne.s32.totalorder %s119, %s122
      %p131 = scmp.eq.s32.totalorder %s22, 5
      %p132 = por %p130, %p131
      %p133 = scmp.ne.s32.totalorder %s122, %s123
      %p134 = scmp.eq.s32.totalorder %s22, 0
      %p135 = por %p133, %p134
      %p136 = scmp.ne.s32.totalorder %s122, %s123
      %p137 = scmp.eq.s32.totalorder %s23, 5
      %p138 = por %p136, %p137
      %p140 = scmp.ne.s32.totalorder %s123, %s139
      %p141 = scmp.eq.s32.totalorder %s23, 0
      %p142 = por %p140, %p141
      %s143 = ssub.s32 %s24, %s36
      %p144 = scmp.eq.s32.totalorder %s143, 0
      %s146 = sadd.s32 %s145, 1
      %s147 = scalar_select %p144, %s145, %s146
      %p150 = pneg %p144
      %p151 = scmp.eq.s32.totalorder %s17, 5
      %p152 = por %p150, %p151
      %p153 = scmp.ne.s32.totalorder %s145, %s148
      %p154 = scmp.eq.s32.totalorder %s17, 0
      %p155 = por %p153, %p154
      %p156 = scmp.ne.s32.totalorder %s145, %s148
      %p157 = scmp.eq.s32.totalorder %s22, 5
      %p158 = por %p156, %p157
      %p159 = scmp.ne.s32.totalorder %s148, %s149
      %p160 = scmp.eq.s32.totalorder %s22, 0
      %p161 = por %p159, %p160
      %p162 = scmp.ne.s32.totalorder %s148, %s149
      %p163 = scmp.eq.s32.totalorder %s23, 5
      %p164 = por %p162, %p163
      %p166 = scmp.ne.s32.totalorder %s149, %s165
      %p167 = scmp.eq.s32.totalorder %s23, 0
      %p168 = por %p166, %p167
      %s169 = ssub.s32 %s24, %s36
      %s170 = ssub.s32 %s25, %s32
      %s171 = sor.u32 %s169, %s170
      %p172 = scmp.eq.s32.totalorder %s171, 0
      %s174 = sadd.s32 %s173, 1
      %s175 = scalar_select %p172, %s173, %s174
      %p178 = pneg %p172
      %p179 = scmp.eq.s32.totalorder %s17, 5
      %p180 = por %p178, %p179
      %p181 = scmp.ne.s32.totalorder %s173, %s176
      %p182 = scmp.eq.s32.totalorder %s17, 0
      %p183 = por %p181, %p182
      %p184 = scmp.ne.s32.totalorder %s173, %s176
      %p185 = scmp.eq.s32.totalorder %s22, 5
      %p186 = por %p184, %p185
      %p187 = scmp.ne.s32.totalorder %s176, %s177
      %p188 = scmp.eq.s32.totalorder %s22, 0
      %p189 = por %p187, %p188
      %p190 = scmp.ne.s32.totalorder %s176, %s177
      %p191 = scmp.eq.s32.totalorder %s23, 5
      %p192 = por %p190, %p191
      %p194 = scmp.ne.s32.totalorder %s177, %s193
      %p195 = scmp.eq.s32.totalorder %s23, 0
      %p196 = por %p194, %p195
      %p197 = scmp.le.s32.totalorder 1, %s17
      %p198 = scmp.lt.s32.totalorder %s17, 7
      %p199 = pnand %p197, %p198
      %p200 = pneg %p199
      // Predicated region
      $region9: #{factorcl_forward.9} parent=5 // pred_check
        _
      $region10: #{factorcl_forward.9} parent=5 // pred_check_branch
        %202 = sbr.rel (%p199) target = $region12
      $region11: #{factorcl_forward.9} parent=5 // pred_region
        %s203 = ssub.s32 %s17, 1
      $region12: #{factorcl_forward.9} parent=5 // pred_fallthru
        _
      %p204 = scmp.lt.s32.totalorder %s17, 6
      // Predicated region
      $region13: #{factorcl_forward.9} parent=5 // pred_check
        %p205 = pneg %p204
      $region14: #{factorcl_forward.9} parent=5 // pred_check_branch
        %207 = sbr.rel (%p205) target = $region16
      $region15: #{factorcl_forward.9} parent=5 // pred_region
        // Predicated region
        $region17: #{factorcl_forward.9} parent=15 // pred_check
          %p208 = pneg %p49
        $region18: #{factorcl_forward.9} parent=15 // pred_check_branch
          %210 = sbr.rel (%p208) target = $region20
        $region19: #{factorcl_forward.9} parent=15 // pred_region
          %p211 = scmp.lt.s32.totalorder %s24, 5
          %s212 = scalar_select %p211, %s24, 5
          %s213 = smul.addr %s212, 4
          %s214 = smul.addr %s213, 4
          %s215 = scalar_lea.vmem %s0, %s214
        $region20: #{factorcl_forward.9} parent=15 // pred_fallthru
          _
        // Predicated region
        $region21: #{factorcl_forward.9} parent=15 // pred_check
          %p216 = pneg %p77
        $region22: #{factorcl_forward.9} parent=15 // pred_check_branch
          %218 = sbr.rel (%p216) target = $region24
        $region23: #{factorcl_forward.9} parent=15 // pred_region
          %p219 = scmp.lt.s32.totalorder %s24, 5
          %s220 = scalar_select %p219, %s24, 5
          %p221 = scmp.lt.s32.totalorder %s25, 0
          %s222 = scalar_select %p221, %s25, 0
          %s223 = smul.addr %s222, 4
          %s224 = smul.addr %s220, 4
          %s225 = sadd.s32 %s223, %s224
          %s226 = smul.addr %s225, 4
          %s227 = scalar_lea.vmem %s1, %s226
        $region24: #{factorcl_forward.9} parent=15 // pred_fallthru
          _
        // Predicated region
        $region25: #{factorcl_forward.9} parent=15 // pred_check
          %p228 = pneg %p103
        $region26: #{factorcl_forward.9} parent=15 // pred_check_branch
          %230 = sbr.rel (%p228) target = $region28
        $region27: #{factorcl_forward.9} parent=15 // pred_region
          %s231 = sand.u32 %s93, 1
          %s232 = scalar_lea.sflag [#allocation3], %s231
          %s233 = sand.u32 %s93, 1
          %s234 = smul.addr %s233, 1024
          %s235 = scalar_lea.vmem [#allocation2], %s234
          %237 = vsyncadd %s232, 0
          %s238 = smul.addr %s24, 256
          %s239 = smul.addr %s238, 4
          %s240 = scalar_lea.hbm %s2, %s239
          %s241 = sshll.u32 %s240, 4
          %s242 = int_to_ptr.hbm [resolvable:$true] %s241
          %s243 = sshll.u32 %s235, 4
          %s244 = int_to_ptr.vmem [resolvable:$true] %s243
          %249 = dma.hbm_to_vmem [thread:$0]  %s242, 16384, %s244, %s232, 256, 256, 16
        $region28: #{factorcl_forward.9} parent=15 // pred_fallthru
          _
        // Predicated region
        $region29: #{factorcl_forward.9} parent=15 // pred_check
          %p250 = pneg %p129
        $region30: #{factorcl_forward.9} parent=15 // pred_check_branch
          %252 = sbr.rel (%p250) target = $region32
        $region31: #{factorcl_forward.9} parent=15 // pred_region
          %s253 = sand.u32 %s17, 1
          %s254 = scalar_lea.sflag [#allocation5], %s253
          %s255 = sand.u32 %s119, 1
          %s256 = smul.addr %s255, 4
          %s257 = scalar_lea.vmem [#allocation4], %s256
          %259 = vsyncadd %s254, 0
          %s260 = smul.addr %s24, 4
          %s261 = scalar_lea.hbm %s3, %s260
          %s263 = sshll.u32 %s261, 4
          %s264 = int_to_ptr.hbm [resolvable:$true] %s263
          %s265 = sshll.u32 %s257, 4
          %s266 = int_to_ptr.vmem [resolvable:$true] %s265
          %268 = dma.hbm_to_vmem [thread:$0]  %s264, 64, %s266, %s254
        $region32: #{factorcl_forward.9} parent=15 // pred_fallthru
          _
        // Predicated region
        $region33: #{factorcl_forward.9} parent=15 // pred_check
          %p269 = pneg %p155
        $region34: #{factorcl_forward.9} parent=15 // pred_check_branch
          %271 = sbr.rel (%p269) target = $region36
        $region35: #{factorcl_forward.9} parent=15 // pred_region
          %s272 = sand.u32 %s17, 1
          %s273 = scalar_lea.sflag [#allocation5], %s272
          %s274 = sand.u32 %s145, 1
          %s275 = smul.addr %s274, 4
          %s276 = scalar_lea.vmem [#allocation6], %s275
          %278 = vsyncadd %s273, 0
          %s279 = smul.addr %s24, 4
          %s280 = scalar_lea.hbm %s4, %s279
          %s282 = sshll.u32 %s280, 4
          %s283 = int_to_ptr.hbm [resolvable:$true] %s282
          %s284 = sshll.u32 %s276, 4
          %s285 = int_to_ptr.vmem [resolvable:$true] %s284
          %287 = dma.hbm_to_vmem [thread:$0]  %s283, 64, %s285, %s273
        $region36: #{factorcl_forward.9} parent=15 // pred_fallthru
          _
      $region16: #{factorcl_forward.9} parent=5 // pred_fallthru
        _
      %p288 = scmp.le.s32.totalorder 1, %s17
      %p289 = scmp.lt.s32.totalorder %s17, 7
      %p290 = pnand %p288, %p289
      %p291 = pneg %p290
      // Predicated region
      $region37: #{factorcl_forward.9} parent=5 // pred_check
        _
      $region38: #{factorcl_forward.9} parent=5 // pred_check_branch
        %293 = sbr.rel (%p290) target = $region40
      $region39: #{factorcl_forward.9} parent=5 // pred_region
        %s294 = ssub.s32 %s17, 1
        %s295 = sand.u32 %s96, 1
        %s296 = scalar_lea.sflag [#allocation3], %s295
        %s297 = sand.u32 %s96, 1
        %s298 = smul.addr %s297, 1024
        %s299 = scalar_lea.vmem [#allocation2], %s298
        // Predicated region
        $region41: #{factorcl_forward.9} parent=39 // pred_check
          %p300 = pneg %p109
        $region42: #{factorcl_forward.9} parent=39 // pred_check_branch
          %302 = sbr.rel (%p300) target = $region44
        $region43: #{factorcl_forward.9} parent=39 // pred_region
          %304 = dma.done %s296, 16384
        $region44: #{factorcl_forward.9} parent=39 // pred_fallthru
          _
        %s305 = sand.u32 %s22, 1
        %s306 = scalar_lea.sflag [#allocation5], %s305
        %s307 = sand.u32 %s122, 1
        %s308 = smul.addr %s307, 4
        %s309 = scalar_lea.vmem [#allocation4], %s308
        // Predicated region
        $region45: #{factorcl_forward.9} parent=39 // pred_check
          %p310 = pneg %p135
        $region46: #{factorcl_forward.9} parent=39 // pred_check_branch
          %312 = sbr.rel (%p310) target = $region48
        $region47: #{factorcl_forward.9} parent=39 // pred_region
          %314 = dma.done %s306, 64
        $region48: #{factorcl_forward.9} parent=39 // pred_fallthru
          _
        %s315 = sand.u32 %s22, 1
        %s316 = scalar_lea.sflag [#allocation5], %s315
        %s317 = sand.u32 %s148, 1
        %s318 = smul.addr %s317, 4
        %s319 = scalar_lea.vmem [#allocation6], %s318
        // Predicated region
        $region49: #{factorcl_forward.9} parent=39 // pred_check
          %p320 = pneg %p161
        $region50: #{factorcl_forward.9} parent=39 // pred_check_branch
          %322 = sbr.rel (%p320) target = $region52
        $region51: #{factorcl_forward.9} parent=39 // pred_region
          %324 = dma.done %s316, 64
        $region52: #{factorcl_forward.9} parent=39 // pred_fallthru
          _
        %p325 = scmp.lt.s32.totalorder %s26, 5
        %s326 = scalar_select %p325, %s26, 5
        %s327 = smul.addr %s326, 4
        %s328 = smul.addr %s327, 4
        %s329 = scalar_lea.vmem %s0, %s328
        %p330 = pneg %p55
        %p331 = pneg %p52
        %p332 = scmp.lt.s32.totalorder %s26, 5
        %s333 = scalar_select %p332, %s26, 5
        %p334 = scmp.lt.s32.totalorder %s27, 0
        %s335 = scalar_select %p334, %s27, 0
        %s336 = smul.addr %s335, 4
        %s337 = smul.addr %s333, 4
        %s338 = sadd.s32 %s336, %s337
        %s339 = smul.addr %s338, 4
        %s340 = scalar_lea.vmem %s1, %s339
        %p341 = pneg %p83
        %p342 = pneg %p80
        %s343 = sand.u32 %s96, 1
        %s344 = scalar_lea.sflag [#allocation3], %s343
        %s345 = sand.u32 %s96, 1
        %s346 = smul.addr %s345, 1024
        %s347 = scalar_lea.vmem [#allocation2], %s346
        %p348 = pneg %p109
        %p349 = pneg %p106
        %s350 = sand.u32 %s22, 1
        %s351 = scalar_lea.sflag [#allocation5], %s350
        %s352 = sand.u32 %s122, 1
        %s353 = smul.addr %s352, 4
        %s354 = scalar_lea.vmem [#allocation4], %s353
        %p355 = pneg %p135
        %p356 = pneg %p132
        %s357 = sand.u32 %s22, 1
        %s358 = scalar_lea.sflag [#allocation5], %s357
        %s359 = sand.u32 %s148, 1
        %s360 = smul.addr %s359, 4
        %s361 = scalar_lea.vmem [#allocation6], %s360
        %p362 = pneg %p161
        %p363 = pneg %p158
        %p364 = pneg %p189
        %p365 = pneg %p186
        %p366 = scmp.lt.s32.totalorder %s26, 5
        %s367 = scalar_select %p366, %s26, 5
        %p368 = scmp.lt.s32.totalorder %s27, 0
        %s369 = scalar_select %p368, %s27, 0
        %s370 = sadd.s32 %s369, %s367
        %s371 = smul.addr %s370, 8
        %s372 = scalar_lea.vmem %s5, %s371
        %p373 = scmp.lt.s32.totalorder %s26, 5
        %s374 = scalar_select %p373, %s26, 5
        %s375 = smul.addr %s374, 4
        %s376 = smul.addr %s375, 4
        %s377 = scalar_lea.vmem %s0, %s376
        %p378 = scmp.lt.s32.totalorder %s26, 5
        %s379 = scalar_select %p378, %s26, 5
        %p380 = scmp.lt.s32.totalorder %s27, 0
        %s381 = scalar_select %p380, %s27, 0
        %s382 = smul.addr %s381, 4
        %s383 = smul.addr %s379, 4
        %s384 = sadd.s32 %s382, %s383
        %s385 = smul.addr %s384, 4
        %s386 = scalar_lea.vmem %s1, %s385
        %p387 = scmp.lt.s32.totalorder %s26, 5
        %s388 = scalar_select %p387, %s26, 5
        %p389 = scmp.lt.s32.totalorder %s27, 0
        %s390 = scalar_select %p389, %s27, 0
        %s391 = sadd.s32 %s390, %s388
        %s392 = smul.addr %s391, 8
        %s393 = scalar_lea.vmem %s5, %s392
        %v394 = vld [vmem:[%s377] sm:$0xff]
        %v395 = vld [vmem:[%s377 + $0x8] sm:$0xff]
        %v396 = vld [vmem:[%s386] sm:$0xff]
        %v397 = vld [vmem:[%s386 + $0x8] sm:$0xff]
        %v400 = vrot.slane %v396, 3
        %v401 = vrot.slane %v397, 6
        %v402 = vrot.slane %v397, 1
        %vm403 = vcmask 1040384
        %v406 = vsel %vm403, %v396, %v400
        %vm407 = vcmask 1042434
        %v410 = vsel %vm407, %v401, %v402
        %vm411 = vcmask 1041408
        %v412 = vsel %vm411, %v406, %v410
        %vm414 = vcmask 1041409
        %v415 = vsel %vm414, %v396, %v400
        %vm416 = vcmask 1043459
        %v417 = vsel %vm416, %v401, %v402
        %vm418 = vcmask 1042433
        %v419 = vsel %vm418, %v415, %v417
        %v421 = vrot.slane %v419, 1
        %v422 = vsel %vm407, %v396, %v400
        %vm423 = vcmask 1044484
        %v424 = vsel %vm423, %v401, %v402
        %vm425 = vcmask 1043458
        %v426 = vsel %vm425, %v422, %v424
        %v428 = vrot.slane %v426, 2
        %v429 = vsel %vm416, %v396, %v400
        %vm430 = vcmask 1045509
        %v431 = vsel %vm430, %v401, %v402
        %vm432 = vcmask 1044483
        %v433 = vsel %vm432, %v429, %v431
        %v435 = vrot.slane %v433, 3
        %v436 = vunpack.i.l.s16 %v412
        %v437 = vunpack.i.h.s16 %v412
        %v438 = vunpack.i.l.s16 %v421
        %v439 = vunpack.i.h.s16 %v421
        %v440 = vunpack.i.l.s16 %v428
        %v441 = vunpack.i.h.s16 %v428
        %v442 = vunpack.i.l.s16 %v435
        %v443 = vunpack.i.h.s16 %v435
        %v444 = vpack.i.b16 %v436, %v436
        %v445 = vpack.i.b16 %v437, %v437
        %v446 = vpack.i.b16 %v438, %v438
        %v447 = vpack.i.b16 %v439, %v439
        %v448 = vpack.i.b16 %v440, %v440
        %v449 = vpack.i.b16 %v441, %v441
        %v450 = vpack.i.b16 %v442, %v442
        %v451 = vpack.i.b16 %v443, %v443
        %v452 = vperm.slane %v444, 0
        %v453 = vperm.slane %v444, 1
        %v454 = vperm.slane %v444, 2
        %v455 = vperm.slane %v444, 3
        %v456 = vperm.slane %v445, 0
        %v457 = vperm.slane %v445, 1
        %v458 = vperm.slane %v445, 2
        %v459 = vperm.slane %v445, 3
        %v460 = vperm.slane %v446, 0
        %v461 = vperm.slane %v446, 1
        %v462 = vperm.slane %v446, 2
        %v463 = vperm.slane %v446, 3
        %v464 = vperm.slane %v447, 0
        %v465 = vperm.slane %v447, 1
        %v466 = vperm.slane %v447, 2
        %v467 = vperm.slane %v447, 3
        %v468 = vperm.slane %v448, 0
        %v469 = vperm.slane %v448, 1
        %v470 = vperm.slane %v448, 2
        %v471 = vperm.slane %v448, 3
        %v472 = vperm.slane %v449, 0
        %v473 = vperm.slane %v449, 1
        %v474 = vperm.slane %v449, 2
        %v475 = vperm.slane %v449, 3
        %v476 = vperm.slane %v450, 0
        %v477 = vperm.slane %v450, 1
        %v478 = vperm.slane %v450, 2
        %v479 = vperm.slane %v450, 3
        %v480 = vperm.slane %v451, 0
        %v481 = vperm.slane %v451, 1
        %v482 = vperm.slane %v451, 2
        %v483 = vperm.slane %v451, 3
        %v485 = vpack.i.b16 %v452, %v452
        %v487 = vperm.slane %v485, 0
        %v489 = vpack.i.b16 %v453, %v453
        %v491 = vperm.slane %v489, 0
        %v493 = vpack.i.b16 %v454, %v454
        %v495 = vperm.slane %v493, 0
        %v497 = vpack.i.b16 %v455, %v455
        %v499 = vperm.slane %v497, 0
        %v501 = vpack.i.b16 %v456, %v456
        %v503 = vperm.slane %v501, 0
        %v505 = vpack.i.b16 %v457, %v457
        %v507 = vperm.slane %v505, 0
        %v509 = vpack.i.b16 %v458, %v458
        %v511 = vperm.slane %v509, 0
        %v513 = vpack.i.b16 %v459, %v459
        %v515 = vperm.slane %v513, 0
        %v517 = vpack.i.b16 %v460, %v460
        %v519 = vperm.slane %v517, 0
        %v521 = vpack.i.b16 %v461, %v461
        %v523 = vperm.slane %v521, 0
        %v525 = vpack.i.b16 %v462, %v462
        %v527 = vperm.slane %v525, 0
        %v529 = vpack.i.b16 %v463, %v463
        %v531 = vperm.slane %v529, 0
        %v533 = vpack.i.b16 %v464, %v464
        %v535 = vperm.slane %v533, 0
        %v537 = vpack.i.b16 %v465, %v465
        %v539 = vperm.slane %v537, 0
        %v541 = vpack.i.b16 %v466, %v466
        %v543 = vperm.slane %v541, 0
        %v545 = vpack.i.b16 %v467, %v467
        %v547 = vperm.slane %v545, 0
        %v549 = vpack.i.b16 %v468, %v468
        %v551 = vperm.slane %v549, 0
        %v553 = vpack.i.b16 %v469, %v469
        %v555 = vperm.slane %v553, 0
        %v557 = vpack.i.b16 %v470, %v470
        %v559 = vperm.slane %v557, 0
        %v561 = vpack.i.b16 %v471, %v471
        %v563 = vperm.slane %v561, 0
        %v565 = vpack.i.b16 %v472, %v472
        %v567 = vperm.slane %v565, 0
        %v569 = vpack.i.b16 %v473, %v473
        %v571 = vperm.slane %v569, 0
        %v573 = vpack.i.b16 %v474, %v474
        %v575 = vperm.slane %v573, 0
        %v577 = vpack.i.b16 %v475, %v475
        %v579 = vperm.slane %v577, 0
        %v581 = vpack.i.b16 %v476, %v476
        %v583 = vperm.slane %v581, 0
        %v585 = vpack.i.b16 %v477, %v477
        %v587 = vperm.slane %v585, 0
        %v589 = vpack.i.b16 %v478, %v478
        %v591 = vperm.slane %v589, 0
        %v593 = vpack.i.b16 %v479, %v479
        %v595 = vperm.slane %v593, 0
        %v597 = vpack.i.b16 %v480, %v480
        %v599 = vperm.slane %v597, 0
        %v601 = vpack.i.b16 %v481, %v481
        %v603 = vperm.slane %v601, 0
        %v605 = vpack.i.b16 %v482, %v482
        %v607 = vperm.slane %v605, 0
        %v609 = vpack.i.b16 %v483, %v483
        %v611 = vperm.slane %v609, 0
        %v612 = vunpack.c.l.bf16 %v394
        %v613 = vunpack.c.h.bf16 %v394
        %v614 = vunpack.c.l.bf16 %v395
        %v615 = vunpack.c.h.bf16 %v395
        %v616 = vunpack.c.l.bf16 %v487
        %v617 = vunpack.c.l.bf16 %v491
        %v618 = vunpack.c.l.bf16 %v495
        %v619 = vunpack.c.l.bf16 %v499
        %v620 = vunpack.c.l.bf16 %v503
        %v621 = vunpack.c.l.bf16 %v507
        %v622 = vunpack.c.l.bf16 %v511
        %v623 = vunpack.c.l.bf16 %v515
        %v624 = vunpack.c.l.bf16 %v519
        %v625 = vunpack.c.l.bf16 %v523
        %v626 = vunpack.c.l.bf16 %v527
        %v627 = vunpack.c.l.bf16 %v531
        %v628 = vunpack.c.l.bf16 %v535
        %v629 = vunpack.c.l.bf16 %v539
        %v630 = vunpack.c.l.bf16 %v543
        %v631 = vunpack.c.l.bf16 %v547
        %v632 = vunpack.c.l.bf16 %v551
        %v633 = vunpack.c.l.bf16 %v555
        %v634 = vunpack.c.l.bf16 %v559
        %v635 = vunpack.c.l.bf16 %v563
        %v636 = vunpack.c.l.bf16 %v567
        %v637 = vunpack.c.l.bf16 %v571
        %v638 = vunpack.c.l.bf16 %v575
        %v639 = vunpack.c.l.bf16 %v579
        %v640 = vunpack.c.l.bf16 %v583
        %v641 = vunpack.c.l.bf16 %v587
        %v642 = vunpack.c.l.bf16 %v591
        %v643 = vunpack.c.l.bf16 %v595
        %v644 = vunpack.c.l.bf16 %v599
        %v645 = vunpack.c.l.bf16 %v603
        %v646 = vunpack.c.l.bf16 %v607
        %v647 = vunpack.c.l.bf16 %v611
        %v648 = vadd.f32 %v612, %v616
        %v649 = vadd.f32 %v613, %v617
        %v650 = vadd.f32 %v614, %v618
        %v651 = vadd.f32 %v615, %v619
        %v652 = vadd.f32 %v612, %v620
        %v653 = vadd.f32 %v613, %v621
        %v654 = vadd.f32 %v614, %v622
        %v655 = vadd.f32 %v615, %v623
        %v656 = vadd.f32 %v612, %v624
        %v657 = vadd.f32 %v613, %v625
        %v658 = vadd.f32 %v614, %v626
        %v659 = vadd.f32 %v615, %v627
        %v660 = vadd.f32 %v612, %v628
        %v661 = vadd.f32 %v613, %v629
        %v662 = vadd.f32 %v614, %v630
        %v663 = vadd.f32 %v615, %v631
        %v664 = vadd.f32 %v612, %v632
        %v665 = vadd.f32 %v613, %v633
        %v666 = vadd.f32 %v614, %v634
        %v667 = vadd.f32 %v615, %v635
        %v668 = vadd.f32 %v612, %v636
        %v669 = vadd.f32 %v613, %v637
        %v670 = vadd.f32 %v614, %v638
        %v671 = vadd.f32 %v615, %v639
        %v672 = vadd.f32 %v612, %v640
        %v673 = vadd.f32 %v613, %v641
        %v674 = vadd.f32 %v614, %v642
        %v675 = vadd.f32 %v615, %v643
        %v676 = vadd.f32 %v612, %v644
        %v677 = vadd.f32 %v613, %v645
        %v678 = vadd.f32 %v614, %v646
        %v679 = vadd.f32 %v615, %v647
        %v680 = vpack.c.bf16 %v649, %v648
        %v681 = vpack.c.bf16 %v651, %v650
        %v682 = vpack.c.bf16 %v653, %v652
        %v683 = vpack.c.bf16 %v655, %v654
        %v684 = vpack.c.bf16 %v657, %v656
        %v685 = vpack.c.bf16 %v659, %v658
        %v686 = vpack.c.bf16 %v661, %v660
        %v687 = vpack.c.bf16 %v663, %v662
        %v688 = vpack.c.bf16 %v665, %v664
        %v689 = vpack.c.bf16 %v667, %v666
        %v690 = vpack.c.bf16 %v669, %v668
        %v691 = vpack.c.bf16 %v671, %v670
        %v692 = vpack.c.bf16 %v673, %v672
        %v693 = vpack.c.bf16 %v675, %v674
        %v694 = vpack.c.bf16 %v677, %v676
        %v695 = vpack.c.bf16 %v679, %v678
        %v696 = vunpack.c.l.bf16 %v680
        %v697 = vunpack.c.h.bf16 %v680
        %v698 = vunpack.c.l.bf16 %v681
        %v699 = vunpack.c.h.bf16 %v681
        %v700 = vunpack.c.l.bf16 %v682
        %v701 = vunpack.c.h.bf16 %v682
        %v702 = vunpack.c.l.bf16 %v683
        %v703 = vunpack.c.h.bf16 %v683
        %v704 = vunpack.c.l.bf16 %v684
        %v705 = vunpack.c.h.bf16 %v684
        %v706 = vunpack.c.l.bf16 %v685
        %v707 = vunpack.c.h.bf16 %v685
        %v708 = vunpack.c.l.bf16 %v686
        %v709 = vunpack.c.h.bf16 %v686
        %v710 = vunpack.c.l.bf16 %v687
        %v711 = vunpack.c.h.bf16 %v687
        %v712 = vunpack.c.l.bf16 %v688
        %v713 = vunpack.c.h.bf16 %v688
        %v714 = vunpack.c.l.bf16 %v689
        %v715 = vunpack.c.h.bf16 %v689
        %v716 = vunpack.c.l.bf16 %v690
        %v717 = vunpack.c.h.bf16 %v690
        %v718 = vunpack.c.l.bf16 %v691
        %v719 = vunpack.c.h.bf16 %v691
        %v720 = vunpack.c.l.bf16 %v692
        %v721 = vunpack.c.h.bf16 %v692
        %v722 = vunpack.c.l.bf16 %v693
        %v723 = vunpack.c.h.bf16 %v693
        %v724 = vunpack.c.l.bf16 %v694
        %v725 = vunpack.c.h.bf16 %v694
        %v726 = vunpack.c.l.bf16 %v695
        %v727 = vunpack.c.h.bf16 %v695
        %v728 = vmax.f32 %v696, 0.0
        %v729 = vmax.f32 %v697, 0.0
        %v730 = vmax.f32 %v698, 0.0
        %v731 = vmax.f32 %v699, 0.0
        %v732 = vmax.f32 %v700, 0.0
        %v733 = vmax.f32 %v701, 0.0
        %v734 = vmax.f32 %v702, 0.0
        %v735 = vmax.f32 %v703, 0.0
        %v736 = vmax.f32 %v704, 0.0
        %v737 = vmax.f32 %v705, 0.0
        %v738 = vmax.f32 %v706, 0.0
        %v739 = vmax.f32 %v707, 0.0
        %v740 = vmax.f32 %v708, 0.0
        %v741 = vmax.f32 %v709, 0.0
        %v742 = vmax.f32 %v710, 0.0
        %v743 = vmax.f32 %v711, 0.0
        %v744 = vmax.f32 %v712, 0.0
        %v745 = vmax.f32 %v713, 0.0
        %v746 = vmax.f32 %v714, 0.0
        %v747 = vmax.f32 %v715, 0.0
        %v748 = vmax.f32 %v716, 0.0
        %v749 = vmax.f32 %v717, 0.0
        %v750 = vmax.f32 %v718, 0.0
        %v751 = vmax.f32 %v719, 0.0
        %v752 = vmax.f32 %v720, 0.0
        %v753 = vmax.f32 %v721, 0.0
        %v754 = vmax.f32 %v722, 0.0
        %v755 = vmax.f32 %v723, 0.0
        %v756 = vmax.f32 %v724, 0.0
        %v757 = vmax.f32 %v725, 0.0
        %v758 = vmax.f32 %v726, 0.0
        %v759 = vmax.f32 %v727, 0.0
        %v760 = vpack.c.bf16 %v732, %v728
        %v761 = vpack.c.bf16 %v733, %v729
        %v762 = vpack.c.bf16 %v734, %v730
        %v763 = vpack.c.bf16 %v735, %v731
        %v764 = vpack.c.bf16 %v740, %v736
        %v765 = vpack.c.bf16 %v741, %v737
        %v766 = vpack.c.bf16 %v742, %v738
        %v767 = vpack.c.bf16 %v743, %v739
        %v768 = vpack.c.bf16 %v748, %v744
        %v769 = vpack.c.bf16 %v749, %v745
        %v770 = vpack.c.bf16 %v750, %v746
        %v771 = vpack.c.bf16 %v751, %v747
        %v772 = vpack.c.bf16 %v756, %v752
        %v773 = vpack.c.bf16 %v757, %v753
        %v774 = vpack.c.bf16 %v758, %v754
        %v775 = vpack.c.bf16 %v759, %v755
        %v776 = vld [vmem:[%s299] sm:$0xff]
        %v777 = vld [vmem:[%s299 + $0x8] sm:$0xff]
        %v778 = vld [vmem:[%s299 + $0x10] sm:$0xff]
        %v779 = vld [vmem:[%s299 + $0x18] sm:$0xff]
        %v780 = vld [vmem:[%s299 + $0x20] sm:$0xff]
        %v781 = vld [vmem:[%s299 + $0x28] sm:$0xff]
        %v782 = vld [vmem:[%s299 + $0x30] sm:$0xff]
        %v783 = vld [vmem:[%s299 + $0x38] sm:$0xff]
        %v784 = vld [vmem:[%s299 + $0x40] sm:$0xff]
        %v785 = vld [vmem:[%s299 + $0x48] sm:$0xff]
        %v786 = vld [vmem:[%s299 + $0x50] sm:$0xff]
        %v787 = vld [vmem:[%s299 + $0x58] sm:$0xff]
        %v788 = vld [vmem:[%s299 + $0x60] sm:$0xff]
        %v789 = vld [vmem:[%s299 + $0x68] sm:$0xff]
        %v790 = vld [vmem:[%s299 + $0x70] sm:$0xff]
        %v791 = vld [vmem:[%s299 + $0x78] sm:$0xff]
        %v792 = vld [vmem:[%s299 + $0x80] sm:$0xff]
        %v793 = vld [vmem:[%s299 + $0x88] sm:$0xff]
        %v794 = vld [vmem:[%s299 + $0x90] sm:$0xff]
        %v795 = vld [vmem:[%s299 + $0x98] sm:$0xff]
        %v796 = vld [vmem:[%s299 + $0xa0] sm:$0xff]
        %v797 = vld [vmem:[%s299 + $0xa8] sm:$0xff]
        %v798 = vld [vmem:[%s299 + $0xb0] sm:$0xff]
        %v799 = vld [vmem:[%s299 + $0xb8] sm:$0xff]
        %v800 = vld [vmem:[%s299 + $0xc0] sm:$0xff]
        %v801 = vld [vmem:[%s299 + $0xc8] sm:$0xff]
        %v802 = vld [vmem:[%s299 + $0xd0] sm:$0xff]
        %v803 = vld [vmem:[%s299 + $0xd8] sm:$0xff]
        %v804 = vld [vmem:[%s299 + $0xe0] sm:$0xff]
        %v805 = vld [vmem:[%s299 + $0xe8] sm:$0xff]
        %v806 = vld [vmem:[%s299 + $0xf0] sm:$0xff]
        %v807 = vld [vmem:[%s299 + $0xf8] sm:$0xff]
        %v808 = vld [vmem:[%s299 + $0x100] sm:$0xff]
        %v809 = vld [vmem:[%s299 + $0x108] sm:$0xff]
        %v810 = vld [vmem:[%s299 + $0x110] sm:$0xff]
        %v811 = vld [vmem:[%s299 + $0x118] sm:$0xff]
        %v812 = vld [vmem:[%s299 + $0x120] sm:$0xff]
        %v813 = vld [vmem:[%s299 + $0x128] sm:$0xff]
        %v814 = vld [vmem:[%s299 + $0x130] sm:$0xff]
        %v815 = vld [vmem:[%s299 + $0x138] sm:$0xff]
        %v816 = vld [vmem:[%s299 + $0x140] sm:$0xff]
        %v817 = vld [vmem:[%s299 + $0x148] sm:$0xff]
        %v818 = vld [vmem:[%s299 + $0x150] sm:$0xff]
        %v819 = vld [vmem:[%s299 + $0x158] sm:$0xff]
        %v820 = vld [vmem:[%s299 + $0x160] sm:$0xff]
        %v821 = vld [vmem:[%s299 + $0x168] sm:$0xff]
        %v822 = vld [vmem:[%s299 + $0x170] sm:$0xff]
        %v823 = vld [vmem:[%s299 + $0x178] sm:$0xff]
        %v824 = vld [vmem:[%s299 + $0x180] sm:$0xff]
        %v825 = vld [vmem:[%s299 + $0x188] sm:$0xff]
        %v826 = vld [vmem:[%s299 + $0x190] sm:$0xff]
        %v827 = vld [vmem:[%s299 + $0x198] sm:$0xff]
        %v828 = vld [vmem:[%s299 + $0x1a0] sm:$0xff]
        %v829 = vld [vmem:[%s299 + $0x1a8] sm:$0xff]
        %v830 = vld [vmem:[%s299 + $0x1b0] sm:$0xff]
        %v831 = vld [vmem:[%s299 + $0x1b8] sm:$0xff]
        %v832 = vld [vmem:[%s299 + $0x1c0] sm:$0xff]
        %v833 = vld [vmem:[%s299 + $0x1c8] sm:$0xff]
        %v834 = vld [vmem:[%s299 + $0x1d0] sm:$0xff]
        %v835 = vld [vmem:[%s299 + $0x1d8] sm:$0xff]
        %v836 = vld [vmem:[%s299 + $0x1e0] sm:$0xff]
        %v837 = vld [vmem:[%s299 + $0x1e8] sm:$0xff]
        %v838 = vld [vmem:[%s299 + $0x1f0] sm:$0xff]
        %v839 = vld [vmem:[%s299 + $0x1f8] sm:$0xff]
        %v840 = vld [vmem:[%s299 + $0x200] sm:$0xff]
        %v841 = vld [vmem:[%s299 + $0x208] sm:$0xff]
        %v842 = vld [vmem:[%s299 + $0x210] sm:$0xff]
        %v843 = vld [vmem:[%s299 + $0x218] sm:$0xff]
        %v844 = vld [vmem:[%s299 + $0x220] sm:$0xff]
        %v845 = vld [vmem:[%s299 + $0x228] sm:$0xff]
        %v846 = vld [vmem:[%s299 + $0x230] sm:$0xff]
        %v847 = vld [vmem:[%s299 + $0x238] sm:$0xff]
        %v848 = vld [vmem:[%s299 + $0x240] sm:$0xff]
        %v849 = vld [vmem:[%s299 + $0x248] sm:$0xff]
        %v850 = vld [vmem:[%s299 + $0x250] sm:$0xff]
        %v851 = vld [vmem:[%s299 + $0x258] sm:$0xff]
        %v852 = vld [vmem:[%s299 + $0x260] sm:$0xff]
        %v853 = vld [vmem:[%s299 + $0x268] sm:$0xff]
        %v854 = vld [vmem:[%s299 + $0x270] sm:$0xff]
        %v855 = vld [vmem:[%s299 + $0x278] sm:$0xff]
        %v856 = vld [vmem:[%s299 + $0x280] sm:$0xff]
        %v857 = vld [vmem:[%s299 + $0x288] sm:$0xff]
        %v858 = vld [vmem:[%s299 + $0x290] sm:$0xff]
        %v859 = vld [vmem:[%s299 + $0x298] sm:$0xff]
        %v860 = vld [vmem:[%s299 + $0x2a0] sm:$0xff]
        %v861 = vld [vmem:[%s299 + $0x2a8] sm:$0xff]
        %v862 = vld [vmem:[%s299 + $0x2b0] sm:$0xff]
        %v863 = vld [vmem:[%s299 + $0x2b8] sm:$0xff]
        %v864 = vld [vmem:[%s299 + $0x2c0] sm:$0xff]
        %v865 = vld [vmem:[%s299 + $0x2c8] sm:$0xff]
        %v866 = vld [vmem:[%s299 + $0x2d0] sm:$0xff]
        %v867 = vld [vmem:[%s299 + $0x2d8] sm:$0xff]
        %v868 = vld [vmem:[%s299 + $0x2e0] sm:$0xff]
        %v869 = vld [vmem:[%s299 + $0x2e8] sm:$0xff]
        %v870 = vld [vmem:[%s299 + $0x2f0] sm:$0xff]
        %v871 = vld [vmem:[%s299 + $0x2f8] sm:$0xff]
        %v872 = vld [vmem:[%s299 + $0x300] sm:$0xff]
        %v873 = vld [vmem:[%s299 + $0x308] sm:$0xff]
        %v874 = vld [vmem:[%s299 + $0x310] sm:$0xff]
        %v875 = vld [vmem:[%s299 + $0x318] sm:$0xff]
        %v876 = vld [vmem:[%s299 + $0x320] sm:$0xff]
        %v877 = vld [vmem:[%s299 + $0x328] sm:$0xff]
        %v878 = vld [vmem:[%s299 + $0x330] sm:$0xff]
        %v879 = vld [vmem:[%s299 + $0x338] sm:$0xff]
        %v880 = vld [vmem:[%s299 + $0x340] sm:$0xff]
        %v881 = vld [vmem:[%s299 + $0x348] sm:$0xff]
        %v882 = vld [vmem:[%s299 + $0x350] sm:$0xff]
        %v883 = vld [vmem:[%s299 + $0x358] sm:$0xff]
        %v884 = vld [vmem:[%s299 + $0x360] sm:$0xff]
        %v885 = vld [vmem:[%s299 + $0x368] sm:$0xff]
        %v886 = vld [vmem:[%s299 + $0x370] sm:$0xff]
        %v887 = vld [vmem:[%s299 + $0x378] sm:$0xff]
        %v888 = vld [vmem:[%s299 + $0x380] sm:$0xff]
        %v889 = vld [vmem:[%s299 + $0x388] sm:$0xff]
        %v890 = vld [vmem:[%s299 + $0x390] sm:$0xff]
        %v891 = vld [vmem:[%s299 + $0x398] sm:$0xff]
        %v892 = vld [vmem:[%s299 + $0x3a0] sm:$0xff]
        %v893 = vld [vmem:[%s299 + $0x3a8] sm:$0xff]
        %v894 = vld [vmem:[%s299 + $0x3b0] sm:$0xff]
        %v895 = vld [vmem:[%s299 + $0x3b8] sm:$0xff]
        %v896 = vld [vmem:[%s299 + $0x3c0] sm:$0xff]
        %v897 = vld [vmem:[%s299 + $0x3c8] sm:$0xff]
        %v898 = vld [vmem:[%s299 + $0x3d0] sm:$0xff]
        %v899 = vld [vmem:[%s299 + $0x3d8] sm:$0xff]
        %v900 = vld [vmem:[%s299 + $0x3e0] sm:$0xff]
        %v901 = vld [vmem:[%s299 + $0x3e8] sm:$0xff]
        %v902 = vld [vmem:[%s299 + $0x3f0] sm:$0xff]
        %v903 = vld [vmem:[%s299 + $0x3f8] sm:$0xff]
        %v904 = vld [vmem:[%s309] sm:$0xf]
        %v906 = vperm.slane %v904, 0
        %v907 = vperm.slane %v904, 1
        %v908 = vperm.slane %v904, 2
        %v909 = vperm.slane %v904, 3
        %v1042 = vunpack.c.l.b16 %v776
        %v1043 = vunpack.c.h.b16 %v776
        %v1044 = vunpack.c.l.b16 %v777
        %v1045 = vunpack.c.h.b16 %v777
        %v1046 = vunpack.c.l.b16 %v778
        %v1047 = vunpack.c.h.b16 %v778
        %v1048 = vunpack.c.l.b16 %v779
        %v1049 = vunpack.c.h.b16 %v779
        %v1050 = vunpack.c.l.b16 %v780
        %v1051 = vunpack.c.h.b16 %v780
        %v1052 = vunpack.c.l.b16 %v781
        %v1053 = vunpack.c.h.b16 %v781
        %v1054 = vunpack.c.l.b16 %v782
        %v1055 = vunpack.c.h.b16 %v782
        %v1056 = vunpack.c.l.b16 %v783
        %v1057 = vunpack.c.h.b16 %v783
        %v1058 = vunpack.c.l.b16 %v784
        %v1059 = vunpack.c.h.b16 %v784
        %v1060 = vunpack.c.l.b16 %v785
        %v1061 = vunpack.c.h.b16 %v785
        %v1062 = vunpack.c.l.b16 %v786
        %v1063 = vunpack.c.h.b16 %v786
        %v1064 = vunpack.c.l.b16 %v787
        %v1065 = vunpack.c.h.b16 %v787
        %v1066 = vunpack.c.l.b16 %v788
        %v1067 = vunpack.c.h.b16 %v788
        %v1068 = vunpack.c.l.b16 %v789
        %v1069 = vunpack.c.h.b16 %v789
        %v1070 = vunpack.c.l.b16 %v790
        %v1071 = vunpack.c.h.b16 %v790
        %v1072 = vunpack.c.l.b16 %v791
        %v1073 = vunpack.c.h.b16 %v791
        %v1074 = vunpack.c.l.b16 %v792
        %v1075 = vunpack.c.h.b16 %v792
        %v1076 = vunpack.c.l.b16 %v793
        %v1077 = vunpack.c.h.b16 %v793
        %v1078 = vunpack.c.l.b16 %v794
        %v1079 = vunpack.c.h.b16 %v794
        %v1080 = vunpack.c.l.b16 %v795
        %v1081 = vunpack.c.h.b16 %v795
        %v1082 = vunpack.c.l.b16 %v796
        %v1083 = vunpack.c.h.b16 %v796
        %v1084 = vunpack.c.l.b16 %v797
        %v1085 = vunpack.c.h.b16 %v797
        %v1086 = vunpack.c.l.b16 %v798
        %v1087 = vunpack.c.h.b16 %v798
        %v1088 = vunpack.c.l.b16 %v799
        %v1089 = vunpack.c.h.b16 %v799
        %v1090 = vunpack.c.l.b16 %v800
        %v1091 = vunpack.c.h.b16 %v800
        %v1092 = vunpack.c.l.b16 %v801
        %v1093 = vunpack.c.h.b16 %v801
        %v1094 = vunpack.c.l.b16 %v802
        %v1095 = vunpack.c.h.b16 %v802
        %v1096 = vunpack.c.l.b16 %v803
        %v1097 = vunpack.c.h.b16 %v803
        %v1098 = vunpack.c.l.b16 %v804
        %v1099 = vunpack.c.h.b16 %v804
        %v1100 = vunpack.c.l.b16 %v805
        %v1101 = vunpack.c.h.b16 %v805
        %v1102 = vunpack.c.l.b16 %v806
        %v1103 = vunpack.c.h.b16 %v806
        %v1104 = vunpack.c.l.b16 %v807
        %v1105 = vunpack.c.h.b16 %v807
        %v1106 = vunpack.c.l.b16 %v808
        %v1107 = vunpack.c.h.b16 %v808
        %v1108 = vunpack.c.l.b16 %v809
        %v1109 = vunpack.c.h.b16 %v809
        %v1110 = vunpack.c.l.b16 %v810
        %v1111 = vunpack.c.h.b16 %v810
        %v1112 = vunpack.c.l.b16 %v811
        %v1113 = vunpack.c.h.b16 %v811
        %v1114 = vunpack.c.l.b16 %v812
        %v1115 = vunpack.c.h.b16 %v812
        %v1116 = vunpack.c.l.b16 %v813
        %v1117 = vunpack.c.h.b16 %v813
        %v1118 = vunpack.c.l.b16 %v814
        %v1119 = vunpack.c.h.b16 %v814
        %v1120 = vunpack.c.l.b16 %v815
        %v1121 = vunpack.c.h.b16 %v815
        %v1122 = vunpack.c.l.b16 %v816
        %v1123 = vunpack.c.h.b16 %v816
        %v1124 = vunpack.c.l.b16 %v817
        %v1125 = vunpack.c.h.b16 %v817
        %v1126 = vunpack.c.l.b16 %v818
        %v1127 = vunpack.c.h.b16 %v818
        %v1128 = vunpack.c.l.b16 %v819
        %v1129 = vunpack.c.h.b16 %v819
        %v1130 = vunpack.c.l.b16 %v820
        %v1131 = vunpack.c.h.b16 %v820
        %v1132 = vunpack.c.l.b16 %v821
        %v1133 = vunpack.c.h.b16 %v821
        %v1134 = vunpack.c.l.b16 %v822
        %v1135 = vunpack.c.h.b16 %v822
        %v1136 = vunpack.c.l.b16 %v823
        %v1137 = vunpack.c.h.b16 %v823
        %v1138 = vunpack.c.l.b16 %v824
        %v1139 = vunpack.c.h.b16 %v824
        %v1140 = vunpack.c.l.b16 %v825
        %v1141 = vunpack.c.h.b16 %v825
        %v1142 = vunpack.c.l.b16 %v826
        %v1143 = vunpack.c.h.b16 %v826
        %v1144 = vunpack.c.l.b16 %v827
        %v1145 = vunpack.c.h.b16 %v827
        %v1146 = vunpack.c.l.b16 %v828
        %v1147 = vunpack.c.h.b16 %v828
        %v1148 = vunpack.c.l.b16 %v829
        %v1149 = vunpack.c.h.b16 %v829
        %v1150 = vunpack.c.l.b16 %v830
        %v1151 = vunpack.c.h.b16 %v830
        %v1152 = vunpack.c.l.b16 %v831
        %v1153 = vunpack.c.h.b16 %v831
        %v1154 = vunpack.c.l.b16 %v832
        %v1155 = vunpack.c.h.b16 %v832
        %v1156 = vunpack.c.l.b16 %v833
        %v1157 = vunpack.c.h.b16 %v833
        %v1158 = vunpack.c.l.b16 %v834
        %v1159 = vunpack.c.h.b16 %v834
        %v1160 = vunpack.c.l.b16 %v835
        %v1161 = vunpack.c.h.b16 %v835
        %v1162 = vunpack.c.l.b16 %v836
        %v1163 = vunpack.c.h.b16 %v836
        %v1164 = vunpack.c.l.b16 %v837
        %v1165 = vunpack.c.h.b16 %v837
        %v1166 = vunpack.c.l.b16 %v838
        %v1167 = vunpack.c.h.b16 %v838
        %v1168 = vunpack.c.l.b16 %v839
        %v1169 = vunpack.c.h.b16 %v839
        %v1170 = vunpack.c.l.b16 %v840
        %v1171 = vunpack.c.h.b16 %v840
        %v1172 = vunpack.c.l.b16 %v841
        %v1173 = vunpack.c.h.b16 %v841
        %v1174 = vunpack.c.l.b16 %v842
        %v1175 = vunpack.c.h.b16 %v842
        %v1176 = vunpack.c.l.b16 %v843
        %v1177 = vunpack.c.h.b16 %v843
        %v1178 = vunpack.c.l.b16 %v844
        %v1179 = vunpack.c.h.b16 %v844
        %v1180 = vunpack.c.l.b16 %v845
        %v1181 = vunpack.c.h.b16 %v845
        %v1182 = vunpack.c.l.b16 %v846
        %v1183 = vunpack.c.h.b16 %v846
        %v1184 = vunpack.c.l.b16 %v847
        %v1185 = vunpack.c.h.b16 %v847
        %v1186 = vunpack.c.l.b16 %v848
        %v1187 = vunpack.c.h.b16 %v848
        %v1188 = vunpack.c.l.b16 %v849
        %v1189 = vunpack.c.h.b16 %v849
        %v1190 = vunpack.c.l.b16 %v850
        %v1191 = vunpack.c.h.b16 %v850
        %v1192 = vunpack.c.l.b16 %v851
        %v1193 = vunpack.c.h.b16 %v851
        %v1194 = vunpack.c.l.b16 %v852
        %v1195 = vunpack.c.h.b16 %v852
        %v1196 = vunpack.c.l.b16 %v853
        %v1197 = vunpack.c.h.b16 %v853
        %v1198 = vunpack.c.l.b16 %v854
        %v1199 = vunpack.c.h.b16 %v854
        %v1200 = vunpack.c.l.b16 %v855
        %v1201 = vunpack.c.h.b16 %v855
        %v1202 = vunpack.c.l.b16 %v856
        %v1203 = vunpack.c.h.b16 %v856
        %v1204 = vunpack.c.l.b16 %v857
        %v1205 = vunpack.c.h.b16 %v857
        %v1206 = vunpack.c.l.b16 %v858
        %v1207 = vunpack.c.h.b16 %v858
        %v1208 = vunpack.c.l.b16 %v859
        %v1209 = vunpack.c.h.b16 %v859
        %v1210 = vunpack.c.l.b16 %v860
        %v1211 = vunpack.c.h.b16 %v860
        %v1212 = vunpack.c.l.b16 %v861
        %v1213 = vunpack.c.h.b16 %v861
        %v1214 = vunpack.c.l.b16 %v862
        %v1215 = vunpack.c.h.b16 %v862
        %v1216 = vunpack.c.l.b16 %v863
        %v1217 = vunpack.c.h.b16 %v863
        %v1218 = vunpack.c.l.b16 %v864
        %v1219 = vunpack.c.h.b16 %v864
        %v1220 = vunpack.c.l.b16 %v865
        %v1221 = vunpack.c.h.b16 %v865
        %v1222 = vunpack.c.l.b16 %v866
        %v1223 = vunpack.c.h.b16 %v866
        %v1224 = vunpack.c.l.b16 %v867
        %v1225 = vunpack.c.h.b16 %v867
        %v1226 = vunpack.c.l.b16 %v868
        %v1227 = vunpack.c.h.b16 %v868
        %v1228 = vunpack.c.l.b16 %v869
        %v1229 = vunpack.c.h.b16 %v869
        %v1230 = vunpack.c.l.b16 %v870
        %v1231 = vunpack.c.h.b16 %v870
        %v1232 = vunpack.c.l.b16 %v871
        %v1233 = vunpack.c.h.b16 %v871
        %v1234 = vunpack.c.l.b16 %v872
        %v1235 = vunpack.c.h.b16 %v872
        %v1236 = vunpack.c.l.b16 %v873
        %v1237 = vunpack.c.h.b16 %v873
        %v1238 = vunpack.c.l.b16 %v874
        %v1239 = vunpack.c.h.b16 %v874
        %v1240 = vunpack.c.l.b16 %v875
        %v1241 = vunpack.c.h.b16 %v875
        %v1242 = vunpack.c.l.b16 %v876
        %v1243 = vunpack.c.h.b16 %v876
        %v1244 = vunpack.c.l.b16 %v877
        %v1245 = vunpack.c.h.b16 %v877
        %v1246 = vunpack.c.l.b16 %v878
        %v1247 = vunpack.c.h.b16 %v878
        %v1248 = vunpack.c.l.b16 %v879
        %v1249 = vunpack.c.h.b16 %v879
        %v1250 = vunpack.c.l.b16 %v880
        %v1251 = vunpack.c.h.b16 %v880
        %v1252 = vunpack.c.l.b16 %v881
        %v1253 = vunpack.c.h.b16 %v881
        %v1254 = vunpack.c.l.b16 %v882
        %v1255 = vunpack.c.h.b16 %v882
        %v1256 = vunpack.c.l.b16 %v883
        %v1257 = vunpack.c.h.b16 %v883
        %v1258 = vunpack.c.l.b16 %v884
        %v1259 = vunpack.c.h.b16 %v884
        %v1260 = vunpack.c.l.b16 %v885
        %v1261 = vunpack.c.h.b16 %v885
        %v1262 = vunpack.c.l.b16 %v886
        %v1263 = vunpack.c.h.b16 %v886
        %v1264 = vunpack.c.l.b16 %v887
        %v1265 = vunpack.c.h.b16 %v887
        %v1266 = vunpack.c.l.b16 %v888
        %v1267 = vunpack.c.h.b16 %v888
        %v1268 = vunpack.c.l.b16 %v889
        %v1269 = vunpack.c.h.b16 %v889
        %v1270 = vunpack.c.l.b16 %v890
        %v1271 = vunpack.c.h.b16 %v890
        %v1272 = vunpack.c.l.b16 %v891
        %v1273 = vunpack.c.h.b16 %v891
        %v1274 = vunpack.c.l.b16 %v892
        %v1275 = vunpack.c.h.b16 %v892
        %v1276 = vunpack.c.l.b16 %v893
        %v1277 = vunpack.c.h.b16 %v893
        %v1278 = vunpack.c.l.b16 %v894
        %v1279 = vunpack.c.h.b16 %v894
        %v1280 = vunpack.c.l.b16 %v895
        %v1281 = vunpack.c.h.b16 %v895
        %v1282 = vunpack.c.l.b16 %v896
        %v1283 = vunpack.c.h.b16 %v896
        %v1284 = vunpack.c.l.b16 %v897
        %v1285 = vunpack.c.h.b16 %v897
        %v1286 = vunpack.c.l.b16 %v898
        %v1287 = vunpack.c.h.b16 %v898
        %v1288 = vunpack.c.l.b16 %v899
        %v1289 = vunpack.c.h.b16 %v899
        %v1290 = vunpack.c.l.b16 %v900
        %v1291 = vunpack.c.h.b16 %v900
        %v1292 = vunpack.c.l.b16 %v901
        %v1293 = vunpack.c.h.b16 %v901
        %v1294 = vunpack.c.l.b16 %v902
        %v1295 = vunpack.c.h.b16 %v902
        %v1296 = vunpack.c.l.b16 %v903
        %v1297 = vunpack.c.h.b16 %v903
        %v1298 = vpack.c.b16 %v1046, %v1042
        %v1299 = vpack.c.b16 %v1047, %v1043
        %v1300 = vpack.c.b16 %v1048, %v1044
        %v1301 = vpack.c.b16 %v1049, %v1045
        %v1302 = vpack.c.b16 %v1054, %v1050
        %v1303 = vpack.c.b16 %v1055, %v1051
        %v1304 = vpack.c.b16 %v1056, %v1052
        %v1305 = vpack.c.b16 %v1057, %v1053
        %v1306 = vpack.c.b16 %v1062, %v1058
        %v1307 = vpack.c.b16 %v1063, %v1059
        %v1308 = vpack.c.b16 %v1064, %v1060
        %v1309 = vpack.c.b16 %v1065, %v1061
        %v1310 = vpack.c.b16 %v1070, %v1066
        %v1311 = vpack.c.b16 %v1071, %v1067
        %v1312 = vpack.c.b16 %v1072, %v1068
        %v1313 = vpack.c.b16 %v1073, %v1069
        %v1314 = vpack.c.b16 %v1078, %v1074
        %v1315 = vpack.c.b16 %v1079, %v1075
        %v1316 = vpack.c.b16 %v1080, %v1076
        %v1317 = vpack.c.b16 %v1081, %v1077
        %v1318 = vpack.c.b16 %v1086, %v1082
        %v1319 = vpack.c.b16 %v1087, %v1083
        %v1320 = vpack.c.b16 %v1088, %v1084
        %v1321 = vpack.c.b16 %v1089, %v1085
        %v1322 = vpack.c.b16 %v1094, %v1090
        %v1323 = vpack.c.b16 %v1095, %v1091
        %v1324 = vpack.c.b16 %v1096, %v1092
        %v1325 = vpack.c.b16 %v1097, %v1093
        %v1326 = vpack.c.b16 %v1102, %v1098
        %v1327 = vpack.c.b16 %v1103, %v1099
        %v1328 = vpack.c.b16 %v1104, %v1100
        %v1329 = vpack.c.b16 %v1105, %v1101
        %v1330 = vpack.c.b16 %v1110, %v1106
        %v1331 = vpack.c.b16 %v1111, %v1107
        %v1332 = vpack.c.b16 %v1112, %v1108
        %v1333 = vpack.c.b16 %v1113, %v1109
        %v1334 = vpack.c.b16 %v1118, %v1114
        %v1335 = vpack.c.b16 %v1119, %v1115
        %v1336 = vpack.c.b16 %v1120, %v1116
        %v1337 = vpack.c.b16 %v1121, %v1117
        %v1338 = vpack.c.b16 %v1126, %v1122
        %v1339 = vpack.c.b16 %v1127, %v1123
        %v1340 = vpack.c.b16 %v1128, %v1124
        %v1341 = vpack.c.b16 %v1129, %v1125
        %v1342 = vpack.c.b16 %v1134, %v1130
        %v1343 = vpack.c.b16 %v1135, %v1131
        %v1344 = vpack.c.b16 %v1136, %v1132
        %v1345 = vpack.c.b16 %v1137, %v1133
        %v1346 = vpack.c.b16 %v1142, %v1138
        %v1347 = vpack.c.b16 %v1143, %v1139
        %v1348 = vpack.c.b16 %v1144, %v1140
        %v1349 = vpack.c.b16 %v1145, %v1141
        %v1350 = vpack.c.b16 %v1150, %v1146
        %v1351 = vpack.c.b16 %v1151, %v1147
        %v1352 = vpack.c.b16 %v1152, %v1148
        %v1353 = vpack.c.b16 %v1153, %v1149
        %v1354 = vpack.c.b16 %v1158, %v1154
        %v1355 = vpack.c.b16 %v1159, %v1155
        %v1356 = vpack.c.b16 %v1160, %v1156
        %v1357 = vpack.c.b16 %v1161, %v1157
        %v1358 = vpack.c.b16 %v1166, %v1162
        %v1359 = vpack.c.b16 %v1167, %v1163
        %v1360 = vpack.c.b16 %v1168, %v1164
        %v1361 = vpack.c.b16 %v1169, %v1165
        %v1362 = vpack.c.b16 %v1174, %v1170
        %v1363 = vpack.c.b16 %v1175, %v1171
        %v1364 = vpack.c.b16 %v1176, %v1172
        %v1365 = vpack.c.b16 %v1177, %v1173
        %v1366 = vpack.c.b16 %v1182, %v1178
        %v1367 = vpack.c.b16 %v1183, %v1179
        %v1368 = vpack.c.b16 %v1184, %v1180
        %v1369 = vpack.c.b16 %v1185, %v1181
        %v1370 = vpack.c.b16 %v1190, %v1186
        %v1371 = vpack.c.b16 %v1191, %v1187
        %v1372 = vpack.c.b16 %v1192, %v1188
        %v1373 = vpack.c.b16 %v1193, %v1189
        %v1374 = vpack.c.b16 %v1198, %v1194
        %v1375 = vpack.c.b16 %v1199, %v1195
        %v1376 = vpack.c.b16 %v1200, %v1196
        %v1377 = vpack.c.b16 %v1201, %v1197
        %v1378 = vpack.c.b16 %v1206, %v1202
        %v1379 = vpack.c.b16 %v1207, %v1203
        %v1380 = vpack.c.b16 %v1208, %v1204
        %v1381 = vpack.c.b16 %v1209, %v1205
        %v1382 = vpack.c.b16 %v1214, %v1210
        %v1383 = vpack.c.b16 %v1215, %v1211
        %v1384 = vpack.c.b16 %v1216, %v1212
        %v1385 = vpack.c.b16 %v1217, %v1213
        %v1386 = vpack.c.b16 %v1222, %v1218
        %v1387 = vpack.c.b16 %v1223, %v1219
        %v1388 = vpack.c.b16 %v1224, %v1220
        %v1389 = vpack.c.b16 %v1225, %v1221
        %v1390 = vpack.c.b16 %v1230, %v1226
        %v1391 = vpack.c.b16 %v1231, %v1227
        %v1392 = vpack.c.b16 %v1232, %v1228
        %v1393 = vpack.c.b16 %v1233, %v1229
        %v1394 = vpack.c.b16 %v1238, %v1234
        %v1395 = vpack.c.b16 %v1239, %v1235
        %v1396 = vpack.c.b16 %v1240, %v1236
        %v1397 = vpack.c.b16 %v1241, %v1237
        %v1398 = vpack.c.b16 %v1246, %v1242
        %v1399 = vpack.c.b16 %v1247, %v1243
        %v1400 = vpack.c.b16 %v1248, %v1244
        %v1401 = vpack.c.b16 %v1249, %v1245
        %v1402 = vpack.c.b16 %v1254, %v1250
        %v1403 = vpack.c.b16 %v1255, %v1251
        %v1404 = vpack.c.b16 %v1256, %v1252
        %v1405 = vpack.c.b16 %v1257, %v1253
        %v1406 = vpack.c.b16 %v1262, %v1258
        %v1407 = vpack.c.b16 %v1263, %v1259
        %v1408 = vpack.c.b16 %v1264, %v1260
        %v1409 = vpack.c.b16 %v1265, %v1261
        %v1410 = vpack.c.b16 %v1270, %v1266
        %v1411 = vpack.c.b16 %v1271, %v1267
        %v1412 = vpack.c.b16 %v1272, %v1268
        %v1413 = vpack.c.b16 %v1273, %v1269
        %v1414 = vpack.c.b16 %v1278, %v1274
        %v1415 = vpack.c.b16 %v1279, %v1275
        %v1416 = vpack.c.b16 %v1280, %v1276
        %v1417 = vpack.c.b16 %v1281, %v1277
        %v1418 = vpack.c.b16 %v1286, %v1282
        %v1419 = vpack.c.b16 %v1287, %v1283
        %v1420 = vpack.c.b16 %v1288, %v1284
        %v1421 = vpack.c.b16 %v1289, %v1285
        %v1422 = vpack.c.b16 %v1294, %v1290
        %v1423 = vpack.c.b16 %v1295, %v1291
        %v1424 = vpack.c.b16 %v1296, %v1292
        %v1425 = vpack.c.b16 %v1297, %v1293
        %1554 = vmatpush.bf16.msra.mxu0 %v1326
        %1555 = vmatpush.bf16.msra.mxu0 %v1322
        %1556 = vmatpush.bf16.msra.mxu0 %v1318
        %1557 = vmatpush.bf16.msra.mxu0 %v1314
        %1558 = vmatpush.bf16.msra.mxu0 %v1310
        %1559 = vmatpush.bf16.msra.mxu0 %v1306
        %1560 = vmatpush.bf16.msra.mxu0 %v1302
        %1561 = vmatpush.bf16.msra.mxu0 %v1298
        %1562 = vmatmul.bf16.gmra.mxu0 %v760
        %v1563 = vpop.f32.mrf.mxu0
        %v1564 = vadd.f32 %v906, %v1563
        %v1565 = vpop.f32.mrf.mxu0
        %v1566 = vadd.f32 %v906, %v1565
        %1567 = vmatmul.bf16.gmra.mxu0 %v764
        %v1568 = vpop.f32.mrf.mxu0
        %v1569 = vadd.f32 %v906, %v1568
        %v1570 = vpop.f32.mrf.mxu0
        %v1571 = vadd.f32 %v906, %v1570
        %1572 = vmatmul.bf16.gmra.mxu0 %v768
        %v1573 = vpop.f32.mrf.mxu0
        %v1574 = vadd.f32 %v906, %v1573
        %v1575 = vpop.f32.mrf.mxu0
        %v1576 = vadd.f32 %v906, %v1575
        %1577 = vmatmul.bf16.gmra.mxu0 %v772
        %v1578 = vpop.f32.mrf.mxu0
        %v1579 = vadd.f32 %v906, %v1578
        %v1580 = vpop.f32.mrf.mxu0
        %v1581 = vadd.f32 %v906, %v1580
        %1582 = vdwg.mxu0
        %1583 = vmatpush.bf16.msra.mxu0 %v1358
        %1584 = vmatpush.bf16.msra.mxu0 %v1354
        %1585 = vmatpush.bf16.msra.mxu0 %v1350
        %1586 = vmatpush.bf16.msra.mxu0 %v1346
        %1587 = vmatpush.bf16.msra.mxu0 %v1342
        %1588 = vmatpush.bf16.msra.mxu0 %v1338
        %1589 = vmatpush.bf16.msra.mxu0 %v1334
        %1590 = vmatpush.bf16.msra.mxu0 %v1330
        %1591 = vmatmul.bf16.gmra.mxu0 %v761
        %v1592 = vpop.f32.mrf.mxu0
        %v1593 = vadd.f32 %v1564, %v1592
        %v1594 = vpop.f32.mrf.mxu0
        %v1595 = vadd.f32 %v1566, %v1594
        %1596 = vmatmul.bf16.gmra.mxu0 %v765
        %v1597 = vpop.f32.mrf.mxu0
        %v1598 = vadd.f32 %v1569, %v1597
        %v1599 = vpop.f32.mrf.mxu0
        %v1600 = vadd.f32 %v1571, %v1599
        %1601 = vmatmul.bf16.gmra.mxu0 %v769
        %v1602 = vpop.f32.mrf.mxu0
        %v1603 = vadd.f32 %v1574, %v1602
        %v1604 = vpop.f32.mrf.mxu0
        %v1605 = vadd.f32 %v1576, %v1604
        %1606 = vmatmul.bf16.gmra.mxu0 %v773
        %v1607 = vpop.f32.mrf.mxu0
        %v1608 = vadd.f32 %v1579, %v1607
        %v1609 = vpop.f32.mrf.mxu0
        %v1610 = vadd.f32 %v1581, %v1609
        %1611 = vdwg.mxu0
        %1612 = vmatpush.bf16.msra.mxu0 %v1390
        %1613 = vmatpush.bf16.msra.mxu0 %v1386
        %1614 = vmatpush.bf16.msra.mxu0 %v1382
        %1615 = vmatpush.bf16.msra.mxu0 %v1378
        %1616 = vmatpush.bf16.msra.mxu0 %v1374
        %1617 = vmatpush.bf16.msra.mxu0 %v1370
        %1618 = vmatpush.bf16.msra.mxu0 %v1366
        %1619 = vmatpush.bf16.msra.mxu0 %v1362
        %1620 = vmatmul.bf16.gmra.mxu0 %v762
        %v1621 = vpop.f32.mrf.mxu0
        %v1622 = vadd.f32 %v1593, %v1621
        %v1623 = vpop.f32.mrf.mxu0
        %v1624 = vadd.f32 %v1595, %v1623
        %1625 = vmatmul.bf16.gmra.mxu0 %v766
        %v1626 = vpop.f32.mrf.mxu0
        %v1627 = vadd.f32 %v1598, %v1626
        %v1628 = vpop.f32.mrf.mxu0
        %v1629 = vadd.f32 %v1600, %v1628
        %1630 = vmatmul.bf16.gmra.mxu0 %v770
        %v1631 = vpop.f32.mrf.mxu0
        %v1632 = vadd.f32 %v1603, %v1631
        %v1633 = vpop.f32.mrf.mxu0
        %v1634 = vadd.f32 %v1605, %v1633
        %1635 = vmatmul.bf16.gmra.mxu0 %v774
        %v1636 = vpop.f32.mrf.mxu0
        %v1637 = vadd.f32 %v1608, %v1636
        %v1638 = vpop.f32.mrf.mxu0
        %v1639 = vadd.f32 %v1610, %v1638
        %1640 = vdwg.mxu0
        %1641 = vmatpush.bf16.msra.mxu0 %v1422
        %1642 = vmatpush.bf16.msra.mxu0 %v1418
        %1643 = vmatpush.bf16.msra.mxu0 %v1414
        %1644 = vmatpush.bf16.msra.mxu0 %v1410
        %1645 = vmatpush.bf16.msra.mxu0 %v1406
        %1646 = vmatpush.bf16.msra.mxu0 %v1402
        %1647 = vmatpush.bf16.msra.mxu0 %v1398
        %1648 = vmatpush.bf16.msra.mxu0 %v1394
        %1649 = vmatmul.bf16.gmra.mxu0 %v763
        %v1650 = vpop.f32.mrf.mxu0
        %v1651 = vadd.f32 %v1622, %v1650
        %v1652 = vpop.f32.mrf.mxu0
        %v1653 = vadd.f32 %v1624, %v1652
        %1654 = vmatmul.bf16.gmra.mxu0 %v767
        %v1655 = vpop.f32.mrf.mxu0
        %v1656 = vadd.f32 %v1627, %v1655
        %v1657 = vpop.f32.mrf.mxu0
        %v1658 = vadd.f32 %v1629, %v1657
        %1659 = vmatmul.bf16.gmra.mxu0 %v771
        %v1660 = vpop.f32.mrf.mxu0
        %v1661 = vadd.f32 %v1632, %v1660
        %v1662 = vpop.f32.mrf.mxu0
        %v1663 = vadd.f32 %v1634, %v1662
        %1664 = vmatmul.bf16.gmra.mxu0 %v775
        %v1665 = vpop.f32.mrf.mxu0
        %v1666 = vadd.f32 %v1637, %v1665
        %v1667 = vpop.f32.mrf.mxu0
        %v1668 = vadd.f32 %v1639, %v1667
        %1669 = vdwg.mxu0
        %1670 = vmatpush.bf16.msra.mxu0 %v1327
        %1671 = vmatpush.bf16.msra.mxu0 %v1323
        %1672 = vmatpush.bf16.msra.mxu0 %v1319
        %1673 = vmatpush.bf16.msra.mxu0 %v1315
        %1674 = vmatpush.bf16.msra.mxu0 %v1311
        %1675 = vmatpush.bf16.msra.mxu0 %v1307
        %1676 = vmatpush.bf16.msra.mxu0 %v1303
        %1677 = vmatpush.bf16.msra.mxu0 %v1299
        %1678 = vmatmul.bf16.gmra.mxu0 %v760
        %v1679 = vpop.f32.mrf.mxu0
        %v1680 = vadd.f32 %v907, %v1679
        %v1681 = vpop.f32.mrf.mxu0
        %v1682 = vadd.f32 %v907, %v1681
        %1683 = vmatmul.bf16.gmra.mxu0 %v764
        %v1684 = vpop.f32.mrf.mxu0
        %v1685 = vadd.f32 %v907, %v1684
        %v1686 = vpop.f32.mrf.mxu0
        %v1687 = vadd.f32 %v907, %v1686
        %1688 = vmatmul.bf16.gmra.mxu0 %v768
        %v1689 = vpop.f32.mrf.mxu0
        %v1690 = vadd.f32 %v907, %v1689
        %v1691 = vpop.f32.mrf.mxu0
        %v1692 = vadd.f32 %v907, %v1691
        %1693 = vmatmul.bf16.gmra.mxu0 %v772
        %v1694 = vpop.f32.mrf.mxu0
        %v1695 = vadd.f32 %v907, %v1694
        %v1696 = vpop.f32.mrf.mxu0
        %v1697 = vadd.f32 %v907, %v1696
        %1698 = vdwg.mxu0
        %1699 = vmatpush.bf16.msra.mxu0 %v1359
        %1700 = vmatpush.bf16.msra.mxu0 %v1355
        %1701 = vmatpush.bf16.msra.mxu0 %v1351
        %1702 = vmatpush.bf16.msra.mxu0 %v1347
        %1703 = vmatpush.bf16.msra.mxu0 %v1343
        %1704 = vmatpush.bf16.msra.mxu0 %v1339
        %1705 = vmatpush.bf16.msra.mxu0 %v1335
        %1706 = vmatpush.bf16.msra.mxu0 %v1331
        %1707 = vmatmul.bf16.gmra.mxu0 %v761
        %v1708 = vpop.f32.mrf.mxu0
        %v1709 = vadd.f32 %v1680, %v1708
        %v1710 = vpop.f32.mrf.mxu0
        %v1711 = vadd.f32 %v1682, %v1710
        %1712 = vmatmul.bf16.gmra.mxu0 %v765
        %v1713 = vpop.f32.mrf.mxu0
        %v1714 = vadd.f32 %v1685, %v1713
        %v1715 = vpop.f32.mrf.mxu0
        %v1716 = vadd.f32 %v1687, %v1715
        %1717 = vmatmul.bf16.gmra.mxu0 %v769
        %v1718 = vpop.f32.mrf.mxu0
        %v1719 = vadd.f32 %v1690, %v1718
        %v1720 = vpop.f32.mrf.mxu0
        %v1721 = vadd.f32 %v1692, %v1720
        %1722 = vmatmul.bf16.gmra.mxu0 %v773
        %v1723 = vpop.f32.mrf.mxu0
        %v1724 = vadd.f32 %v1695, %v1723
        %v1725 = vpop.f32.mrf.mxu0
        %v1726 = vadd.f32 %v1697, %v1725
        %1727 = vdwg.mxu0
        %1728 = vmatpush.bf16.msra.mxu0 %v1391
        %1729 = vmatpush.bf16.msra.mxu0 %v1387
        %1730 = vmatpush.bf16.msra.mxu0 %v1383
        %1731 = vmatpush.bf16.msra.mxu0 %v1379
        %1732 = vmatpush.bf16.msra.mxu0 %v1375
        %1733 = vmatpush.bf16.msra.mxu0 %v1371
        %1734 = vmatpush.bf16.msra.mxu0 %v1367
        %1735 = vmatpush.bf16.msra.mxu0 %v1363
        %1736 = vmatmul.bf16.gmra.mxu0 %v762
        %v1737 = vpop.f32.mrf.mxu0
        %v1738 = vadd.f32 %v1709, %v1737
        %v1739 = vpop.f32.mrf.mxu0
        %v1740 = vadd.f32 %v1711, %v1739
        %1741 = vmatmul.bf16.gmra.mxu0 %v766
        %v1742 = vpop.f32.mrf.mxu0
        %v1743 = vadd.f32 %v1714, %v1742
        %v1744 = vpop.f32.mrf.mxu0
        %v1745 = vadd.f32 %v1716, %v1744
        %1746 = vmatmul.bf16.gmra.mxu0 %v770
        %v1747 = vpop.f32.mrf.mxu0
        %v1748 = vadd.f32 %v1719, %v1747
        %v1749 = vpop.f32.mrf.mxu0
        %v1750 = vadd.f32 %v1721, %v1749
        %1751 = vmatmul.bf16.gmra.mxu0 %v774
        %v1752 = vpop.f32.mrf.mxu0
        %v1753 = vadd.f32 %v1724, %v1752
        %v1754 = vpop.f32.mrf.mxu0
        %v1755 = vadd.f32 %v1726, %v1754
        %1756 = vdwg.mxu0
        %1757 = vmatpush.bf16.msra.mxu0 %v1423
        %1758 = vmatpush.bf16.msra.mxu0 %v1419
        %1759 = vmatpush.bf16.msra.mxu0 %v1415
        %1760 = vmatpush.bf16.msra.mxu0 %v1411
        %1761 = vmatpush.bf16.msra.mxu0 %v1407
        %1762 = vmatpush.bf16.msra.mxu0 %v1403
        %1763 = vmatpush.bf16.msra.mxu0 %v1399
        %1764 = vmatpush.bf16.msra.mxu0 %v1395
        %1765 = vmatmul.bf16.gmra.mxu0 %v763
        %v1766 = vpop.f32.mrf.mxu0
        %v1767 = vadd.f32 %v1738, %v1766
        %v1768 = vpop.f32.mrf.mxu0
        %v1769 = vadd.f32 %v1740, %v1768
        %1770 = vmatmul.bf16.gmra.mxu0 %v767
        %v1771 = vpop.f32.mrf.mxu0
        %v1772 = vadd.f32 %v1743, %v1771
        %v1773 = vpop.f32.mrf.mxu0
        %v1774 = vadd.f32 %v1745, %v1773
        %1775 = vmatmul.bf16.gmra.mxu0 %v771
        %v1776 = vpop.f32.mrf.mxu0
        %v1777 = vadd.f32 %v1748, %v1776
        %v1778 = vpop.f32.mrf.mxu0
        %v1779 = vadd.f32 %v1750, %v1778
        %1780 = vmatmul.bf16.gmra.mxu0 %v775
        %v1781 = vpop.f32.mrf.mxu0
        %v1782 = vadd.f32 %v1753, %v1781
        %v1783 = vpop.f32.mrf.mxu0
        %v1784 = vadd.f32 %v1755, %v1783
        %1785 = vdwg.mxu0
        %1786 = vmatpush.bf16.msra.mxu0 %v1328
        %1787 = vmatpush.bf16.msra.mxu0 %v1324
        %1788 = vmatpush.bf16.msra.mxu0 %v1320
        %1789 = vmatpush.bf16.msra.mxu0 %v1316
        %1790 = vmatpush.bf16.msra.mxu0 %v1312
        %1791 = vmatpush.bf16.msra.mxu0 %v1308
        %1792 = vmatpush.bf16.msra.mxu0 %v1304
        %1793 = vmatpush.bf16.msra.mxu0 %v1300
        %1794 = vmatmul.bf16.gmra.mxu0 %v760
        %v1795 = vpop.f32.mrf.mxu0
        %v1796 = vadd.f32 %v908, %v1795
        %v1797 = vpop.f32.mrf.mxu0
        %v1798 = vadd.f32 %v908, %v1797
        %1799 = vmatmul.bf16.gmra.mxu0 %v764
        %v1800 = vpop.f32.mrf.mxu0
        %v1801 = vadd.f32 %v908, %v1800
        %v1802 = vpop.f32.mrf.mxu0
        %v1803 = vadd.f32 %v908, %v1802
        %1804 = vmatmul.bf16.gmra.mxu0 %v768
        %v1805 = vpop.f32.mrf.mxu0
        %v1806 = vadd.f32 %v908, %v1805
        %v1807 = vpop.f32.mrf.mxu0
        %v1808 = vadd.f32 %v908, %v1807
        %1809 = vmatmul.bf16.gmra.mxu0 %v772
        %v1810 = vpop.f32.mrf.mxu0
        %v1811 = vadd.f32 %v908, %v1810
        %v1812 = vpop.f32.mrf.mxu0
        %v1813 = vadd.f32 %v908, %v1812
        %1814 = vdwg.mxu0
        %1815 = vmatpush.bf16.msra.mxu0 %v1360
        %1816 = vmatpush.bf16.msra.mxu0 %v1356
        %1817 = vmatpush.bf16.msra.mxu0 %v1352
        %1818 = vmatpush.bf16.msra.mxu0 %v1348
        %1819 = vmatpush.bf16.msra.mxu0 %v1344
        %1820 = vmatpush.bf16.msra.mxu0 %v1340
        %1821 = vmatpush.bf16.msra.mxu0 %v1336
        %1822 = vmatpush.bf16.msra.mxu0 %v1332
        %1823 = vmatmul.bf16.gmra.mxu0 %v761
        %v1824 = vpop.f32.mrf.mxu0
        %v1825 = vadd.f32 %v1796, %v1824
        %v1826 = vpop.f32.mrf.mxu0
        %v1827 = vadd.f32 %v1798, %v1826
        %1828 = vmatmul.bf16.gmra.mxu0 %v765
        %v1829 = vpop.f32.mrf.mxu0
        %v1830 = vadd.f32 %v1801, %v1829
        %v1831 = vpop.f32.mrf.mxu0
        %v1832 = vadd.f32 %v1803, %v1831
        %1833 = vmatmul.bf16.gmra.mxu0 %v769
        %v1834 = vpop.f32.mrf.mxu0
        %v1835 = vadd.f32 %v1806, %v1834
        %v1836 = vpop.f32.mrf.mxu0
        %v1837 = vadd.f32 %v1808, %v1836
        %1838 = vmatmul.bf16.gmra.mxu0 %v773
        %v1839 = vpop.f32.mrf.mxu0
        %v1840 = vadd.f32 %v1811, %v1839
        %v1841 = vpop.f32.mrf.mxu0
        %v1842 = vadd.f32 %v1813, %v1841
        %1843 = vdwg.mxu0
        %1844 = vmatpush.bf16.msra.mxu0 %v1392
        %1845 = vmatpush.bf16.msra.mxu0 %v1388
        %1846 = vmatpush.bf16.msra.mxu0 %v1384
        %1847 = vmatpush.bf16.msra.mxu0 %v1380
        %1848 = vmatpush.bf16.msra.mxu0 %v1376
        %1849 = vmatpush.bf16.msra.mxu0 %v1372
        %1850 = vmatpush.bf16.msra.mxu0 %v1368
        %1851 = vmatpush.bf16.msra.mxu0 %v1364
        %1852 = vmatmul.bf16.gmra.mxu0 %v762
        %v1853 = vpop.f32.mrf.mxu0
        %v1854 = vadd.f32 %v1825, %v1853
        %v1855 = vpop.f32.mrf.mxu0
        %v1856 = vadd.f32 %v1827, %v1855
        %1857 = vmatmul.bf16.gmra.mxu0 %v766
        %v1858 = vpop.f32.mrf.mxu0
        %v1859 = vadd.f32 %v1830, %v1858
        %v1860 = vpop.f32.mrf.mxu0
        %v1861 = vadd.f32 %v1832, %v1860
        %1862 = vmatmul.bf16.gmra.mxu0 %v770
        %v1863 = vpop.f32.mrf.mxu0
        %v1864 = vadd.f32 %v1835, %v1863
        %v1865 = vpop.f32.mrf.mxu0
        %v1866 = vadd.f32 %v1837, %v1865
        %1867 = vmatmul.bf16.gmra.mxu0 %v774
        %v1868 = vpop.f32.mrf.mxu0
        %v1869 = vadd.f32 %v1840, %v1868
        %v1870 = vpop.f32.mrf.mxu0
        %v1871 = vadd.f32 %v1842, %v1870
        %1872 = vdwg.mxu0
        %1873 = vmatpush.bf16.msra.mxu0 %v1424
        %1874 = vmatpush.bf16.msra.mxu0 %v1420
        %1875 = vmatpush.bf16.msra.mxu0 %v1416
        %1876 = vmatpush.bf16.msra.mxu0 %v1412
        %1877 = vmatpush.bf16.msra.mxu0 %v1408
        %1878 = vmatpush.bf16.msra.mxu0 %v1404
        %1879 = vmatpush.bf16.msra.mxu0 %v1400
        %1880 = vmatpush.bf16.msra.mxu0 %v1396
        %1881 = vmatmul.bf16.gmra.mxu0 %v763
        %v1882 = vpop.f32.mrf.mxu0
        %v1883 = vadd.f32 %v1854, %v1882
        %v1884 = vpop.f32.mrf.mxu0
        %v1885 = vadd.f32 %v1856, %v1884
        %1886 = vmatmul.bf16.gmra.mxu0 %v767
        %v1887 = vpop.f32.mrf.mxu0
        %v1888 = vadd.f32 %v1859, %v1887
        %v1889 = vpop.f32.mrf.mxu0
        %v1890 = vadd.f32 %v1861, %v1889
        %1891 = vmatmul.bf16.gmra.mxu0 %v771
        %v1892 = vpop.f32.mrf.mxu0
        %v1893 = vadd.f32 %v1864, %v1892
        %v1894 = vpop.f32.mrf.mxu0
        %v1895 = vadd.f32 %v1866, %v1894
        %1896 = vmatmul.bf16.gmra.mxu0 %v775
        %v1897 = vpop.f32.mrf.mxu0
        %v1898 = vadd.f32 %v1869, %v1897
        %v1899 = vpop.f32.mrf.mxu0
        %v1900 = vadd.f32 %v1871, %v1899
        %1901 = vdwg.mxu0
        %1902 = vmatpush.bf16.msra.mxu0 %v1329
        %1903 = vmatpush.bf16.msra.mxu0 %v1325
        %1904 = vmatpush.bf16.msra.mxu0 %v1321
        %1905 = vmatpush.bf16.msra.mxu0 %v1317
        %1906 = vmatpush.bf16.msra.mxu0 %v1313
        %1907 = vmatpush.bf16.msra.mxu0 %v1309
        %1908 = vmatpush.bf16.msra.mxu0 %v1305
        %1909 = vmatpush.bf16.msra.mxu0 %v1301
        %1910 = vmatmul.bf16.gmra.mxu0 %v760
        %v1911 = vpop.f32.mrf.mxu0
        %v1912 = vadd.f32 %v909, %v1911
        %v1913 = vpop.f32.mrf.mxu0
        %v1914 = vadd.f32 %v909, %v1913
        %1915 = vmatmul.bf16.gmra.mxu0 %v764
        %v1916 = vpop.f32.mrf.mxu0
        %v1917 = vadd.f32 %v909, %v1916
        %v1918 = vpop.f32.mrf.mxu0
        %v1919 = vadd.f32 %v909, %v1918
        %1920 = vmatmul.bf16.gmra.mxu0 %v768
        %v1921 = vpop.f32.mrf.mxu0
        %v1922 = vadd.f32 %v909, %v1921
        %v1923 = vpop.f32.mrf.mxu0
        %v1924 = vadd.f32 %v909, %v1923
        %1925 = vmatmul.bf16.gmra.mxu0 %v772
        %v1926 = vpop.f32.mrf.mxu0
        %v1927 = vadd.f32 %v909, %v1926
        %v1928 = vpop.f32.mrf.mxu0
        %v1929 = vadd.f32 %v909, %v1928
        %1930 = vdwg.mxu0
        %1931 = vmatpush.bf16.msra.mxu0 %v1361
        %1932 = vmatpush.bf16.msra.mxu0 %v1357
        %1933 = vmatpush.bf16.msra.mxu0 %v1353
        %1934 = vmatpush.bf16.msra.mxu0 %v1349
        %1935 = vmatpush.bf16.msra.mxu0 %v1345
        %1936 = vmatpush.bf16.msra.mxu0 %v1341
        %1937 = vmatpush.bf16.msra.mxu0 %v1337
        %1938 = vmatpush.bf16.msra.mxu0 %v1333
        %1939 = vmatmul.bf16.gmra.mxu0 %v761
        %v1940 = vpop.f32.mrf.mxu0
        %v1941 = vadd.f32 %v1912, %v1940
        %v1942 = vpop.f32.mrf.mxu0
        %v1943 = vadd.f32 %v1914, %v1942
        %1944 = vmatmul.bf16.gmra.mxu0 %v765
        %v1945 = vpop.f32.mrf.mxu0
        %v1946 = vadd.f32 %v1917, %v1945
        %v1947 = vpop.f32.mrf.mxu0
        %v1948 = vadd.f32 %v1919, %v1947
        %1949 = vmatmul.bf16.gmra.mxu0 %v769
        %v1950 = vpop.f32.mrf.mxu0
        %v1951 = vadd.f32 %v1922, %v1950
        %v1952 = vpop.f32.mrf.mxu0
        %v1953 = vadd.f32 %v1924, %v1952
        %1954 = vmatmul.bf16.gmra.mxu0 %v773
        %v1955 = vpop.f32.mrf.mxu0
        %v1956 = vadd.f32 %v1927, %v1955
        %v1957 = vpop.f32.mrf.mxu0
        %v1958 = vadd.f32 %v1929, %v1957
        %1959 = vdwg.mxu0
        %1960 = vmatpush.bf16.msra.mxu0 %v1393
        %1961 = vmatpush.bf16.msra.mxu0 %v1389
        %1962 = vmatpush.bf16.msra.mxu0 %v1385
        %1963 = vmatpush.bf16.msra.mxu0 %v1381
        %1964 = vmatpush.bf16.msra.mxu0 %v1377
        %1965 = vmatpush.bf16.msra.mxu0 %v1373
        %1966 = vmatpush.bf16.msra.mxu0 %v1369
        %1967 = vmatpush.bf16.msra.mxu0 %v1365
        %1968 = vmatmul.bf16.gmra.mxu0 %v762
        %v1969 = vpop.f32.mrf.mxu0
        %v1970 = vadd.f32 %v1941, %v1969
        %v1971 = vpop.f32.mrf.mxu0
        %v1972 = vadd.f32 %v1943, %v1971
        %1973 = vmatmul.bf16.gmra.mxu0 %v766
        %v1974 = vpop.f32.mrf.mxu0
        %v1975 = vadd.f32 %v1946, %v1974
        %v1976 = vpop.f32.mrf.mxu0
        %v1977 = vadd.f32 %v1948, %v1976
        %1978 = vmatmul.bf16.gmra.mxu0 %v770
        %v1979 = vpop.f32.mrf.mxu0
        %v1980 = vadd.f32 %v1951, %v1979
        %v1981 = vpop.f32.mrf.mxu0
        %v1982 = vadd.f32 %v1953, %v1981
        %1983 = vmatmul.bf16.gmra.mxu0 %v774
        %v1984 = vpop.f32.mrf.mxu0
        %v1985 = vadd.f32 %v1956, %v1984
        %v1986 = vpop.f32.mrf.mxu0
        %v1987 = vadd.f32 %v1958, %v1986
        %1988 = vdwg.mxu0
        %1989 = vmatpush.bf16.msra.mxu0 %v1425
        %1990 = vmatpush.bf16.msra.mxu0 %v1421
        %1991 = vmatpush.bf16.msra.mxu0 %v1417
        %1992 = vmatpush.bf16.msra.mxu0 %v1413
        %1993 = vmatpush.bf16.msra.mxu0 %v1409
        %1994 = vmatpush.bf16.msra.mxu0 %v1405
        %1995 = vmatpush.bf16.msra.mxu0 %v1401
        %1996 = vmatpush.bf16.msra.mxu0 %v1397
        %1997 = vmatmul.bf16.gmra.mxu0 %v763
        %v1998 = vpop.f32.mrf.mxu0
        %v1999 = vadd.f32 %v1970, %v1998
        %v2000 = vpop.f32.mrf.mxu0
        %v2001 = vadd.f32 %v1972, %v2000
        %2002 = vmatmul.bf16.gmra.mxu0 %v767
        %v2003 = vpop.f32.mrf.mxu0
        %v2004 = vadd.f32 %v1975, %v2003
        %v2005 = vpop.f32.mrf.mxu0
        %v2006 = vadd.f32 %v1977, %v2005
        %2007 = vmatmul.bf16.gmra.mxu0 %v771
        %v2008 = vpop.f32.mrf.mxu0
        %v2009 = vadd.f32 %v1980, %v2008
        %v2010 = vpop.f32.mrf.mxu0
        %v2011 = vadd.f32 %v1982, %v2010
        %2012 = vmatmul.bf16.gmra.mxu0 %v775
        %v2013 = vpop.f32.mrf.mxu0
        %v2014 = vadd.f32 %v1985, %v2013
        %v2015 = vpop.f32.mrf.mxu0
        %v2016 = vadd.f32 %v1987, %v2015
        %2017 = vdwg.mxu0
        %v2018 = vmax.f32 %v1651, 0.0
        %v2019 = vmax.f32 %v1767, 0.0
        %v2020 = vmax.f32 %v1883, 0.0
        %v2021 = vmax.f32 %v1999, 0.0
        %v2022 = vmax.f32 %v1653, 0.0
        %v2023 = vmax.f32 %v1769, 0.0
        %v2024 = vmax.f32 %v1885, 0.0
        %v2025 = vmax.f32 %v2001, 0.0
        %v2026 = vmax.f32 %v1656, 0.0
        %v2027 = vmax.f32 %v1772, 0.0
        %v2028 = vmax.f32 %v1888, 0.0
        %v2029 = vmax.f32 %v2004, 0.0
        %v2030 = vmax.f32 %v1658, 0.0
        %v2031 = vmax.f32 %v1774, 0.0
        %v2032 = vmax.f32 %v1890, 0.0
        %v2033 = vmax.f32 %v2006, 0.0
        %v2034 = vmax.f32 %v1661, 0.0
        %v2035 = vmax.f32 %v1777, 0.0
        %v2036 = vmax.f32 %v1893, 0.0
        %v2037 = vmax.f32 %v2009, 0.0
        %v2038 = vmax.f32 %v1663, 0.0
        %v2039 = vmax.f32 %v1779, 0.0
        %v2040 = vmax.f32 %v1895, 0.0
        %v2041 = vmax.f32 %v2011, 0.0
        %v2042 = vmax.f32 %v1666, 0.0
        %v2043 = vmax.f32 %v1782, 0.0
        %v2044 = vmax.f32 %v1898, 0.0
        %v2045 = vmax.f32 %v2014, 0.0
        %v2046 = vmax.f32 %v1668, 0.0
        %v2047 = vmax.f32 %v1784, 0.0
        %v2048 = vmax.f32 %v1900, 0.0
        %v2049 = vmax.f32 %v2016, 0.0
        %v2050 = vld [vmem:[%s319] sm:$0xf]
        %v2052 = vperm.slane %v2050, 0
        %v2053 = vperm.slane %v2050, 1
        %v2054 = vperm.slane %v2050, 2
        %v2055 = vperm.slane %v2050, 3
        %v2060 = vmul.f32 %v2018, %v2052
        %v2061 = vmul.f32 %v2019, %v2053
        %v2062 = vmul.f32 %v2020, %v2054
        %v2063 = vmul.f32 %v2021, %v2055
        %v2064 = vmul.f32 %v2022, %v2052
        %v2065 = vmul.f32 %v2023, %v2053
        %v2066 = vmul.f32 %v2024, %v2054
        %v2067 = vmul.f32 %v2025, %v2055
        %v2068 = vmul.f32 %v2026, %v2052
        %v2069 = vmul.f32 %v2027, %v2053
        %v2070 = vmul.f32 %v2028, %v2054
        %v2071 = vmul.f32 %v2029, %v2055
        %v2072 = vmul.f32 %v2030, %v2052
        %v2073 = vmul.f32 %v2031, %v2053
        %v2074 = vmul.f32 %v2032, %v2054
        %v2075 = vmul.f32 %v2033, %v2055
        %v2076 = vmul.f32 %v2034, %v2052
        %v2077 = vmul.f32 %v2035, %v2053
        %v2078 = vmul.f32 %v2036, %v2054
        %v2079 = vmul.f32 %v2037, %v2055
        %v2080 = vmul.f32 %v2038, %v2052
        %v2081 = vmul.f32 %v2039, %v2053
        %v2082 = vmul.f32 %v2040, %v2054
        %v2083 = vmul.f32 %v2041, %v2055
        %v2084 = vmul.f32 %v2042, %v2052
        %v2085 = vmul.f32 %v2043, %v2053
        %v2086 = vmul.f32 %v2044, %v2054
        %v2087 = vmul.f32 %v2045, %v2055
        %v2088 = vmul.f32 %v2046, %v2052
        %v2089 = vmul.f32 %v2047, %v2053
        %v2090 = vmul.f32 %v2048, %v2054
        %v2091 = vmul.f32 %v2049, %v2055
        %v2092 = vadd.f32 %v2060, %v2061
        %v2093 = vadd.f32 %v2092, %v2062
        %v2094 = vadd.f32 %v2093, %v2063
        %2095 = vadd.xlane.f32.xlu0 %v2094
        %v2096 = vpop.xlane.xlu0 %2095
        %v2097 = vadd.f32 %v2064, %v2065
        %v2098 = vadd.f32 %v2097, %v2066
        %v2099 = vadd.f32 %v2098, %v2067
        %2100 = vadd.xlane.f32.xlu0 %v2099
        %v2101 = vpop.xlane.xlu0 %2100
        %v2102 = vadd.f32 %v2068, %v2069
        %v2103 = vadd.f32 %v2102, %v2070
        %v2104 = vadd.f32 %v2103, %v2071
        %2105 = vadd.xlane.f32.xlu0 %v2104
        %v2106 = vpop.xlane.xlu0 %2105
        %v2107 = vadd.f32 %v2072, %v2073
        %v2108 = vadd.f32 %v2107, %v2074
        %v2109 = vadd.f32 %v2108, %v2075
        %2110 = vadd.xlane.f32.xlu0 %v2109
        %v2111 = vpop.xlane.xlu0 %2110
        %v2112 = vadd.f32 %v2076, %v2077
        %v2113 = vadd.f32 %v2112, %v2078
        %v2114 = vadd.f32 %v2113, %v2079
        %2115 = vadd.xlane.f32.xlu0 %v2114
        %v2116 = vpop.xlane.xlu0 %2115
        %v2117 = vadd.f32 %v2080, %v2081
        %v2118 = vadd.f32 %v2117, %v2082
        %v2119 = vadd.f32 %v2118, %v2083
        %2120 = vadd.xlane.f32.xlu0 %v2119
        %v2121 = vpop.xlane.xlu0 %2120
        %v2122 = vadd.f32 %v2084, %v2085
        %v2123 = vadd.f32 %v2122, %v2086
        %v2124 = vadd.f32 %v2123, %v2087
        %2125 = vadd.xlane.f32.xlu0 %v2124
        %v2126 = vpop.xlane.xlu0 %2125
        %v2127 = vadd.f32 %v2088, %v2089
        %v2128 = vadd.f32 %v2127, %v2090
        %v2129 = vadd.f32 %v2128, %v2091
        %2130 = vadd.xlane.f32.xlu0 %v2129
        %v2131 = vpop.xlane.xlu0 %2130
        %s2132 = smul.u32 %s27, 8
        %v2133 = vlaneseq
        %v2134 = vshrl.u32 %v2133, 7
        %v2135 = vstv %s2132
        %v2136 = vadd.s32 %v2134, %v2135
        %v2137 = vlaneseq
        %v2138 = vand.u32 %v2137, 127
        %vm2139 = vcmp.lt.s32.totalorder %v2138, 8
        %vm2140 = vcmp.lt.s32.totalorder %v2136, 8
        %vm2141 = vmand %vm2140, %vm2139
        %vm2142 = vcmp.eq.s32.totalorder %v2136, %v2138
        %vm2143 = vmand %vm2141, %vm2142
        %v2152 = vperm.slane %v2096, %v2138
        %v2153 = vperm.slane %v2101, %v2138
        %v2154 = vperm.slane %v2106, %v2138
        %v2155 = vperm.slane %v2111, %v2138
        %v2156 = vperm.slane %v2116, %v2138
        %v2157 = vperm.slane %v2121, %v2138
        %v2158 = vperm.slane %v2126, %v2138
        %v2159 = vperm.slane %v2131, %v2138
        %v2160 = vsel %vm414, %v2153, %v2152
        %v2161 = vsel %vm407, %v2154, %v2160
        %v2162 = vsel %vm416, %v2155, %v2161
        %v2163 = vsel %vm423, %v2156, %v2162
        %v2164 = vsel %vm430, %v2157, %v2163
        %vm2165 = vcmask 1046534
        %v2166 = vsel %vm2165, %v2158, %v2164
        %vm2167 = vcmask 1047559
        %v2168 = vsel %vm2167, %v2159, %v2166
        %v2170 = vsel %vm2143, %v2168, 0.0
        %vm2171 = vcmask 64512
        %v2172 = vsel %vm2171, %v2170, 0.0
        %2173 = vadd.xlane.f32.xlu0 %v2172
        %v2174 = vpop.xlane.xlu0 %2173
        %v2175 = vrot.slane %v2174, 4
        %v2176 = vadd.f32 %v2174, %v2175
        %v2177 = vrot.slane %v2176, 2
        %v2178 = vadd.f32 %v2176, %v2177
        %v2179 = vrot.slane %v2178, 1
        %v2180 = vadd.f32 %v2178, %v2179
        %s2181 = vtos %v2180
        %v2182 = vsel %vm2139, %v2168, -1e+30
        %v2183 = vsel %vm2171, %v2182, -inf
        %2184 = vmax.xlane.f32.xlu0 %v2183
        %v2185 = vpop.xlane.xlu0 %2184
        %v2186 = vsub.f32 %v2182, %v2185
        %v2187 = vmul.f32 %v2186, 1.442695
        %v2188 = vpow.pop %v2187
        %v2189 = vsel %vm2171, %v2188, 0.0
        %2190 = vadd.xlane.f32.xlu0 %v2189
        %v2191 = vpop.xlane.xlu0 %2190
        %v2192 = vlog2.pop %v2191
        %v2193 = vmul.f32 %v2192, 0.6931472
        %v2194 = vadd.f32 %v2185, %v2193
        %v2195 = vsel %vm2140, %v2194, 0.0
        %vm2196 = vcmask 7168
        %v2197 = vsel %vm2196, %v2195, 0.0
        %2198 = vadd.xlane.f32.xlu0 %v2197
        %v2199 = vpop.xlane.xlu0 %2198
        %v2200 = vrot.slane %v2199, 4
        %v2201 = vadd.f32 %v2199, %v2200
        %v2202 = vrot.slane %v2201, 2
        %v2203 = vadd.f32 %v2201, %v2202
        %v2204 = vrot.slane %v2203, 1
        %v2205 = vadd.f32 %v2203, %v2204
        %s2206 = vtos %v2205
        %v2207 = vsel %vm2141, %v2168, 0.0
        %v2208 = vsel %vm2171, %v2207, 0.0
        %2209 = vadd.xlane.f32.xlu0 %v2208
        %v2210 = vpop.xlane.xlu0 %2209
        %v2211 = vrot.slane %v2210, 4
        %v2212 = vadd.f32 %v2210, %v2211
        %v2213 = vrot.slane %v2212, 2
        %v2214 = vadd.f32 %v2212, %v2213
        %v2215 = vrot.slane %v2214, 1
        %v2216 = vadd.f32 %v2214, %v2215
        %s2217 = vtos %v2216
        %vm2218 = vcmp.eq.s32.totalorder %v2134, 0
        %vm2219 = vcmp.eq.s32.totalorder %v2138, 0
        %vm2220 = vmand %vm2218, %vm2219
        %v2221 = vstv %s2181
        %v2222 = vsel %vm2220, %v2221, 0.0
        %vm2223 = vcmp.eq.s32.totalorder %v2138, 1
        %vm2224 = vmand %vm2218, %vm2223
        %v2225 = vstv %s2206
        %v2226 = vsel %vm2224, %v2225, 0.0
        %v2227 = vadd.f32 %v2222, %v2226
        %vm2228 = vcmp.eq.s32.totalorder %v2138, 2
        %vm2229 = vmand %vm2218, %vm2228
        %v2230 = vstv %s2217
        %v2231 = vsel %vm2229, %v2230, 0.0
        %v2232 = vadd.f32 %v2227, %v2231
        %2233 = vst [vmem:[%s393] sm:$0xff] %v2232
        %p2234 = scmp.lt.s32.totalorder %s26, 5
        %s2235 = scalar_select %p2234, %s26, 5
        %p2236 = scmp.lt.s32.totalorder %s27, 0
        %s2237 = scalar_select %p2236, %s27, 0
        %s2238 = sadd.s32 %s2237, %s2235
        %s2239 = smul.addr %s2238, 8
        %s2240 = scalar_lea.vmem %s5, %s2239
        // Predicated region
        $region53: #{factorcl_forward.9} parent=39 // pred_check
          %p2241 = pneg %p186
        $region54: #{factorcl_forward.9} parent=39 // pred_check_branch
          %2243 = sbr.rel (%p2241) target = $region56
        $region55: #{factorcl_forward.9} parent=39 // pred_region
          _
        $region56: #{factorcl_forward.9} parent=39 // pred_fallthru
          _
      $region40: #{factorcl_forward.9} parent=5 // pred_fallthru
        _
      %p2244 = scmp.le.s32.totalorder 2, %s17
      // Predicated region
      $region57: #{factorcl_forward.9} parent=5 // pred_check
        %p2245 = pneg %p2244
      $region58: #{factorcl_forward.9} parent=5 // pred_check_branch
        %2247 = sbr.rel (%p2245) target = $region60
      $region59: #{factorcl_forward.9} parent=5 // pred_region
        %s2248 = ssub.s32 %s17, 2
        // Predicated region
        $region61: #{factorcl_forward.9} parent=59 // pred_check
          %p2249 = pneg %p192
        $region62: #{factorcl_forward.9} parent=59 // pred_check_branch
          %2251 = sbr.rel (%p2249) target = $region64
        $region63: #{factorcl_forward.9} parent=59 // pred_region
          %p2252 = scmp.lt.s32.totalorder %s28, 5
          %s2253 = scalar_select %p2252, %s28, 5
          %p2254 = scmp.lt.s32.totalorder %s29, 0
          %s2255 = scalar_select %p2254, %s29, 0
          %s2256 = sadd.s32 %s2255, %s2253
          %s2257 = smul.addr %s2256, 8
          %s2258 = scalar_lea.vmem %s5, %s2257
        $region64: #{factorcl_forward.9} parent=59 // pred_fallthru
          _
      $region60: #{factorcl_forward.9} parent=5 // pred_fallthru
        _
    $region6: #{factorcl_forward.9} parent=1 // loop_footer
      %s21 = sadd.s32 1, %s17
    $region7: #{factorcl_forward.9} parent=1 // loop_footer_branch
      %16 = sbr.rel target = $region3
    $region8: #{factorcl_forward.9} parent=1 // loop_exit
      _
    %2259 = vsyncpa [#allocation3], 1
    %s2260 = scalar_lea.sflag [#allocation3], 1
    %2261 = vsyncpa %s2260, 1
    %2262 = vsyncpa [#allocation5], 1
    %s2263 = scalar_lea.sflag [#allocation5], 1
    %2264 = vsyncpa %s2263, 1

</llo_original>
